<compile_context>
chip_gen: v7x
topology: tpu7x:2x2x1
jax: 0.10.0
libtpu: 0.0.40
codegen_flags: <defaults>
</compile_context>

<pallas_src>
import numpy as np
import jax
import jax.numpy as jnp
from jax import lax
from jax.experimental import pallas as pl
from jax.experimental.pallas import tpu as pltpu

LEAKY_SLOPE = 0.01      # nn.LeakyReLU default
BN_EPS = 1e-5           # nn.BatchNorm2d default
LATENT = 200
HEAD_PAD = 512          # mu / log_var packed into one lane-dense (F, 512) weight
LV_OFFSET = 256         # log_var columns start at a 128-aligned lane offset


# ------------------------------ Pallas kernel ------------------------------ #

def _conv_bn_lrelu_block(x, s_ref, b_ref, sc_ref, sh_ref):
    """Conv2d(3x3, s=2, p=1) + folded BatchNorm2d(eval) + LeakyReLU for one image.

    x:      (H, W*Cin) f32      rows = image rows, lanes = fused (w, cin)
    s_ref:  (3, H//2, H) bf16   exact 0/1 row-select matrices (input row 2*oh+kh-1)
    b_ref:  (3, W*Cin, (W//2)*Cout) bf16  banded weights folding kw taps + stride + pad
    sc/sh:  (1, (W//2)*Cout) f32          folded BN scale / (BN shift + conv bias)
    returns (H//2, (W//2)*Cout) f32       lane-dense (OW*Cout == 128 here)
    """
    x_bf = x.astype(jnp.bfloat16)                       # bf16 MXU operands
    acc = None
    for kh in range(3):
        # Row phase-select (exact: each output row copies one input row or zero pad).
        rows = jnp.dot(s_ref[kh], x_bf, preferred_element_type=jnp.float32)
        # Banded (Toeplitz) weight applies the kw taps, stride-2 window and L/R pad.
        part = jnp.dot(rows.astype(jnp.bfloat16), b_ref[kh],
                       preferred_element_type=jnp.float32)
        acc = part if acc is None else acc + part
    y = acc * sc_ref[...] + sh_ref[...]                 # BN(eval) + conv bias, f32
    y = jnp.where(y > 0.0, y, LEAKY_SLOPE * y)          # LeakyReLU, f32
    return y                                            # Dropout2d is identity (eval)


def _make_encoder_kernel(num_conv):
    """Returns a fused kernel: num_conv conv blocks + VAE head, one image per step."""

    def kernel(*refs):
        img_ref = refs[0]
        conv_refs = refs[1:1 + 4 * num_conv]
        wh_ref, bh_ref, eps_ref, out_ref = refs[1 + 4 * num_conv:]

        x = img_ref[0]                                  # (H, W*Cin) f32, one image
        for layer in range(num_conv):
            s_ref, b_ref, sc_ref, sh_ref = conv_refs[4 * layer:4 * layer + 4]
            x = _conv_bn_lrelu_block(x, s_ref, b_ref, sc_ref, sh_ref)

        # Fused VAE head: z = [mu | log_var] packed into 512 lanes.  Accumulated
        # row-by-row so no in-kernel reshape of the (8, 128) feature slab is needed.
        z = bh_ref[...]                                 # (1, 512) f32, biases packed
        for r in range(x.shape[0]):                     # final spatial rows (8)
            xr = x[r:r + 1, :].astype(jnp.bfloat16)     # (1, OW*C) bf16
            z = z + jnp.dot(xr, wh_ref[r], preferred_element_type=jnp.float32)

        mu = z[:, :LATENT]
        log_var = z[:, LV_OFFSET:LV_OFFSET + LATENT]
        out_ref[0] = mu + jnp.exp(0.5 * log_var) * eps_ref[0]   # reparameterization

    return kernel


# ----------------------- host-side parameter lowering ----------------------- #

def _build_row_select(h):
    """S[kh, oh, r] = 1 iff r == 2*oh + kh - 1 (zero row for the top pad)."""
    oh_n = h // 2
    s = np.zeros((3, oh_n, h), np.float32)
    for kh in range(3):
        for oh in range(oh_n):
            r = 2 * oh + kh - 1
            if 0 <= r < h:
                s[kh, oh, r] = 1.0
    return s


def _build_banded_weight(w_hwio, w_in):
    """B[kh, c*Cin+ci, ow*Cout+co] = w[kh, c-2*ow+1, ci, co] (zero outside the band)."""
    _, _, cin, cout = w_hwio.shape
    ow_n = w_in // 2
    b = np.zeros((3, w_in * cin, ow_n * cout), np.float32)
    for kh in range(3):
        for ow in range(ow_n):
            for kw in range(3):
                c = 2 * ow + kw - 1
                if 0 <= c < w_in:
                    b[kh, c * cin:(c + 1) * cin,
                      ow * cout:(ow + 1) * cout] = w_hwio[kh, kw]
    return b


def prepare_params(convs, heads, n):
    """One-time lowering of PyTorch-style parameters into fused-kernel operands."""
    size, cin = n, 3
    conv_ops = []
    for p in convs:
        w = np.asarray(p["w"], np.float32)              # (3, 3, Cin, Cout) HWIO
        cout = w.shape[-1]
        scale = np.asarray(p["gamma"]) / np.sqrt(np.asarray(p["rvar"]) + BN_EPS)
        # conv bias folded into the BN shift (eval mode, algebraically identical)
        shift = np.asarray(p["beta"]) + (np.asarray(p["b"]) - np.asarray(p["rmean"])) * scale
        ow_n = size // 2
        conv_ops.append(dict(
            s=jnp.asarray(_build_row_select(size), jnp.bfloat16),
            b=jnp.asarray(_build_banded_weight(w, size), jnp.bfloat16),
            sc=jnp.asarray(np.tile(scale, ow_n)[None, :], jnp.float32),
            sh=jnp.asarray(np.tile(shift, ow_n)[None, :], jnp.float32),
        ))
        size, cin = size // 2, cout

    # Head: fuse mu / log_var Linears into one (F, 512) lane-dense weight whose rows
    # are permuted from PyTorch's NCHW flatten order to the kernel's NHWC order.
    oh2 = ow2 = size
    c2 = cin
    feat = oh2 * ow2 * c2
    g = np.arange(feat)
    c = g % c2
    ow = (g // c2) % ow2
    oh = g // (c2 * ow2)
    perm = c * (oh2 * ow2) + oh * ow2 + ow              # NHWC-flat g -> NCHW-flat f
    wcat = np.zeros((feat, HEAD_PAD), np.float32)
    wcat[:, :LATENT] = np.asarray(heads["wmu"], np.float32)[perm]
    wcat[:, LV_OFFSET:LV_OFFSET + LATENT] = np.asarray(heads["wlv"], np.float32)[perm]
    bcat = np.zeros((1, HEAD_PAD), np.float32)
    bcat[0, :LATENT] = np.asarray(heads["bmu"])
    bcat[0, LV_OFFSET:LV_OFFSET + LATENT] = np.asarray(heads["blv"])
    return dict(
        convs=conv_ops,
        wh=jnp.asarray(wcat.reshape(oh2, ow2 * c2, HEAD_PAD), jnp.bfloat16),
        bh=jnp.asarray(bcat, jnp.float32),
    )


# ------------------------------ forward wrapper ------------------------------ #

def encoder_forward(prep, img_nchw, eps):
    conv_ops = prep["convs"]
    n_imgs, cin, h, w = img_nchw.shape
    # Boundary layout glue only: NCHW -> (N, H, W*Cin) so channels sit on lanes.
    img3 = jnp.transpose(img_nchw, (0, 2, 3, 1)).reshape(n_imgs, h, w * cin)
    eps3 = eps.reshape(n_imgs, 1, LATENT)

    operands = [img3]
    in_specs = [pl.BlockSpec((1, h, w * cin), lambda i: (i, 0, 0))]
    for op in conv_ops:
        for name in ("s", "b"):
            operands.append(op[name])
            in_specs.append(pl.BlockSpec(op[name].shape, lambda i: (0, 0, 0)))
        for name in ("sc", "sh"):
            operands.append(op[name])
            in_specs.append(pl.BlockSpec(op[name].shape, lambda i: (0, 0)))
    operands += [prep["wh"], prep["bh"], eps3]
    in_specs += [
        pl.BlockSpec(prep["wh"].shape, lambda i: (0, 0, 0)),
        pl.BlockSpec(prep["bh"].shape, lambda i: (0, 0)),
        pl.BlockSpec((1, 1, LATENT), lambda i: (i, 0, 0)),
    ]

    out = pl.pallas_call(
        _make_encoder_kernel(len(conv_ops)),
        out_shape=jax.ShapeDtypeStruct((n_imgs, 1, LATENT), jnp.float32),
        grid=(n_imgs,),
        in_specs=in_specs,
        out_specs=pl.BlockSpec((1, 1, LATENT), lambda i: (i, 0, 0)),
        # Images are independent in eval mode: "parallel" lets v7x shard the batch
        # across its two TensorCores; on v5e/v6e it is a pipelined sequential loop.
        compiler_params=pltpu.CompilerParams(dimension_semantics=("parallel",)),
    )(*operands)
    return out.reshape(n_imgs, LATENT)


# --------------------------- reference + synthetic init --------------------------- #

def init_encoder_params(key, n):
    """Deterministic synthetic parameters matching Encoder(n).__init__ shapes."""
    x_exp = int(np.log2(n) - 4)
    convs = []
    cin, cout = 3, 8
    for _ in range(1 + x_exp):
        key, k1, k2, k3, k4, k5, k6 = jax.random.split(key, 7)
        bound = 1.0 / np.sqrt(cin * 9)
        convs.append(dict(
            w=jax.random.uniform(k1, (3, 3, cin, cout), jnp.float32, -bound, bound),
            b=jax.random.uniform(k2, (cout,), jnp.float32, -bound, bound),
            gamma=jax.random.uniform(k3, (cout,), jnp.float32, 0.5, 1.5),
            beta=jax.random.uniform(k4, (cout,), jnp.float32, -0.5, 0.5),
            rmean=jax.random.uniform(k5, (cout,), jnp.float32, -0.1, 0.1),
            rvar=jax.random.uniform(k6, (cout,), jnp.float32, 0.5, 1.5),
        ))
        cin, cout = cout, cout * 2
    feat = int(2 ** (x_exp + 9))
    key, k1, k2, k3, k4 = jax.random.split(key, 5)
    bound = 1.0 / np.sqrt(feat)
    heads = dict(
        wmu=jax.random.uniform(k1, (feat, LATENT), jnp.float32, -bound, bound),
        bmu=jax.random.uniform(k2, (LATENT,), jnp.float32, -bound, bound),
        wlv=jax.random.uniform(k3, (feat, LATENT), jnp.float32, -bound, bound),
        blv=jax.random.uniform(k4, (LATENT,), jnp.float32, -bound, bound),
    )
    return convs, heads


def encoder_reference(convs, heads, img_nchw, eps):
    """Independent XLA reference (f32) of the eval-mode PyTorch forward."""
    x = jnp.transpose(img_nchw, (0, 2, 3, 1))
    for p in convs:
        y = lax.conv_general_dilated(x, p["w"], window_strides=(2, 2),
                                     padding=((1, 1), (1, 1)),
                                     dimension_numbers=("NHWC", "HWIO", "NHWC"))
        y = y + p["b"]
        y = (y - p["rmean"]) * (p["gamma"] / jnp.sqrt(p["rvar"] + BN_EPS)) + p["beta"]
        x = jnp.where(y > 0.0, y, LEAKY_SLOPE * y)
    feats = jnp.transpose(x, (0, 3, 1, 2)).reshape(img_nchw.shape[0], -1)  # NCHW flatten
    mu = feats @ heads["wmu"] + heads["bmu"]
    lv = feats @ heads["wlv"] + heads["blv"]
    return mu + jnp.exp(0.5 * lv) * eps


if __name__ == "__main__":
    n = 32  # images are n x n; encoder has 1 + (log2(n) - 4) = 2 conv blocks here
    key = jax.random.PRNGKey(0)
    key, pkey, xkey, ekey = jax.random.split(key, 4)

    convs, heads = init_encoder_params(pkey, n)
    prep = prepare_params(convs, heads, n)
    img = jax.random.normal(xkey, (2, 3, n, n), jnp.float32)    # NCHW like PyTorch
    eps = jax.random.normal(ekey, (2, LATENT), jnp.float32)     # reparam noise

    fwd = jax.jit(encoder_forward)
    out = jax.block_until_ready(fwd(prep, img, eps))

    assert out.shape == (2, LATENT), out.shape
    assert out.dtype == jnp.float32, out.dtype
    assert bool(jnp.all(jnp.isfinite(out)))

    # Correctness vs. an independent f32 XLA reference (loose tolerance: the kernel's
    # matmul operands are bf16 with f32 accumulation).
    ref = encoder_reference(convs, heads, img, eps)
    err = jnp.abs(out - ref)
    tol = 8e-2 + 5e-2 * jnp.abs(ref)
    assert bool(jnp.all(err <= tol)), f"max abs err {float(jnp.max(err)):.4f}"

    print("KERNEL_OK")
</pallas_src>

<mosaic_0001>
module attributes {stable_mosaic.version = 11 : i64} {
  func.func @kernel(%arg0: i32, %arg1: memref<1x32x96xf32, #tpu.memory_space<vmem>>, %arg2: memref<3x16x32xbf16, #tpu.memory_space<vmem>>, %arg3: memref<3x96x128xbf16, #tpu.memory_space<vmem>>, %arg4: memref<1x128xf32, #tpu.memory_space<vmem>>, %arg5: memref<1x128xf32, #tpu.memory_space<vmem>>, %arg6: memref<3x8x16xbf16, #tpu.memory_space<vmem>>, %arg7: memref<3x128x128xbf16, #tpu.memory_space<vmem>>, %arg8: memref<1x128xf32, #tpu.memory_space<vmem>>, %arg9: memref<1x128xf32, #tpu.memory_space<vmem>>, %arg10: memref<8x128x512xbf16, #tpu.memory_space<vmem>>, %arg11: memref<1x512xf32, #tpu.memory_space<vmem>>, %arg12: memref<1x1x200xf32, #tpu.memory_space<vmem>>, %arg13: memref<1x1x200xf32, #tpu.memory_space<vmem>>) attributes {dimension_semantics = [#tpu.dimension_semantics<parallel>], iteration_bounds = array<i64: 2>, scalar_prefetch = 0 : i64, scratch_operands = 0 : i64, tpu.core_type = #tpu.core_type<tc>, window_params = [{transform_indices = @transform_0, window_bounds = array<i64: 1, 32, 96>}, {pipeline_mode = #tpu.pipeline_mode<synchronous>, transform_indices = @transform_1, window_bounds = array<i64: 3, 16, 32>}, {pipeline_mode = #tpu.pipeline_mode<synchronous>, transform_indices = @transform_2, window_bounds = array<i64: 3, 96, 128>}, {pipeline_mode = #tpu.pipeline_mode<synchronous>, transform_indices = @transform_3, window_bounds = array<i64: 1, 128>}, {pipeline_mode = #tpu.pipeline_mode<synchronous>, transform_indices = @transform_4, window_bounds = array<i64: 1, 128>}, {pipeline_mode = #tpu.pipeline_mode<synchronous>, transform_indices = @transform_5, window_bounds = array<i64: 3, 8, 16>}, {pipeline_mode = #tpu.pipeline_mode<synchronous>, transform_indices = @transform_6, window_bounds = array<i64: 3, 128, 128>}, {pipeline_mode = #tpu.pipeline_mode<synchronous>, transform_indices = @transform_7, window_bounds = array<i64: 1, 128>}, {pipeline_mode = #tpu.pipeline_mode<synchronous>, transform_indices = @transform_8, window_bounds = array<i64: 1, 128>}, {pipeline_mode = #tpu.pipeline_mode<synchronous>, transform_indices = @transform_9, window_bounds = array<i64: 8, 128, 512>}, {pipeline_mode = #tpu.pipeline_mode<synchronous>, transform_indices = @transform_10, window_bounds = array<i64: 1, 512>}, {transform_indices = @transform_11, window_bounds = array<i64: 1, 1, 200>}, {transform_indices = @transform_12, window_bounds = array<i64: 1, 1, 200>}]} {
    %c0 = arith.constant 0 : index
    %c0_0 = arith.constant 0 : index
    %c0_1 = arith.constant 0 : index
    %0 = vector.load %arg1[%c0, %c0_0, %c0_1] : memref<1x32x96xf32, #tpu.memory_space<vmem>>, vector<1x32x96xf32>
    %1 = vector.shape_cast %0 : vector<1x32x96xf32> to vector<32x96xf32>
    %2 = arith.truncf %1 : vector<32x96xf32> to vector<32x96xbf16>
    %c0_2 = arith.constant 0 : index
    %c0_3 = arith.constant 0 : index
    %c0_4 = arith.constant 0 : index
    %3 = vector.load %arg2[%c0_2, %c0_3, %c0_4] : memref<3x16x32xbf16, #tpu.memory_space<vmem>>, vector<1x16x32xbf16>
    %4 = vector.shape_cast %3 : vector<1x16x32xbf16> to vector<16x32xbf16>
    %cst = arith.constant dense<0.000000e+00> : vector<16x96xf32>
    %5 = tpu.matmul %4, %2, %cst {dimension_numbers = #tpu.dot_dimension_numbers<[1], [0], [0], [1], [0, 0, 1, 1], [], []>} : vector<16x32xbf16>, vector<32x96xbf16>, vector<16x96xf32> -> vector<16x96xf32>
    %6 = arith.truncf %5 : vector<16x96xf32> to vector<16x96xbf16>
    %c0_5 = arith.constant 0 : index
    %c0_6 = arith.constant 0 : index
    %c0_7 = arith.constant 0 : index
    %7 = vector.load %arg3[%c0_5, %c0_6, %c0_7] : memref<3x96x128xbf16, #tpu.memory_space<vmem>>, vector<1x96x128xbf16>
    %8 = vector.shape_cast %7 : vector<1x96x128xbf16> to vector<96x128xbf16>
    %cst_8 = arith.constant dense<0.000000e+00> : vector<16x128xf32>
    %9 = tpu.matmul %6, %8, %cst_8 {dimension_numbers = #tpu.dot_dimension_numbers<[1], [0], [0], [1], [0, 0, 1, 1], [], []>} : vector<16x96xbf16>, vector<96x128xbf16>, vector<16x128xf32> -> vector<16x128xf32>
    %c1 = arith.constant 1 : index
    %c0_9 = arith.constant 0 : index
    %c0_10 = arith.constant 0 : index
    %10 = vector.load %arg2[%c1, %c0_9, %c0_10] : memref<3x16x32xbf16, #tpu.memory_space<vmem>>, vector<1x16x32xbf16>
    %11 = vector.shape_cast %10 : vector<1x16x32xbf16> to vector<16x32xbf16>
    %cst_11 = arith.constant dense<0.000000e+00> : vector<16x96xf32>
    %12 = tpu.matmul %11, %2, %cst_11 {dimension_numbers = #tpu.dot_dimension_numbers<[1], [0], [0], [1], [0, 0, 1, 1], [], []>} : vector<16x32xbf16>, vector<32x96xbf16>, vector<16x96xf32> -> vector<16x96xf32>
    %13 = arith.truncf %12 : vector<16x96xf32> to vector<16x96xbf16>
    %c1_12 = arith.constant 1 : index
    %c0_13 = arith.constant 0 : index
    %c0_14 = arith.constant 0 : index
    %14 = vector.load %arg3[%c1_12, %c0_13, %c0_14] : memref<3x96x128xbf16, #tpu.memory_space<vmem>>, vector<1x96x128xbf16>
    %15 = vector.shape_cast %14 : vector<1x96x128xbf16> to vector<96x128xbf16>
    %cst_15 = arith.constant dense<0.000000e+00> : vector<16x128xf32>
    %16 = tpu.matmul %13, %15, %cst_15 {dimension_numbers = #tpu.dot_dimension_numbers<[1], [0], [0], [1], [0, 0, 1, 1], [], []>} : vector<16x96xbf16>, vector<96x128xbf16>, vector<16x128xf32> -> vector<16x128xf32>
    %17 = arith.addf %9, %16 : vector<16x128xf32>
    %c2 = arith.constant 2 : index
    %c0_16 = arith.constant 0 : index
    %c0_17 = arith.constant 0 : index
    %18 = vector.load %arg2[%c2, %c0_16, %c0_17] : memref<3x16x32xbf16, #tpu.memory_space<vmem>>, vector<1x16x32xbf16>
    %19 = vector.shape_cast %18 : vector<1x16x32xbf16> to vector<16x32xbf16>
    %cst_18 = arith.constant dense<0.000000e+00> : vector<16x96xf32>
    %20 = tpu.matmul %19, %2, %cst_18 {dimension_numbers = #tpu.dot_dimension_numbers<[1], [0], [0], [1], [0, 0, 1, 1], [], []>} : vector<16x32xbf16>, vector<32x96xbf16>, vector<16x96xf32> -> vector<16x96xf32>
    %21 = arith.truncf %20 : vector<16x96xf32> to vector<16x96xbf16>
    %c2_19 = arith.constant 2 : index
    %c0_20 = arith.constant 0 : index
    %c0_21 = arith.constant 0 : index
    %22 = vector.load %arg3[%c2_19, %c0_20, %c0_21] : memref<3x96x128xbf16, #tpu.memory_space<vmem>>, vector<1x96x128xbf16>
    %23 = vector.shape_cast %22 : vector<1x96x128xbf16> to vector<96x128xbf16>
    %cst_22 = arith.constant dense<0.000000e+00> : vector<16x128xf32>
    %24 = tpu.matmul %21, %23, %cst_22 {dimension_numbers = #tpu.dot_dimension_numbers<[1], [0], [0], [1], [0, 0, 1, 1], [], []>} : vector<16x96xbf16>, vector<96x128xbf16>, vector<16x128xf32> -> vector<16x128xf32>
    %25 = arith.addf %17, %24 : vector<16x128xf32>
    %c0_23 = arith.constant 0 : index
    %c0_24 = arith.constant 0 : index
    %26 = vector.load %arg4[%c0_23, %c0_24] : memref<1x128xf32, #tpu.memory_space<vmem>>, vector<1x128xf32>
    %27 = vector.broadcast %26 : vector<1x128xf32> to vector<16x128xf32>
    %28 = arith.mulf %25, %27 : vector<16x128xf32>
    %c0_25 = arith.constant 0 : index
    %c0_26 = arith.constant 0 : index
    %29 = vector.load %arg5[%c0_25, %c0_26] : memref<1x128xf32, #tpu.memory_space<vmem>>, vector<1x128xf32>
    %30 = vector.broadcast %29 : vector<1x128xf32> to vector<16x128xf32>
    %31 = arith.addf %28, %30 : vector<16x128xf32>
    %cst_27 = arith.constant 0.000000e+00 : f32
    %32 = vector.broadcast %cst_27 : f32 to vector<16x128xf32>
    %33 = arith.cmpf ogt, %31, %32 : vector<16x128xf32>
    %cst_28 = arith.constant 0.00999999977 : f32
    %34 = vector.broadcast %cst_28 : f32 to vector<16x128xf32>
    %35 = arith.mulf %34, %31 : vector<16x128xf32>
    %36 = arith.select %33, %31, %35 : vector<16x128xi1>, vector<16x128xf32>
    %37 = arith.truncf %36 : vector<16x128xf32> to vector<16x128xbf16>
    %c0_29 = arith.constant 0 : index
    %c0_30 = arith.constant 0 : index
    %c0_31 = arith.constant 0 : index
    %38 = vector.load %arg6[%c0_29, %c0_30, %c0_31] : memref<3x8x16xbf16, #tpu.memory_space<vmem>>, vector<1x8x16xbf16>
    %39 = vector.shape_cast %38 : vector<1x8x16xbf16> to vector<8x16xbf16>
    %cst_32 = arith.constant dense<0.000000e+00> : vector<8x128xf32>
    %40 = tpu.matmul %39, %37, %cst_32 {dimension_numbers = #tpu.dot_dimension_numbers<[1], [0], [0], [1], [0, 0, 1, 1], [], []>} : vector<8x16xbf16>, vector<16x128xbf16>, vector<8x128xf32> -> vector<8x128xf32>
    %41 = arith.truncf %40 : vector<8x128xf32> to vector<8x128xbf16>
    %c0_33 = arith.constant 0 : index
    %c0_34 = arith.constant 0 : index
    %c0_35 = arith.constant 0 : index
    %42 = vector.load %arg7[%c0_33, %c0_34, %c0_35] : memref<3x128x128xbf16, #tpu.memory_space<vmem>>, vector<1x128x128xbf16>
    %43 = vector.shape_cast %42 : vector<1x128x128xbf16> to vector<128x128xbf16>
    %cst_36 = arith.constant dense<0.000000e+00> : vector<8x128xf32>
    %44 = tpu.matmul %41, %43, %cst_36 {dimension_numbers = #tpu.dot_dimension_numbers<[1], [0], [0], [1], [0, 0, 1, 1], [], []>} : vector<8x128xbf16>, vector<128x128xbf16>, vector<8x128xf32> -> vector<8x128xf32>
    %c1_37 = arith.constant 1 : index
    %c0_38 = arith.constant 0 : index
    %c0_39 = arith.constant 0 : index
    %45 = vector.load %arg6[%c1_37, %c0_38, %c0_39] : memref<3x8x16xbf16, #tpu.memory_space<vmem>>, vector<1x8x16xbf16>
    %46 = vector.shape_cast %45 : vector<1x8x16xbf16> to vector<8x16xbf16>
    %cst_40 = arith.constant dense<0.000000e+00> : vector<8x128xf32>
    %47 = tpu.matmul %46, %37, %cst_40 {dimension_numbers = #tpu.dot_dimension_numbers<[1], [0], [0], [1], [0, 0, 1, 1], [], []>} : vector<8x16xbf16>, vector<16x128xbf16>, vector<8x128xf32> -> vector<8x128xf32>
    %48 = arith.truncf %47 : vector<8x128xf32> to vector<8x128xbf16>
    %c1_41 = arith.constant 1 : index
    %c0_42 = arith.constant 0 : index
    %c0_43 = arith.constant 0 : index
    %49 = vector.load %arg7[%c1_41, %c0_42, %c0_43] : memref<3x128x128xbf16, #tpu.memory_space<vmem>>, vector<1x128x128xbf16>
    %50 = vector.shape_cast %49 : vector<1x128x128xbf16> to vector<128x128xbf16>
    %cst_44 = arith.constant dense<0.000000e+00> : vector<8x128xf32>
    %51 = tpu.matmul %48, %50, %cst_44 {dimension_numbers = #tpu.dot_dimension_numbers<[1], [0], [0], [1], [0, 0, 1, 1], [], []>} : vector<8x128xbf16>, vector<128x128xbf16>, vector<8x128xf32> -> vector<8x128xf32>
    %52 = arith.addf %44, %51 : vector<8x128xf32>
    %c2_45 = arith.constant 2 : index
    %c0_46 = arith.constant 0 : index
    %c0_47 = arith.constant 0 : index
    %53 = vector.load %arg6[%c2_45, %c0_46, %c0_47] : memref<3x8x16xbf16, #tpu.memory_space<vmem>>, vector<1x8x16xbf16>
    %54 = vector.shape_cast %53 : vector<1x8x16xbf16> to vector<8x16xbf16>
    %cst_48 = arith.constant dense<0.000000e+00> : vector<8x128xf32>
    %55 = tpu.matmul %54, %37, %cst_48 {dimension_numbers = #tpu.dot_dimension_numbers<[1], [0], [0], [1], [0, 0, 1, 1], [], []>} : vector<8x16xbf16>, vector<16x128xbf16>, vector<8x128xf32> -> vector<8x128xf32>
    %56 = arith.truncf %55 : vector<8x128xf32> to vector<8x128xbf16>
    %c2_49 = arith.constant 2 : index
    %c0_50 = arith.constant 0 : index
    %c0_51 = arith.constant 0 : index
    %57 = vector.load %arg7[%c2_49, %c0_50, %c0_51] : memref<3x128x128xbf16, #tpu.memory_space<vmem>>, vector<1x128x128xbf16>
    %58 = vector.shape_cast %57 : vector<1x128x128xbf16> to vector<128x128xbf16>
    %cst_52 = arith.constant dense<0.000000e+00> : vector<8x128xf32>
    %59 = tpu.matmul %56, %58, %cst_52 {dimension_numbers = #tpu.dot_dimension_numbers<[1], [0], [0], [1], [0, 0, 1, 1], [], []>} : vector<8x128xbf16>, vector<128x128xbf16>, vector<8x128xf32> -> vector<8x128xf32>
    %60 = arith.addf %52, %59 : vector<8x128xf32>
    %c0_53 = arith.constant 0 : index
    %c0_54 = arith.constant 0 : index
    %61 = vector.load %arg8[%c0_53, %c0_54] : memref<1x128xf32, #tpu.memory_space<vmem>>, vector<1x128xf32>
    %62 = vector.broadcast %61 : vector<1x128xf32> to vector<8x128xf32>
    %63 = arith.mulf %60, %62 : vector<8x128xf32>
    %c0_55 = arith.constant 0 : index
    %c0_56 = arith.constant 0 : index
    %64 = vector.load %arg9[%c0_55, %c0_56] : memref<1x128xf32, #tpu.memory_space<vmem>>, vector<1x128xf32>
    %65 = vector.broadcast %64 : vector<1x128xf32> to vector<8x128xf32>
    %66 = arith.addf %63, %65 : vector<8x128xf32>
    %cst_57 = arith.constant 0.000000e+00 : f32
    %67 = vector.broadcast %cst_57 : f32 to vector<8x128xf32>
    %68 = arith.cmpf ogt, %66, %67 : vector<8x128xf32>
    %cst_58 = arith.constant 0.00999999977 : f32
    %69 = vector.broadcast %cst_58 : f32 to vector<8x128xf32>
    %70 = arith.mulf %69, %66 : vector<8x128xf32>
    %71 = arith.select %68, %66, %70 : vector<8x128xi1>, vector<8x128xf32>
    %c0_59 = arith.constant 0 : index
    %c0_60 = arith.constant 0 : index
    %72 = vector.load %arg11[%c0_59, %c0_60] : memref<1x512xf32, #tpu.memory_space<vmem>>, vector<1x512xf32>
    %73 = vector.extract_strided_slice %71 {offsets = [0, 0], sizes = [1, 128], strides = [1, 1]} : vector<8x128xf32> to vector<1x128xf32>
    %74 = arith.truncf %73 : vector<1x128xf32> to vector<1x128xbf16>
    %c0_61 = arith.constant 0 : index
    %c0_62 = arith.constant 0 : index
    %c0_63 = arith.constant 0 : index
    %75 = vector.load %arg10[%c0_61, %c0_62, %c0_63] : memref<8x128x512xbf16, #tpu.memory_space<vmem>>, vector<1x128x512xbf16>
    %76 = vector.shape_cast %75 : vector<1x128x512xbf16> to vector<128x512xbf16>
    %cst_64 = arith.constant dense<0.000000e+00> : vector<1x512xf32>
    %77 = tpu.matmul %74, %76, %cst_64 {dimension_numbers = #tpu.dot_dimension_numbers<[1], [0], [0], [1], [0, 0, 1, 1], [], []>} : vector<1x128xbf16>, vector<128x512xbf16>, vector<1x512xf32> -> vector<1x512xf32>
    %78 = arith.addf %72, %77 : vector<1x512xf32>
    %79 = vector.extract_strided_slice %71 {offsets = [1, 0], sizes = [1, 128], strides = [1, 1]} : vector<8x128xf32> to vector<1x128xf32>
    %80 = arith.truncf %79 : vector<1x128xf32> to vector<1x128xbf16>
    %c1_65 = arith.constant 1 : index
    %c0_66 = arith.constant 0 : index
    %c0_67 = arith.constant 0 : index
    %81 = vector.load %arg10[%c1_65, %c0_66, %c0_67] : memref<8x128x512xbf16, #tpu.memory_space<vmem>>, vector<1x128x512xbf16>
    %82 = vector.shape_cast %81 : vector<1x128x512xbf16> to vector<128x512xbf16>
    %cst_68 = arith.constant dense<0.000000e+00> : vector<1x512xf32>
    %83 = tpu.matmul %80, %82, %cst_68 {dimension_numbers = #tpu.dot_dimension_numbers<[1], [0], [0], [1], [0, 0, 1, 1], [], []>} : vector<1x128xbf16>, vector<128x512xbf16>, vector<1x512xf32> -> vector<1x512xf32>
    %84 = arith.addf %78, %83 : vector<1x512xf32>
    %85 = vector.extract_strided_slice %71 {offsets = [2, 0], sizes = [1, 128], strides = [1, 1]} : vector<8x128xf32> to vector<1x128xf32>
    %86 = arith.truncf %85 : vector<1x128xf32> to vector<1x128xbf16>
    %c2_69 = arith.constant 2 : index
    %c0_70 = arith.constant 0 : index
    %c0_71 = arith.constant 0 : index
    %87 = vector.load %arg10[%c2_69, %c0_70, %c0_71] : memref<8x128x512xbf16, #tpu.memory_space<vmem>>, vector<1x128x512xbf16>
    %88 = vector.shape_cast %87 : vector<1x128x512xbf16> to vector<128x512xbf16>
    %cst_72 = arith.constant dense<0.000000e+00> : vector<1x512xf32>
    %89 = tpu.matmul %86, %88, %cst_72 {dimension_numbers = #tpu.dot_dimension_numbers<[1], [0], [0], [1], [0, 0, 1, 1], [], []>} : vector<1x128xbf16>, vector<128x512xbf16>, vector<1x512xf32> -> vector<1x512xf32>
    %90 = arith.addf %84, %89 : vector<1x512xf32>
    %91 = vector.extract_strided_slice %71 {offsets = [3, 0], sizes = [1, 128], strides = [1, 1]} : vector<8x128xf32> to vector<1x128xf32>
    %92 = arith.truncf %91 : vector<1x128xf32> to vector<1x128xbf16>
    %c3 = arith.constant 3 : index
    %c0_73 = arith.constant 0 : index
    %c0_74 = arith.constant 0 : index
    %93 = vector.load %arg10[%c3, %c0_73, %c0_74] : memref<8x128x512xbf16, #tpu.memory_space<vmem>>, vector<1x128x512xbf16>
    %94 = vector.shape_cast %93 : vector<1x128x512xbf16> to vector<128x512xbf16>
    %cst_75 = arith.constant dense<0.000000e+00> : vector<1x512xf32>
    %95 = tpu.matmul %92, %94, %cst_75 {dimension_numbers = #tpu.dot_dimension_numbers<[1], [0], [0], [1], [0, 0, 1, 1], [], []>} : vector<1x128xbf16>, vector<128x512xbf16>, vector<1x512xf32> -> vector<1x512xf32>
    %96 = arith.addf %90, %95 : vector<1x512xf32>
    %97 = vector.extract_strided_slice %71 {offsets = [4, 0], sizes = [1, 128], strides = [1, 1]} : vector<8x128xf32> to vector<1x128xf32>
    %98 = arith.truncf %97 : vector<1x128xf32> to vector<1x128xbf16>
    %c4 = arith.constant 4 : index
    %c0_76 = arith.constant 0 : index
    %c0_77 = arith.constant 0 : index
    %99 = vector.load %arg10[%c4, %c0_76, %c0_77] : memref<8x128x512xbf16, #tpu.memory_space<vmem>>, vector<1x128x512xbf16>
    %100 = vector.shape_cast %99 : vector<1x128x512xbf16> to vector<128x512xbf16>
    %cst_78 = arith.constant dense<0.000000e+00> : vector<1x512xf32>
    %101 = tpu.matmul %98, %100, %cst_78 {dimension_numbers = #tpu.dot_dimension_numbers<[1], [0], [0], [1], [0, 0, 1, 1], [], []>} : vector<1x128xbf16>, vector<128x512xbf16>, vector<1x512xf32> -> vector<1x512xf32>
    %102 = arith.addf %96, %101 : vector<1x512xf32>
    %103 = vector.extract_strided_slice %71 {offsets = [5, 0], sizes = [1, 128], strides = [1, 1]} : vector<8x128xf32> to vector<1x128xf32>
    %104 = arith.truncf %103 : vector<1x128xf32> to vector<1x128xbf16>
    %c5 = arith.constant 5 : index
    %c0_79 = arith.constant 0 : index
    %c0_80 = arith.constant 0 : index
    %105 = vector.load %arg10[%c5, %c0_79, %c0_80] : memref<8x128x512xbf16, #tpu.memory_space<vmem>>, vector<1x128x512xbf16>
    %106 = vector.shape_cast %105 : vector<1x128x512xbf16> to vector<128x512xbf16>
    %cst_81 = arith.constant dense<0.000000e+00> : vector<1x512xf32>
    %107 = tpu.matmul %104, %106, %cst_81 {dimension_numbers = #tpu.dot_dimension_numbers<[1], [0], [0], [1], [0, 0, 1, 1], [], []>} : vector<1x128xbf16>, vector<128x512xbf16>, vector<1x512xf32> -> vector<1x512xf32>
    %108 = arith.addf %102, %107 : vector<1x512xf32>
    %109 = vector.extract_strided_slice %71 {offsets = [6, 0], sizes = [1, 128], strides = [1, 1]} : vector<8x128xf32> to vector<1x128xf32>
    %110 = arith.truncf %109 : vector<1x128xf32> to vector<1x128xbf16>
    %c6 = arith.constant 6 : index
    %c0_82 = arith.constant 0 : index
    %c0_83 = arith.constant 0 : index
    %111 = vector.load %arg10[%c6, %c0_82, %c0_83] : memref<8x128x512xbf16, #tpu.memory_space<vmem>>, vector<1x128x512xbf16>
    %112 = vector.shape_cast %111 : vector<1x128x512xbf16> to vector<128x512xbf16>
    %cst_84 = arith.constant dense<0.000000e+00> : vector<1x512xf32>
    %113 = tpu.matmul %110, %112, %cst_84 {dimension_numbers = #tpu.dot_dimension_numbers<[1], [0], [0], [1], [0, 0, 1, 1], [], []>} : vector<1x128xbf16>, vector<128x512xbf16>, vector<1x512xf32> -> vector<1x512xf32>
    %114 = arith.addf %108, %113 : vector<1x512xf32>
    %115 = vector.extract_strided_slice %71 {offsets = [7, 0], sizes = [1, 128], strides = [1, 1]} : vector<8x128xf32> to vector<1x128xf32>
    %116 = arith.truncf %115 : vector<1x128xf32> to vector<1x128xbf16>
    %c7 = arith.constant 7 : index
    %c0_85 = arith.constant 0 : index
    %c0_86 = arith.constant 0 : index
    %117 = vector.load %arg10[%c7, %c0_85, %c0_86] : memref<8x128x512xbf16, #tpu.memory_space<vmem>>, vector<1x128x512xbf16>
    %118 = vector.shape_cast %117 : vector<1x128x512xbf16> to vector<128x512xbf16>
    %cst_87 = arith.constant dense<0.000000e+00> : vector<1x512xf32>
    %119 = tpu.matmul %116, %118, %cst_87 {dimension_numbers = #tpu.dot_dimension_numbers<[1], [0], [0], [1], [0, 0, 1, 1], [], []>} : vector<1x128xbf16>, vector<128x512xbf16>, vector<1x512xf32> -> vector<1x512xf32>
    %120 = arith.addf %114, %119 : vector<1x512xf32>
    %121 = vector.extract_strided_slice %120 {offsets = [0, 0], sizes = [1, 200], strides = [1, 1]} : vector<1x512xf32> to vector<1x200xf32>
    %122 = vector.extract_strided_slice %120 {offsets = [0, 256], sizes = [1, 200], strides = [1, 1]} : vector<1x512xf32> to vector<1x200xf32>
    %cst_88 = arith.constant 5.000000e-01 : f32
    %123 = vector.broadcast %cst_88 : f32 to vector<1x200xf32>
    %124 = arith.mulf %123, %122 : vector<1x200xf32>
    %125 = math.exp %124 : vector<1x200xf32>
    %c0_89 = arith.constant 0 : index
    %c0_90 = arith.constant 0 : index
    %c0_91 = arith.constant 0 : index
    %126 = vector.load %arg12[%c0_89, %c0_90, %c0_91] : memref<1x1x200xf32, #tpu.memory_space<vmem>>, vector<1x1x200xf32>
    %127 = vector.shape_cast %126 : vector<1x1x200xf32> to vector<1x200xf32>
    %128 = arith.mulf %125, %127 : vector<1x200xf32>
    %129 = arith.addf %121, %128 : vector<1x200xf32>
    %c0_92 = arith.constant 0 : index
    %c0_93 = arith.constant 0 : index
    %c0_94 = arith.constant 0 : index
    %130 = vector.load %arg13[%c0_92, %c0_93, %c0_94] : memref<1x1x200xf32, #tpu.memory_space<vmem>>, vector<1x1x200xf32>
    %131 = vector.shape_cast %130 : vector<1x1x200xf32> to vector<1x200xf32>
    %132 = vector.shape_cast %129 : vector<1x200xf32> to vector<1x1x200xf32>
    tpu.vector_store %arg13[%c0_92, %c0_93, %c0_94], %132 {strides = array<i32>} : memref<1x1x200xf32, #tpu.memory_space<vmem>>, vector<1x1x200xf32>,
    return
  }
  func.func @transform_0(%arg0: i32) -> (i32, i32, i32) {
    %c0_i32 = arith.constant 0 : i32
    %c0_i32_0 = arith.constant 0 : i32
    %c0_i32_1 = arith.constant 0 : i32
    return %arg0, %c0_i32, %c0_i32_0 : i32, i32, i32
  }
  func.func @transform_1(%arg0: i32) -> (i32, i32, i32) {
    %c0_i32 = arith.constant 0 : i32
    %c0_i32_0 = arith.constant 0 : i32
    %c0_i32_1 = arith.constant 0 : i32
    %c0_i32_2 = arith.constant 0 : i32
    return %c0_i32, %c0_i32_0, %c0_i32_1 : i32, i32, i32
  }
  func.func @transform_2(%arg0: i32) -> (i32, i32, i32) {
    %c0_i32 = arith.constant 0 : i32
    %c0_i32_0 = arith.constant 0 : i32
    %c0_i32_1 = arith.constant 0 : i32
    %c0_i32_2 = arith.constant 0 : i32
    return %c0_i32, %c0_i32_0, %c0_i32_1 : i32, i32, i32
  }
  func.func @transform_3(%arg0: i32) -> (i32, i32) {
    %c0_i32 = arith.constant 0 : i32
    %c0_i32_0 = arith.constant 0 : i32
    %c0_i32_1 = arith.constant 0 : i32
    return %c0_i32, %c0_i32_0 : i32, i32
  }
  func.func @transform_4(%arg0: i32) -> (i32, i32) {
    %c0_i32 = arith.constant 0 : i32
    %c0_i32_0 = arith.constant 0 : i32
    %c0_i32_1 = arith.constant 0 : i32
    return %c0_i32, %c0_i32_0 : i32, i32
  }
  func.func @transform_5(%arg0: i32) -> (i32, i32, i32) {
    %c0_i32 = arith.constant 0 : i32
    %c0_i32_0 = arith.constant 0 : i32
    %c0_i32_1 = arith.constant 0 : i32
    %c0_i32_2 = arith.constant 0 : i32
    return %c0_i32, %c0_i32_0, %c0_i32_1 : i32, i32, i32
  }
  func.func @transform_6(%arg0: i32) -> (i32, i32, i32) {
    %c0_i32 = arith.constant 0 : i32
    %c0_i32_0 = arith.constant 0 : i32
    %c0_i32_1 = arith.constant 0 : i32
    %c0_i32_2 = arith.constant 0 : i32
    return %c0_i32, %c0_i32_0, %c0_i32_1 : i32, i32, i32
  }
  func.func @transform_7(%arg0: i32) -> (i32, i32) {
    %c0_i32 = arith.constant 0 : i32
    %c0_i32_0 = arith.constant 0 : i32
    %c0_i32_1 = arith.constant 0 : i32
    return %c0_i32, %c0_i32_0 : i32, i32
  }
  func.func @transform_8(%arg0: i32) -> (i32, i32) {
    %c0_i32 = arith.constant 0 : i32
    %c0_i32_0 = arith.constant 0 : i32
    %c0_i32_1 = arith.constant 0 : i32
    return %c0_i32, %c0_i32_0 : i32, i32
  }
  func.func @transform_9(%arg0: i32) -> (i32, i32, i32) {
    %c0_i32 = arith.constant 0 : i32
    %c0_i32_0 = arith.constant 0 : i32
    %c0_i32_1 = arith.constant 0 : i32
    %c0_i32_2 = arith.constant 0 : i32
    return %c0_i32, %c0_i32_0, %c0_i32_1 : i32, i32, i32
  }
  func.func @transform_10(%arg0: i32) -> (i32, i32) {
    %c0_i32 = arith.constant 0 : i32
    %c0_i32_0 = arith.constant 0 : i32
    %c0_i32_1 = arith.constant 0 : i32
    return %c0_i32, %c0_i32_0 : i32, i32
  }
  func.func @transform_11(%arg0: i32) -> (i32, i32, i32) {
    %c0_i32 = arith.constant 0 : i32
    %c0_i32_0 = arith.constant 0 : i32
    %c0_i32_1 = arith.constant 0 : i32
    return %arg0, %c0_i32, %c0_i32_0 : i32, i32, i32
  }
  func.func @transform_12(%arg0: i32) -> (i32, i32, i32) {
    %c0_i32 = arith.constant 0 : i32
    %c0_i32_0 = arith.constant 0 : i32
    %c0_i32_1 = arith.constant 0 : i32
    return %arg0, %c0_i32, %c0_i32_0 : i32, i32, i32
  }
}

</mosaic_0001>

<llo_original>
// kernel: encoder_forward.1
$region0: #{encoder_forward.1}
  #allocation0 [shape = 'u32[]', space=smem, size = 0x4, offset = 0x4, fixed_abs, tag = 'smem constant byte address 0x4 - core index']
  #allocation1 [shape = 'u32[144,128]{1,0:T(1,128)}', space=vmem, size = 0x12000, scoped, tag = 'internal scratch']
  %s0 = inlined_call_operand.vmem [shape: f32[2,32,96], index: 0, kind: input, shape index: {}]
  %s1 = inlined_call_operand.vmem [shape: bf16[3,16,32], index: 1, kind: input, shape index: {}]
  %s2 = inlined_call_operand.vmem [shape: bf16[3,96,128], index: 2, kind: input, shape index: {}]
  %s3 = inlined_call_operand.vmem [shape: f32[1,128], index: 3, kind: input, shape index: {}]
  %s4 = inlined_call_operand.vmem [shape: f32[1,128], index: 4, kind: input, shape index: {}]
  %s5 = inlined_call_operand.vmem [shape: bf16[3,8,16], index: 5, kind: input, shape index: {}]
  %s6 = inlined_call_operand.vmem [shape: bf16[3,128,128], index: 6, kind: input, shape index: {}]
  %s7 = inlined_call_operand.vmem [shape: f32[1,128], index: 7, kind: input, shape index: {}]
  %s8 = inlined_call_operand.vmem [shape: f32[1,128], index: 8, kind: input, shape index: {}]
  %s9 = inlined_call_operand.hbm [shape: bf16[8,128,512], index: 9, kind: input, shape index: {}]
  %s10 = inlined_call_operand.vmem [shape: f32[1,512], index: 10, kind: input, shape index: {}]
  %s11 = inlined_call_operand.vmem [shape: f32[2,1,200], index: 11, kind: input, shape index: {}]
  %s12 = inlined_call_operand.vmem [shape: f32[2,1,200], index: 12, kind: output, shape index: {}]
  %s13 = sld [smem:[#allocation0]]
  $region85: #{encoder_forward.1} parent=0
    _
  %s15 = ssub.s32 1, %s13
  %s16 = scalar_select 0, %s15, %s13
  $region1: #{encoder_forward.1} parent=0
    #allocation2 [shape = 'u8[1048576]{0}', space=vmem, size = 0x100000, scoped, tag = 'input window, operand 9, single buffered']
    #allocation3 [shape = 's32[2]{0}', space=sflag, size = 0x8, scoped, tag = 'scoped memory for encoder_forward.1']
    %17 = vsyncpa [#allocation3], 0
    loop: start=0, step=1, limit=4
    $region2: #{encoder_forward.1} parent=1 // loop_pre_header
      _
    $region3: #{encoder_forward.1} parent=1 // loop_header
      %s19 = sphi 0, %s23
      %p20 = scmp.ge.s32.totalorder %s19, 4
      %s29 = sphi 0, %s31
      %s32 = sphi 0, %s29
      %s33 = sphi 0, %s32
      %s49 = sphi 0, %s33
      %s53 = sphi 0, %s53
      %s55 = sphi 0, %s53
      %s56 = sphi 0, %s55
      %s70 = sphi 0, %s56
      %s74 = sphi 0, %s74
      %s76 = sphi 0, %s74
      %s77 = sphi 0, %s76
      %s91 = sphi 0, %s77
      %s95 = sphi 0, %s95
      %s97 = sphi 0, %s95
      %s98 = sphi 0, %s97
      %s112 = sphi 0, %s98
      %s116 = sphi 0, %s116
      %s118 = sphi 0, %s116
      %s119 = sphi 0, %s118
      %s133 = sphi 0, %s119
      %s137 = sphi 0, %s137
      %s139 = sphi 0, %s137
      %s140 = sphi 0, %s139
      %s154 = sphi 0, %s140
      %s158 = sphi 0, %s158
      %s160 = sphi 0, %s158
      %s161 = sphi 0, %s160
      %s175 = sphi 0, %s161
      %s179 = sphi 0, %s179
      %s181 = sphi 0, %s179
      %s182 = sphi 0, %s181
      %s196 = sphi 0, %s182
      %s200 = sphi 0, %s200
      %s202 = sphi 0, %s200
      %s203 = sphi 0, %s202
      %s217 = sphi 0, %s203
      %s221 = sphi 0, %s221
      %s223 = sphi 0, %s221
      %s224 = sphi 0, %s223
      %s238 = sphi 0, %s224
      %s242 = sphi 0, %s242
      %s244 = sphi 0, %s242
      %s245 = sphi 0, %s244
      %s259 = sphi 0, %s245
      %s265 = sphi 0, %s267
      %s268 = sphi 0, %s265
      %s269 = sphi 0, %s268
      %s285 = sphi 0, %s269
      %s291 = sphi 0, %s293
      %s294 = sphi 0, %s291
      %s295 = sphi 0, %s294
      %s311 = sphi 0, %s295
    $region4: #{encoder_forward.1} parent=1 // loop_header_branch
      %22 = sbr.rel (%p20) target = $region8
    $region5: #{encoder_forward.1} parent=1 // loop_body
      %s24 = ssub.s32 %s19, 1
      %s25 = ssub.s32 %s19, 2
      %s26 = sadd.s32 %s19, 1
      %s27 = ssub.s32 %s19, %s26
      %p28 = scmp.eq.s32.totalorder %s27, 0
      %s30 = sadd.s32 %s29, 1
      %s31 = scalar_select %p28, %s29, %s30
      %p34 = pneg %p28
      %p35 = scmp.eq.s32.totalorder %s19, 1
      %p36 = por %p34, %p35
      %p37 = scmp.ne.s32.totalorder %s29, %s32
      %p38 = scmp.eq.s32.totalorder %s19, 0
      %p39 = por %p37, %p38
      %p40 = scmp.ne.s32.totalorder %s29, %s32
      %p41 = scmp.eq.s32.totalorder %s24, 1
      %p42 = por %p40, %p41
      %p43 = scmp.ne.s32.totalorder %s32, %s33
      %p44 = scmp.eq.s32.totalorder %s24, 0
      %p45 = por %p43, %p44
      %p46 = scmp.ne.s32.totalorder %s32, %s33
      %p47 = scmp.eq.s32.totalorder %s25, 1
      %p48 = por %p46, %p47
      %p50 = scmp.ne.s32.totalorder %s33, %s49
      %p51 = scmp.eq.s32.totalorder %s25, 0
      %p52 = por %p50, %p51
      %s54 = sadd.s32 %s53, 1
      %p57 = scmp.eq.s32.totalorder %s19, 1
      %p58 = scmp.ne.s32.totalorder %s53, %s55
      %p59 = scmp.eq.s32.totalorder %s19, 0
      %p60 = por %p58, %p59
      %p61 = scmp.ne.s32.totalorder %s53, %s55
      %p62 = scmp.eq.s32.totalorder %s24, 1
      %p63 = por %p61, %p62
      %p64 = scmp.ne.s32.totalorder %s55, %s56
      %p65 = scmp.eq.s32.totalorder %s24, 0
      %p66 = por %p64, %p65
      %p67 = scmp.ne.s32.totalorder %s55, %s56
      %p68 = scmp.eq.s32.totalorder %s25, 1
      %p69 = por %p67, %p68
      %p71 = scmp.ne.s32.totalorder %s56, %s70
      %p72 = scmp.eq.s32.totalorder %s25, 0
      %p73 = por %p71, %p72
      %s75 = sadd.s32 %s74, 1
      %p78 = scmp.eq.s32.totalorder %s19, 1
      %p79 = scmp.ne.s32.totalorder %s74, %s76
      %p80 = scmp.eq.s32.totalorder %s19, 0
      %p81 = por %p79, %p80
      %p82 = scmp.ne.s32.totalorder %s74, %s76
      %p83 = scmp.eq.s32.totalorder %s24, 1
      %p84 = por %p82, %p83
      %p85 = scmp.ne.s32.totalorder %s76, %s77
      %p86 = scmp.eq.s32.totalorder %s24, 0
      %p87 = por %p85, %p86
      %p88 = scmp.ne.s32.totalorder %s76, %s77
      %p89 = scmp.eq.s32.totalorder %s25, 1
      %p90 = por %p88, %p89
      %p92 = scmp.ne.s32.totalorder %s77, %s91
      %p93 = scmp.eq.s32.totalorder %s25, 0
      %p94 = por %p92, %p93
      %s96 = sadd.s32 %s95, 1
      %p99 = scmp.eq.s32.totalorder %s19, 1
      %p100 = scmp.ne.s32.totalorder %s95, %s97
      %p101 = scmp.eq.s32.totalorder %s19, 0
      %p102 = por %p100, %p101
      %p103 = scmp.ne.s32.totalorder %s95, %s97
      %p104 = scmp.eq.s32.totalorder %s24, 1
      %p105 = por %p103, %p104
      %p106 = scmp.ne.s32.totalorder %s97, %s98
      %p107 = scmp.eq.s32.totalorder %s24, 0
      %p108 = por %p106, %p107
      %p109 = scmp.ne.s32.totalorder %s97, %s98
      %p110 = scmp.eq.s32.totalorder %s25, 1
      %p111 = por %p109, %p110
      %p113 = scmp.ne.s32.totalorder %s98, %s112
      %p114 = scmp.eq.s32.totalorder %s25, 0
      %p115 = por %p113, %p114
      %s117 = sadd.s32 %s116, 1
      %p120 = scmp.eq.s32.totalorder %s19, 1
      %p121 = scmp.ne.s32.totalorder %s116, %s118
      %p122 = scmp.eq.s32.totalorder %s19, 0
      %p123 = por %p121, %p122
      %p124 = scmp.ne.s32.totalorder %s116, %s118
      %p125 = scmp.eq.s32.totalorder %s24, 1
      %p126 = por %p124, %p125
      %p127 = scmp.ne.s32.totalorder %s118, %s119
      %p128 = scmp.eq.s32.totalorder %s24, 0
      %p129 = por %p127, %p128
      %p130 = scmp.ne.s32.totalorder %s118, %s119
      %p131 = scmp.eq.s32.totalorder %s25, 1
      %p132 = por %p130, %p131
      %p134 = scmp.ne.s32.totalorder %s119, %s133
      %p135 = scmp.eq.s32.totalorder %s25, 0
      %p136 = por %p134, %p135
      %s138 = sadd.s32 %s137, 1
      %p141 = scmp.eq.s32.totalorder %s19, 1
      %p142 = scmp.ne.s32.totalorder %s137, %s139
      %p143 = scmp.eq.s32.totalorder %s19, 0
      %p144 = por %p142, %p143
      %p145 = scmp.ne.s32.totalorder %s137, %s139
      %p146 = scmp.eq.s32.totalorder %s24, 1
      %p147 = por %p145, %p146
      %p148 = scmp.ne.s32.totalorder %s139, %s140
      %p149 = scmp.eq.s32.totalorder %s24, 0
      %p150 = por %p148, %p149
      %p151 = scmp.ne.s32.totalorder %s139, %s140
      %p152 = scmp.eq.s32.totalorder %s25, 1
      %p153 = por %p151, %p152
      %p155 = scmp.ne.s32.totalorder %s140, %s154
      %p156 = scmp.eq.s32.totalorder %s25, 0
      %p157 = por %p155, %p156
      %s159 = sadd.s32 %s158, 1
      %p162 = scmp.eq.s32.totalorder %s19, 1
      %p163 = scmp.ne.s32.totalorder %s158, %s160
      %p164 = scmp.eq.s32.totalorder %s19, 0
      %p165 = por %p163, %p164
      %p166 = scmp.ne.s32.totalorder %s158, %s160
      %p167 = scmp.eq.s32.totalorder %s24, 1
      %p168 = por %p166, %p167
      %p169 = scmp.ne.s32.totalorder %s160, %s161
      %p170 = scmp.eq.s32.totalorder %s24, 0
      %p171 = por %p169, %p170
      %p172 = scmp.ne.s32.totalorder %s160, %s161
      %p173 = scmp.eq.s32.totalorder %s25, 1
      %p174 = por %p172, %p173
      %p176 = scmp.ne.s32.totalorder %s161, %s175
      %p177 = scmp.eq.s32.totalorder %s25, 0
      %p178 = por %p176, %p177
      %s180 = sadd.s32 %s179, 1
      %p183 = scmp.eq.s32.totalorder %s19, 1
      %p184 = scmp.ne.s32.totalorder %s179, %s181
      %p185 = scmp.eq.s32.totalorder %s19, 0
      %p186 = por %p184, %p185
      %p187 = scmp.ne.s32.totalorder %s179, %s181
      %p188 = scmp.eq.s32.totalorder %s24, 1
      %p189 = por %p187, %p188
      %p190 = scmp.ne.s32.totalorder %s181, %s182
      %p191 = scmp.eq.s32.totalorder %s24, 0
      %p192 = por %p190, %p191
      %p193 = scmp.ne.s32.totalorder %s181, %s182
      %p194 = scmp.eq.s32.totalorder %s25, 1
      %p195 = por %p193, %p194
      %p197 = scmp.ne.s32.totalorder %s182, %s196
      %p198 = scmp.eq.s32.totalorder %s25, 0
      %p199 = por %p197, %p198
      %s201 = sadd.s32 %s200, 1
      %p204 = scmp.eq.s32.totalorder %s19, 1
      %p205 = scmp.ne.s32.totalorder %s200, %s202
      %p206 = scmp.eq.s32.totalorder %s19, 0
      %p207 = por %p205, %p206
      %p208 = scmp.ne.s32.totalorder %s200, %s202
      %p209 = scmp.eq.s32.totalorder %s24, 1
      %p210 = por %p208, %p209
      %p211 = scmp.ne.s32.totalorder %s202, %s203
      %p212 = scmp.eq.s32.totalorder %s24, 0
      %p213 = por %p211, %p212
      %p214 = scmp.ne.s32.totalorder %s202, %s203
      %p215 = scmp.eq.s32.totalorder %s25, 1
      %p216 = por %p214, %p215
      %p218 = scmp.ne.s32.totalorder %s203, %s217
      %p219 = scmp.eq.s32.totalorder %s25, 0
      %p220 = por %p218, %p219
      %s222 = sadd.s32 %s221, 1
      %p225 = scmp.eq.s32.totalorder %s19, 1
      %p226 = scmp.ne.s32.totalorder %s221, %s223
      %p227 = scmp.eq.s32.totalorder %s19, 0
      %p228 = por %p226, %p227
      %p229 = scmp.ne.s32.totalorder %s221, %s223
      %p230 = scmp.eq.s32.totalorder %s24, 1
      %p231 = por %p229, %p230
      %p232 = scmp.ne.s32.totalorder %s223, %s224
      %p233 = scmp.eq.s32.totalorder %s24, 0
      %p234 = por %p232, %p233
      %p235 = scmp.ne.s32.totalorder %s223, %s224
      %p236 = scmp.eq.s32.totalorder %s25, 1
      %p237 = por %p235, %p236
      %p239 = scmp.ne.s32.totalorder %s224, %s238
      %p240 = scmp.eq.s32.totalorder %s25, 0
      %p241 = por %p239, %p240
      %s243 = sadd.s32 %s242, 1
      %p246 = scmp.eq.s32.totalorder %s19, 1
      %p247 = scmp.ne.s32.totalorder %s242, %s244
      %p248 = scmp.eq.s32.totalorder %s19, 0
      %p249 = por %p247, %p248
      %p250 = scmp.ne.s32.totalorder %s242, %s244
      %p251 = scmp.eq.s32.totalorder %s24, 1
      %p252 = por %p250, %p251
      %p253 = scmp.ne.s32.totalorder %s244, %s245
      %p254 = scmp.eq.s32.totalorder %s24, 0
      %p255 = por %p253, %p254
      %p256 = scmp.ne.s32.totalorder %s244, %s245
      %p257 = scmp.eq.s32.totalorder %s25, 1
      %p258 = por %p256, %p257
      %p260 = scmp.ne.s32.totalorder %s245, %s259
      %p261 = scmp.eq.s32.totalorder %s25, 0
      %p262 = por %p260, %p261
      %s263 = ssub.s32 %s19, %s26
      %p264 = scmp.eq.s32.totalorder %s263, 0
      %s266 = sadd.s32 %s265, 1
      %s267 = scalar_select %p264, %s265, %s266
      %p270 = pneg %p264
      %p271 = scmp.eq.s32.totalorder %s19, 1
      %p272 = por %p270, %p271
      %p273 = scmp.ne.s32.totalorder %s265, %s268
      %p274 = scmp.eq.s32.totalorder %s19, 0
      %p275 = por %p273, %p274
      %p276 = scmp.ne.s32.totalorder %s265, %s268
      %p277 = scmp.eq.s32.totalorder %s24, 1
      %p278 = por %p276, %p277
      %p279 = scmp.ne.s32.totalorder %s268, %s269
      %p280 = scmp.eq.s32.totalorder %s24, 0
      %p281 = por %p279, %p280
      %p282 = scmp.ne.s32.totalorder %s268, %s269
      %p283 = scmp.eq.s32.totalorder %s25, 1
      %p284 = por %p282, %p283
      %p286 = scmp.ne.s32.totalorder %s269, %s285
      %p287 = scmp.eq.s32.totalorder %s25, 0
      %p288 = por %p286, %p287
      %s289 = ssub.s32 %s19, %s26
      %p290 = scmp.eq.s32.totalorder %s289, 0
      %s292 = sadd.s32 %s291, 1
      %s293 = scalar_select %p290, %s291, %s292
      %p296 = pneg %p290
      %p297 = scmp.eq.s32.totalorder %s19, 1
      %p298 = por %p296, %p297
      %p299 = scmp.ne.s32.totalorder %s291, %s294
      %p300 = scmp.eq.s32.totalorder %s19, 0
      %p301 = por %p299, %p300
      %p302 = scmp.ne.s32.totalorder %s291, %s294
      %p303 = scmp.eq.s32.totalorder %s24, 1
      %p304 = por %p302, %p303
      %p305 = scmp.ne.s32.totalorder %s294, %s295
      %p306 = scmp.eq.s32.totalorder %s24, 0
      %p307 = por %p305, %p306
      %p308 = scmp.ne.s32.totalorder %s294, %s295
      %p309 = scmp.eq.s32.totalorder %s25, 1
      %p310 = por %p308, %p309
      %p312 = scmp.ne.s32.totalorder %s295, %s311
      %p313 = scmp.eq.s32.totalorder %s25, 0
      %p314 = por %p312, %p313
      %p315 = scmp.le.s32.totalorder 1, %s19
      %p316 = scmp.lt.s32.totalorder %s19, 3
      %p317 = pnand %p315, %p316
      %p318 = pneg %p317
      // Predicated region
      $region9: #{encoder_forward.1} parent=5 // pred_check
        _
      $region10: #{encoder_forward.1} parent=5 // pred_check_branch
        %320 = sbr.rel (%p317) target = $region12
      $region11: #{encoder_forward.1} parent=5 // pred_region
        %s321 = ssub.s32 %s19, 1
        // Predicated region
        $region13: #{encoder_forward.1} parent=11 // pred_check
          %p322 = pneg %p66
        $region14: #{encoder_forward.1} parent=11 // pred_check_branch
          %324 = sbr.rel (%p322) target = $region16
        $region15: #{encoder_forward.1} parent=11 // pred_region
          _
        $region16: #{encoder_forward.1} parent=11 // pred_fallthru
          _
        // Predicated region
        $region17: #{encoder_forward.1} parent=11 // pred_check
          %p325 = pneg %p87
        $region18: #{encoder_forward.1} parent=11 // pred_check_branch
          %327 = sbr.rel (%p325) target = $region20
        $region19: #{encoder_forward.1} parent=11 // pred_region
          _
        $region20: #{encoder_forward.1} parent=11 // pred_fallthru
          _
        // Predicated region
        $region21: #{encoder_forward.1} parent=11 // pred_check
          %p328 = pneg %p108
        $region22: #{encoder_forward.1} parent=11 // pred_check_branch
          %330 = sbr.rel (%p328) target = $region24
        $region23: #{encoder_forward.1} parent=11 // pred_region
          _
        $region24: #{encoder_forward.1} parent=11 // pred_fallthru
          _
        // Predicated region
        $region25: #{encoder_forward.1} parent=11 // pred_check
          %p331 = pneg %p129
        $region26: #{encoder_forward.1} parent=11 // pred_check_branch
          %333 = sbr.rel (%p331) target = $region28
        $region27: #{encoder_forward.1} parent=11 // pred_region
          _
        $region28: #{encoder_forward.1} parent=11 // pred_fallthru
          _
        // Predicated region
        $region29: #{encoder_forward.1} parent=11 // pred_check
          %p334 = pneg %p150
        $region30: #{encoder_forward.1} parent=11 // pred_check_branch
          %336 = sbr.rel (%p334) target = $region32
        $region31: #{encoder_forward.1} parent=11 // pred_region
          _
        $region32: #{encoder_forward.1} parent=11 // pred_fallthru
          _
        // Predicated region
        $region33: #{encoder_forward.1} parent=11 // pred_check
          %p337 = pneg %p171
        $region34: #{encoder_forward.1} parent=11 // pred_check_branch
          %339 = sbr.rel (%p337) target = $region36
        $region35: #{encoder_forward.1} parent=11 // pred_region
          _
        $region36: #{encoder_forward.1} parent=11 // pred_fallthru
          _
        // Predicated region
        $region37: #{encoder_forward.1} parent=11 // pred_check
          %p340 = pneg %p192
        $region38: #{encoder_forward.1} parent=11 // pred_check_branch
          %342 = sbr.rel (%p340) target = $region40
        $region39: #{encoder_forward.1} parent=11 // pred_region
          _
        $region40: #{encoder_forward.1} parent=11 // pred_fallthru
          _
        // Predicated region
        $region41: #{encoder_forward.1} parent=11 // pred_check
          %p343 = pneg %p213
        $region42: #{encoder_forward.1} parent=11 // pred_check_branch
          %345 = sbr.rel (%p343) target = $region44
        $region43: #{encoder_forward.1} parent=11 // pred_region
          _
        $region44: #{encoder_forward.1} parent=11 // pred_fallthru
          _
        // Predicated region
        $region45: #{encoder_forward.1} parent=11 // pred_check
          %p346 = pneg %p234
        $region46: #{encoder_forward.1} parent=11 // pred_check_branch
          %348 = sbr.rel (%p346) target = $region48
        $region47: #{encoder_forward.1} parent=11 // pred_region
          %s350 = ssub.s32 32768, 32768
          %351 = vsyncadd [#allocation3], %s350
          %s352 = sshll.u32 [#allocation2], 4
          %s353 = int_to_ptr.vmem [resolvable:$true] %s352
          %358 = dma.hbm_to_vmem [thread:$0]  %s9, 32768, %s353, [#allocation3], 256, 256, 16
        $region48: #{encoder_forward.1} parent=11 // pred_fallthru
          _
        // Predicated region
        $region49: #{encoder_forward.1} parent=11 // pred_check
          %p359 = pneg %p255
        $region50: #{encoder_forward.1} parent=11 // pred_check_branch
          %361 = sbr.rel (%p359) target = $region52
        $region51: #{encoder_forward.1} parent=11 // pred_region
          _
        $region52: #{encoder_forward.1} parent=11 // pred_fallthru
          _
      $region12: #{encoder_forward.1} parent=5 // pred_fallthru
        _
      %p362 = scmp.lt.s32.totalorder %s19, 2
      // Predicated region
      $region53: #{encoder_forward.1} parent=5 // pred_check
        %p363 = pneg %p362
      $region54: #{encoder_forward.1} parent=5 // pred_check_branch
        %365 = sbr.rel (%p363) target = $region56
      $region55: #{encoder_forward.1} parent=5 // pred_region
        // Predicated region
        $region57: #{encoder_forward.1} parent=55 // pred_check
          %p366 = pneg %p39
        $region58: #{encoder_forward.1} parent=55 // pred_check_branch
          %368 = sbr.rel (%p366) target = $region60
        $region59: #{encoder_forward.1} parent=55 // pred_region
          %p369 = scmp.lt.s32.totalorder %s19, 1
          %s370 = scalar_select %p369, %s19, 1
          %s371 = smul.addr %s370, 4
          %s372 = smul.addr %s371, 8
          %s373 = scalar_lea.vmem %s0, %s372
        $region60: #{encoder_forward.1} parent=55 // pred_fallthru
          _
        // Predicated region
        $region61: #{encoder_forward.1} parent=55 // pred_check
          %p374 = pneg %p275
        $region62: #{encoder_forward.1} parent=55 // pred_check_branch
          %376 = sbr.rel (%p374) target = $region64
        $region63: #{encoder_forward.1} parent=55 // pred_region
          %p377 = scmp.lt.s32.totalorder %s19, 1
          %s378 = scalar_select %p377, %s19, 1
          %s379 = smul.addr %s378, 2
          %s380 = scalar_lea.vmem %s11, %s379
        $region64: #{encoder_forward.1} parent=55 // pred_fallthru
          _
      $region56: #{encoder_forward.1} parent=5 // pred_fallthru
        _
      %p381 = scmp.le.s32.totalorder 1, %s19
      %p382 = scmp.lt.s32.totalorder %s19, 3
      %p383 = pnand %p381, %p382
      %p384 = pneg %p383
      // Predicated region
      $region65: #{encoder_forward.1} parent=5 // pred_check
        _
      $region66: #{encoder_forward.1} parent=5 // pred_check_branch
        %386 = sbr.rel (%p383) target = $region68
      $region67: #{encoder_forward.1} parent=5 // pred_region
        %s387 = ssub.s32 %s19, 1
        // Predicated region
        $region69: #{encoder_forward.1} parent=67 // pred_check
          %p388 = pneg %p234
        $region70: #{encoder_forward.1} parent=67 // pred_check_branch
          %390 = sbr.rel (%p388) target = $region72
        $region71: #{encoder_forward.1} parent=67 // pred_region
          %391 = dma.done [#allocation3], 32768
        $region72: #{encoder_forward.1} parent=67 // pred_fallthru
          _
        %p392 = scmp.lt.s32.totalorder %s24, 1
        %s393 = scalar_select %p392, %s24, 1
        %s394 = smul.addr %s393, 4
        %s395 = smul.addr %s394, 8
        %s396 = scalar_lea.vmem %s0, %s395
        %p397 = pneg %p45
        %p398 = pneg %p42
        %p399 = pneg %p66
        %p400 = pneg %p63
        %p401 = pneg %p87
        %p402 = pneg %p84
        %p403 = pneg %p108
        %p404 = pneg %p105
        %p405 = pneg %p129
        %p406 = pneg %p126
        %p407 = pneg %p150
        %p408 = pneg %p147
        %p409 = pneg %p171
        %p410 = pneg %p168
        %p411 = pneg %p192
        %p412 = pneg %p189
        %p413 = pneg %p213
        %p414 = pneg %p210
        %p415 = pneg %p234
        %p416 = pneg %p231
        %p417 = pneg %p255
        %p418 = pneg %p252
        %p419 = scmp.lt.s32.totalorder %s24, 1
        %s420 = scalar_select %p419, %s24, 1
        %s421 = smul.addr %s420, 2
        %s422 = scalar_lea.vmem %s11, %s421
        %p423 = pneg %p281
        %p424 = pneg %p278
        %p425 = pneg %p307
        %p426 = pneg %p304
        %p427 = scmp.lt.s32.totalorder %s24, 1
        %s428 = scalar_select %p427, %s24, 1
        %s429 = smul.addr %s428, 2
        %s430 = scalar_lea.vmem %s12, %s429
        %p431 = scmp.lt.s32.totalorder %s24, 1
        %s432 = scalar_select %p431, %s24, 1
        %s433 = smul.addr %s432, 4
        %s434 = smul.addr %s433, 8
        %s435 = scalar_lea.vmem %s0, %s434
        %p436 = scmp.lt.s32.totalorder %s24, 1
        %s437 = scalar_select %p436, %s24, 1
        %s438 = smul.addr %s437, 2
        %s439 = scalar_lea.vmem %s11, %s438
        %p440 = scmp.lt.s32.totalorder %s24, 1
        %s441 = scalar_select %p440, %s24, 1
        %s442 = smul.addr %s441, 2
        %s443 = scalar_lea.vmem %s12, %s442
        %v445 = vld [vmem:[%s435] sm:$0xff]
        %v446 = vld [vmem:[%s435 + $0x8] sm:$0xff]
        %v447 = vld [vmem:[%s435 + $0x10] sm:$0xff]
        %v448 = vld [vmem:[%s435 + $0x18] sm:$0xff]
        %v449 = vpack.c.bf16 %v446, %v445
        %v450 = vpack.c.bf16 %v448, %v447
        %v451 = vld [vmem:[%s1] sm:$0xf]
        %v452 = vld [vmem:[%s1 + $0x4] sm:$0xf]
        %v455 = vunpack.c.l.b16 %v451
        %v456 = vunpack.c.l.b16 %v452
        %v457 = vpack.c.b16 %v456, %v455
        %vm458 = vcmask 261120
        %v460 = vsel %vm458, %v457, 0
        %462 = vmatprep.subr.bf16.mxu0 0
        %463 = vmatpush1.bf16.msra.mxu0 %v449
        %464 = vmatprep.subr.bf16.mxu0 0
        %465 = vmatpush1.bf16.msra.mxu0 %v450
        %466 = vmatprep.subr.bf16.mxu0 0
        %467 = vmatpush1.bf16.msra.mxu0 0
        %468 = vmatprep.subr.bf16.mxu0 0
        %469 = vmatpush1.bf16.msra.mxu0 0
        %470 = vmatprep.subr.bf16.mxu0 0
        %471 = vmatpush1.bf16.msra.mxu0 0
        %472 = vmatprep.subr.bf16.mxu0 0
        %473 = vmatpush1.bf16.msra.mxu0 0
        %474 = vmatprep.subr.bf16.mxu0 0
        %475 = vmatpush1.bf16.msra.mxu0 0
        %476 = vmatprep.subr.bf16.mxu0 0
        %477 = vmatpush1.bf16.msra.mxu0 0
        %478 = vmatprep.subr.bf16.mxu0 0
        %479 = vmatpush1.bf16.msra.mxu0 0
        %480 = vmatprep.subr.bf16.mxu0 0
        %481 = vmatpush1.bf16.msra.mxu0 0
        %482 = vmatprep.subr.bf16.mxu0 0
        %483 = vmatpush1.bf16.msra.mxu0 0
        %484 = vmatprep.subr.bf16.mxu0 0
        %485 = vmatpush1.bf16.msra.mxu0 0
        %486 = vmatprep.subr.bf16.mxu0 0
        %487 = vmatpush1.bf16.msra.mxu0 0
        %488 = vmatprep.subr.bf16.mxu0 0
        %489 = vmatpush1.bf16.msra.mxu0 0
        %490 = vmatprep.subr.bf16.mxu0 0
        %491 = vmatpush1.bf16.msra.mxu0 0
        %492 = vmatprep.subr.bf16.mxu0 0
        %493 = vmatpush1.bf16.msra.mxu0 0
        %494 = vmatprep.mubr.bf16.mxu0 0
        %495 = vmatmul.mubr.bf16.gmra.mrb[0].mxu0 %v460
        %v496 = vpop.f32.mrb[0].mxu0
        %v497 = vadd.f32 0.0, %v496
        %v498 = vpop.f32.mrb[0].mxu0
        %v499 = vpop.f32.mrb[0].mxu0
        %v500 = vadd.f32 0.0, %v499
        %v501 = vpop.f32.mrb[0].mxu0
        %502 = vdwg.mxu0
        %v503 = vpack.c.bf16 %v500, %v497
        %v504 = vld [vmem:[%s2] sm:$0xf]
        %v505 = vld [vmem:[%s2 + $0x4] sm:$0xf]
        %v506 = vld [vmem:[%s2 + $0x8] sm:$0xf]
        %v507 = vld [vmem:[%s2 + $0xc] sm:$0xf]
        %v508 = vld [vmem:[%s2 + $0x10] sm:$0xf]
        %v509 = vld [vmem:[%s2 + $0x14] sm:$0xf]
        %v510 = vld [vmem:[%s2 + $0x18] sm:$0xf]
        %v511 = vld [vmem:[%s2 + $0x1c] sm:$0xf]
        %v512 = vld [vmem:[%s2 + $0x20] sm:$0xf]
        %v513 = vld [vmem:[%s2 + $0x24] sm:$0xf]
        %v514 = vld [vmem:[%s2 + $0x28] sm:$0xf]
        %v515 = vld [vmem:[%s2 + $0x2c] sm:$0xf]
        %s516 = scalar_lea.vmem %s1, 8
        %v517 = vld [vmem:[%s516] sm:$0xf]
        %v518 = vld [vmem:[%s516 + $0x4] sm:$0xf]
        %v521 = vunpack.c.l.b16 %v517
        %v522 = vunpack.c.l.b16 %v518
        %v523 = vpack.c.b16 %v522, %v521
        %v525 = vsel %vm458, %v523, 0
        %527 = vmatprep.subr.bf16.mxu0 0
        %528 = vmatpush1.bf16.msra.mxu0 %v449
        %529 = vmatprep.subr.bf16.mxu0 0
        %530 = vmatpush1.bf16.msra.mxu0 %v450
        %531 = vmatprep.subr.bf16.mxu0 0
        %532 = vmatpush1.bf16.msra.mxu0 0
        %533 = vmatprep.subr.bf16.mxu0 0
        %534 = vmatpush1.bf16.msra.mxu0 0
        %535 = vmatprep.subr.bf16.mxu0 0
        %536 = vmatpush1.bf16.msra.mxu0 0
        %537 = vmatprep.subr.bf16.mxu0 0
        %538 = vmatpush1.bf16.msra.mxu0 0
        %539 = vmatprep.subr.bf16.mxu0 0
        %540 = vmatpush1.bf16.msra.mxu0 0
        %541 = vmatprep.subr.bf16.mxu0 0
        %542 = vmatpush1.bf16.msra.mxu0 0
        %543 = vmatprep.subr.bf16.mxu0 0
        %544 = vmatpush1.bf16.msra.mxu0 0
        %545 = vmatprep.subr.bf16.mxu0 0
        %546 = vmatpush1.bf16.msra.mxu0 0
        %547 = vmatprep.subr.bf16.mxu0 0
        %548 = vmatpush1.bf16.msra.mxu0 0
        %549 = vmatprep.subr.bf16.mxu0 0
        %550 = vmatpush1.bf16.msra.mxu0 0
        %551 = vmatprep.subr.bf16.mxu0 0
        %552 = vmatpush1.bf16.msra.mxu0 0
        %553 = vmatprep.subr.bf16.mxu0 0
        %554 = vmatpush1.bf16.msra.mxu0 0
        %555 = vmatprep.subr.bf16.mxu0 0
        %556 = vmatpush1.bf16.msra.mxu0 0
        %557 = vmatprep.subr.bf16.mxu0 0
        %558 = vmatpush1.bf16.msra.mxu0 0
        %559 = vmatprep.mubr.bf16.mxu0 0
        %560 = vmatmul.mubr.bf16.gmra.mrb[0].mxu0 %v525
        %v561 = vpop.f32.mrb[0].mxu0
        %v562 = vadd.f32 0.0, %v561
        %v563 = vpop.f32.mrb[0].mxu0
        %v564 = vpop.f32.mrb[0].mxu0
        %v565 = vadd.f32 0.0, %v564
        %v566 = vpop.f32.mrb[0].mxu0
        %567 = vdwg.mxu0
        %v568 = vpack.c.bf16 %v565, %v562
        %s569 = scalar_lea.vmem %s2, 48
        %v570 = vld [vmem:[%s569] sm:$0xf]
        %v571 = vld [vmem:[%s569 + $0x4] sm:$0xf]
        %v572 = vld [vmem:[%s569 + $0x8] sm:$0xf]
        %v573 = vld [vmem:[%s569 + $0xc] sm:$0xf]
        %v574 = vld [vmem:[%s569 + $0x10] sm:$0xf]
        %v575 = vld [vmem:[%s569 + $0x14] sm:$0xf]
        %v576 = vld [vmem:[%s569 + $0x18] sm:$0xf]
        %v577 = vld [vmem:[%s569 + $0x1c] sm:$0xf]
        %v578 = vld [vmem:[%s569 + $0x20] sm:$0xf]
        %v579 = vld [vmem:[%s569 + $0x24] sm:$0xf]
        %v580 = vld [vmem:[%s569 + $0x28] sm:$0xf]
        %v581 = vld [vmem:[%s569 + $0x2c] sm:$0xf]
        %v594 = vunpack.c.l.b16 %v570
        %v595 = vunpack.c.l.b16 %v571
        %v596 = vunpack.c.l.b16 %v572
        %v597 = vunpack.c.l.b16 %v573
        %v598 = vunpack.c.l.b16 %v574
        %v599 = vunpack.c.l.b16 %v575
        %v600 = vunpack.c.l.b16 %v576
        %v601 = vunpack.c.l.b16 %v577
        %v602 = vunpack.c.l.b16 %v578
        %v603 = vunpack.c.l.b16 %v579
        %v604 = vunpack.c.l.b16 %v580
        %v605 = vunpack.c.l.b16 %v581
        %v606 = vpack.c.b16 %v595, %v594
        %v607 = vpack.c.b16 %v597, %v596
        %v608 = vpack.c.b16 %v599, %v598
        %v609 = vpack.c.b16 %v601, %v600
        %v610 = vpack.c.b16 %v603, %v602
        %v611 = vpack.c.b16 %v605, %v604
        %vm618 = vcmask 785408
        %v620 = vsel %vm618, %v568, 0
        %622 = vmatprep.subr.bf16.mxu0 0
        %623 = vmatpush1.bf16.msra.mxu0 %v606
        %624 = vmatprep.subr.bf16.mxu0 0
        %625 = vmatpush1.bf16.msra.mxu0 %v607
        %626 = vmatprep.subr.bf16.mxu0 0
        %627 = vmatpush1.bf16.msra.mxu0 %v608
        %628 = vmatprep.subr.bf16.mxu0 0
        %629 = vmatpush1.bf16.msra.mxu0 %v609
        %630 = vmatprep.subr.bf16.mxu0 0
        %631 = vmatpush1.bf16.msra.mxu0 %v610
        %632 = vmatprep.subr.bf16.mxu0 0
        %633 = vmatpush1.bf16.msra.mxu0 %v611
        %634 = vmatprep.subr.bf16.mxu0 0
        %635 = vmatpush1.bf16.msra.mxu0 0
        %636 = vmatprep.subr.bf16.mxu0 0
        %637 = vmatpush1.bf16.msra.mxu0 0
        %638 = vmatprep.subr.bf16.mxu0 0
        %639 = vmatpush1.bf16.msra.mxu0 0
        %640 = vmatprep.subr.bf16.mxu0 0
        %641 = vmatpush1.bf16.msra.mxu0 0
        %642 = vmatprep.subr.bf16.mxu0 0
        %643 = vmatpush1.bf16.msra.mxu0 0
        %644 = vmatprep.subr.bf16.mxu0 0
        %645 = vmatpush1.bf16.msra.mxu0 0
        %646 = vmatprep.subr.bf16.mxu0 0
        %647 = vmatpush1.bf16.msra.mxu0 0
        %648 = vmatprep.subr.bf16.mxu0 0
        %649 = vmatpush1.bf16.msra.mxu0 0
        %650 = vmatprep.subr.bf16.mxu0 0
        %651 = vmatpush1.bf16.msra.mxu0 0
        %652 = vmatprep.subr.bf16.mxu0 0
        %653 = vmatpush1.bf16.msra.mxu0 0
        %654 = vmatprep.mubr.bf16.mxu0 0
        %655 = vmatmul.mubr.bf16.gmra.mrb[0].mxu0 %v620
        %v656 = vpop.f32.mrb[0].mxu0
        %v657 = vadd.f32 0.0, %v656
        %v658 = vpop.f32.mrb[0].mxu0
        %v659 = vpop.f32.mrb[0].mxu0
        %v660 = vadd.f32 0.0, %v659
        %v661 = vpop.f32.mrb[0].mxu0
        %662 = vdwg.mxu0
        %v675 = vunpack.c.l.b16 %v504
        %v676 = vunpack.c.l.b16 %v505
        %v677 = vunpack.c.l.b16 %v506
        %v678 = vunpack.c.l.b16 %v507
        %v679 = vunpack.c.l.b16 %v508
        %v680 = vunpack.c.l.b16 %v509
        %v681 = vunpack.c.l.b16 %v510
        %v682 = vunpack.c.l.b16 %v511
        %v683 = vunpack.c.l.b16 %v512
        %v684 = vunpack.c.l.b16 %v513
        %v685 = vunpack.c.l.b16 %v514
        %v686 = vunpack.c.l.b16 %v515
        %v687 = vpack.c.b16 %v676, %v675
        %v688 = vpack.c.b16 %v678, %v677
        %v689 = vpack.c.b16 %v680, %v679
        %v690 = vpack.c.b16 %v682, %v681
        %v691 = vpack.c.b16 %v684, %v683
        %v692 = vpack.c.b16 %v686, %v685
        %v700 = vsel %vm618, %v503, 0
        %702 = vmatprep.subr.bf16.mxu0 0
        %703 = vmatpush1.bf16.msra.mxu0 %v687
        %704 = vmatprep.subr.bf16.mxu0 0
        %705 = vmatpush1.bf16.msra.mxu0 %v688
        %706 = vmatprep.subr.bf16.mxu0 0
        %707 = vmatpush1.bf16.msra.mxu0 %v689
        %708 = vmatprep.subr.bf16.mxu0 0
        %709 = vmatpush1.bf16.msra.mxu0 %v690
        %710 = vmatprep.subr.bf16.mxu0 0
        %711 = vmatpush1.bf16.msra.mxu0 %v691
        %712 = vmatprep.subr.bf16.mxu0 0
        %713 = vmatpush1.bf16.msra.mxu0 %v692
        %714 = vmatprep.subr.bf16.mxu0 0
        %715 = vmatpush1.bf16.msra.mxu0 0
        %716 = vmatprep.subr.bf16.mxu0 0
        %717 = vmatpush1.bf16.msra.mxu0 0
        %718 = vmatprep.subr.bf16.mxu0 0
        %719 = vmatpush1.bf16.msra.mxu0 0
        %720 = vmatprep.subr.bf16.mxu0 0
        %721 = vmatpush1.bf16.msra.mxu0 0
        %722 = vmatprep.subr.bf16.mxu0 0
        %723 = vmatpush1.bf16.msra.mxu0 0
        %724 = vmatprep.subr.bf16.mxu0 0
        %725 = vmatpush1.bf16.msra.mxu0 0
        %726 = vmatprep.subr.bf16.mxu0 0
        %727 = vmatpush1.bf16.msra.mxu0 0
        %728 = vmatprep.subr.bf16.mxu0 0
        %729 = vmatpush1.bf16.msra.mxu0 0
        %730 = vmatprep.subr.bf16.mxu0 0
        %731 = vmatpush1.bf16.msra.mxu0 0
        %732 = vmatprep.subr.bf16.mxu0 0
        %733 = vmatpush1.bf16.msra.mxu0 0
        %734 = vmatprep.mubr.bf16.mxu0 0
        %735 = vmatmul.mubr.bf16.gmra.mrb[0].mxu0 %v700
        %v736 = vpop.f32.mrb[0].mxu0
        %v737 = vadd.f32 %v657, %v736
        %v738 = vpop.f32.mrb[0].mxu0
        %v739 = vpop.f32.mrb[0].mxu0
        %v740 = vadd.f32 %v660, %v739
        %v741 = vpop.f32.mrb[0].mxu0
        %742 = vdwg.mxu0
        %s743 = scalar_lea.vmem %s1, 16
        %v744 = vld [vmem:[%s743] sm:$0xf]
        %v745 = vld [vmem:[%s743 + $0x4] sm:$0xf]
        %v748 = vunpack.c.l.b16 %v744
        %v749 = vunpack.c.l.b16 %v745
        %v750 = vpack.c.b16 %v749, %v748
        %v752 = vsel %vm458, %v750, 0
        %754 = vmatprep.subr.bf16.mxu0 0
        %755 = vmatpush1.bf16.msra.mxu0 %v449
        %756 = vmatprep.subr.bf16.mxu0 0
        %757 = vmatpush1.bf16.msra.mxu0 %v450
        %758 = vmatprep.subr.bf16.mxu0 0
        %759 = vmatpush1.bf16.msra.mxu0 0
        %760 = vmatprep.subr.bf16.mxu0 0
        %761 = vmatpush1.bf16.msra.mxu0 0
        %762 = vmatprep.subr.bf16.mxu0 0
        %763 = vmatpush1.bf16.msra.mxu0 0
        %764 = vmatprep.subr.bf16.mxu0 0
        %765 = vmatpush1.bf16.msra.mxu0 0
        %766 = vmatprep.subr.bf16.mxu0 0
        %767 = vmatpush1.bf16.msra.mxu0 0
        %768 = vmatprep.subr.bf16.mxu0 0
        %769 = vmatpush1.bf16.msra.mxu0 0
        %770 = vmatprep.subr.bf16.mxu0 0
        %771 = vmatpush1.bf16.msra.mxu0 0
        %772 = vmatprep.subr.bf16.mxu0 0
        %773 = vmatpush1.bf16.msra.mxu0 0
        %774 = vmatprep.subr.bf16.mxu0 0
        %775 = vmatpush1.bf16.msra.mxu0 0
        %776 = vmatprep.subr.bf16.mxu0 0
        %777 = vmatpush1.bf16.msra.mxu0 0
        %778 = vmatprep.subr.bf16.mxu0 0
        %779 = vmatpush1.bf16.msra.mxu0 0
        %780 = vmatprep.subr.bf16.mxu0 0
        %781 = vmatpush1.bf16.msra.mxu0 0
        %782 = vmatprep.subr.bf16.mxu0 0
        %783 = vmatpush1.bf16.msra.mxu0 0
        %784 = vmatprep.subr.bf16.mxu0 0
        %785 = vmatpush1.bf16.msra.mxu0 0
        %786 = vmatprep.mubr.bf16.mxu0 0
        %787 = vmatmul.mubr.bf16.gmra.mrb[0].mxu0 %v752
        %v788 = vpop.f32.mrb[0].mxu0
        %v789 = vadd.f32 0.0, %v788
        %v790 = vpop.f32.mrb[0].mxu0
        %v791 = vpop.f32.mrb[0].mxu0
        %v792 = vadd.f32 0.0, %v791
        %v793 = vpop.f32.mrb[0].mxu0
        %794 = vdwg.mxu0
        %v795 = vpack.c.bf16 %v792, %v789
        %s796 = scalar_lea.vmem %s2, 96
        %v797 = vld [vmem:[%s796] sm:$0xf]
        %v798 = vld [vmem:[%s796 + $0x4] sm:$0xf]
        %v799 = vld [vmem:[%s796 + $0x8] sm:$0xf]
        %v800 = vld [vmem:[%s796 + $0xc] sm:$0xf]
        %v801 = vld [vmem:[%s796 + $0x10] sm:$0xf]
        %v802 = vld [vmem:[%s796 + $0x14] sm:$0xf]
        %v803 = vld [vmem:[%s796 + $0x18] sm:$0xf]
        %v804 = vld [vmem:[%s796 + $0x1c] sm:$0xf]
        %v805 = vld [vmem:[%s796 + $0x20] sm:$0xf]
        %v806 = vld [vmem:[%s796 + $0x24] sm:$0xf]
        %v807 = vld [vmem:[%s796 + $0x28] sm:$0xf]
        %v808 = vld [vmem:[%s796 + $0x2c] sm:$0xf]
        %v821 = vunpack.c.l.b16 %v797
        %v822 = vunpack.c.l.b16 %v798
        %v823 = vunpack.c.l.b16 %v799
        %v824 = vunpack.c.l.b16 %v800
        %v825 = vunpack.c.l.b16 %v801
        %v826 = vunpack.c.l.b16 %v802
        %v827 = vunpack.c.l.b16 %v803
        %v828 = vunpack.c.l.b16 %v804
        %v829 = vunpack.c.l.b16 %v805
        %v830 = vunpack.c.l.b16 %v806
        %v831 = vunpack.c.l.b16 %v807
        %v832 = vunpack.c.l.b16 %v808
        %v833 = vpack.c.b16 %v822, %v821
        %v834 = vpack.c.b16 %v824, %v823
        %v835 = vpack.c.b16 %v826, %v825
        %v836 = vpack.c.b16 %v828, %v827
        %v837 = vpack.c.b16 %v830, %v829
        %v838 = vpack.c.b16 %v832, %v831
        %v846 = vsel %vm618, %v795, 0
        %848 = vmatprep.subr.bf16.mxu0 0
        %849 = vmatpush1.bf16.msra.mxu0 %v833
        %850 = vmatprep.subr.bf16.mxu0 0
        %851 = vmatpush1.bf16.msra.mxu0 %v834
        %852 = vmatprep.subr.bf16.mxu0 0
        %853 = vmatpush1.bf16.msra.mxu0 %v835
        %854 = vmatprep.subr.bf16.mxu0 0
        %855 = vmatpush1.bf16.msra.mxu0 %v836
        %856 = vmatprep.subr.bf16.mxu0 0
        %857 = vmatpush1.bf16.msra.mxu0 %v837
        %858 = vmatprep.subr.bf16.mxu0 0
        %859 = vmatpush1.bf16.msra.mxu0 %v838
        %860 = vmatprep.subr.bf16.mxu0 0
        %861 = vmatpush1.bf16.msra.mxu0 0
        %862 = vmatprep.subr.bf16.mxu0 0
        %863 = vmatpush1.bf16.msra.mxu0 0
        %864 = vmatprep.subr.bf16.mxu0 0
        %865 = vmatpush1.bf16.msra.mxu0 0
        %866 = vmatprep.subr.bf16.mxu0 0
        %867 = vmatpush1.bf16.msra.mxu0 0
        %868 = vmatprep.subr.bf16.mxu0 0
        %869 = vmatpush1.bf16.msra.mxu0 0
        %870 = vmatprep.subr.bf16.mxu0 0
        %871 = vmatpush1.bf16.msra.mxu0 0
        %872 = vmatprep.subr.bf16.mxu0 0
        %873 = vmatpush1.bf16.msra.mxu0 0
        %874 = vmatprep.subr.bf16.mxu0 0
        %875 = vmatpush1.bf16.msra.mxu0 0
        %876 = vmatprep.subr.bf16.mxu0 0
        %877 = vmatpush1.bf16.msra.mxu0 0
        %878 = vmatprep.subr.bf16.mxu0 0
        %879 = vmatpush1.bf16.msra.mxu0 0
        %880 = vmatprep.mubr.bf16.mxu0 0
        %881 = vmatmul.mubr.bf16.gmra.mrb[0].mxu0 %v846
        %v882 = vpop.f32.mrb[0].mxu0
        %v883 = vadd.f32 0.0, %v882
        %v884 = vpop.f32.mrb[0].mxu0
        %v885 = vpop.f32.mrb[0].mxu0
        %v886 = vadd.f32 0.0, %v885
        %v887 = vpop.f32.mrb[0].mxu0
        %888 = vdwg.mxu0
        %v889 = vadd.f32 %v737, %v883
        %v890 = vadd.f32 %v740, %v886
        %v891 = vld [vmem:[%s3] sm:$0x1]
        %v893 = vlaneseq
        %v894 = vshrl.u32 %v893, 7
        %v895 = vsub.s32 0, %v894
        %v896 = vrot.slane %v891, %v895
        %v898 = vmul.f32 %v889, %v896
        %v899 = vmul.f32 %v890, %v896
        %v900 = vld [vmem:[%s4] sm:$0x1]
        %v902 = vlaneseq
        %v903 = vshrl.u32 %v902, 7
        %v904 = vsub.s32 0, %v903
        %v905 = vrot.slane %v900, %v904
        %v907 = vadd.f32 %v898, %v905
        %v908 = vadd.f32 %v899, %v905
        %vm909 = vcmp.gt.f32.partialorder %v907, 0.0
        %vm910 = vcmp.gt.f32.partialorder %v908, 0.0
        %v911 = vmul.f32 %v907, 0.01
        %v912 = vmul.f32 %v908, 0.01
        %v913 = vsel %vm909, %v907, %v911
        %v914 = vsel %vm910, %v908, %v912
        %v915 = vpack.c.bf16 %v914, %v913
        %v916 = vld [vmem:[%s5] sm:$0xf]
        %vm917 = vcmask 130048
        %v919 = vsel %vm917, %v916, 0
        %921 = vmatprep.subr.bf16.mxu0 0
        %922 = vmatpush1.bf16.msra.mxu0 %v915
        %923 = vmatprep.subr.bf16.mxu0 0
        %924 = vmatpush1.bf16.msra.mxu0 0
        %925 = vmatprep.subr.bf16.mxu0 0
        %926 = vmatpush1.bf16.msra.mxu0 0
        %927 = vmatprep.subr.bf16.mxu0 0
        %928 = vmatpush1.bf16.msra.mxu0 0
        %929 = vmatprep.subr.bf16.mxu0 0
        %930 = vmatpush1.bf16.msra.mxu0 0
        %931 = vmatprep.subr.bf16.mxu0 0
        %932 = vmatpush1.bf16.msra.mxu0 0
        %933 = vmatprep.subr.bf16.mxu0 0
        %934 = vmatpush1.bf16.msra.mxu0 0
        %935 = vmatprep.subr.bf16.mxu0 0
        %936 = vmatpush1.bf16.msra.mxu0 0
        %937 = vmatprep.subr.bf16.mxu0 0
        %938 = vmatpush1.bf16.msra.mxu0 0
        %939 = vmatprep.subr.bf16.mxu0 0
        %940 = vmatpush1.bf16.msra.mxu0 0
        %941 = vmatprep.subr.bf16.mxu0 0
        %942 = vmatpush1.bf16.msra.mxu0 0
        %943 = vmatprep.subr.bf16.mxu0 0
        %944 = vmatpush1.bf16.msra.mxu0 0
        %945 = vmatprep.subr.bf16.mxu0 0
        %946 = vmatpush1.bf16.msra.mxu0 0
        %947 = vmatprep.subr.bf16.mxu0 0
        %948 = vmatpush1.bf16.msra.mxu0 0
        %949 = vmatprep.subr.bf16.mxu0 0
        %950 = vmatpush1.bf16.msra.mxu0 0
        %951 = vmatprep.subr.bf16.mxu0 0
        %952 = vmatpush1.bf16.msra.mxu0 0
        %953 = vmatprep.mubr.bf16.mxu0 0
        %954 = vmatmul.mubr.bf16.gmra.mrb[0].mxu0 %v919
        %v955 = vpop.f32.mrb[0].mxu0
        %v956 = vadd.f32 0.0, %v955
        %v957 = vpop.f32.mrb[0].mxu0
        %v958 = vpop.f32.mrb[0].mxu0
        %v959 = vpop.f32.mrb[0].mxu0
        %960 = vdwg.mxu0
        %v961 = vpack.c.bf16 %v956, %v956
        %v962 = vld [vmem:[%s6] sm:$0xf]
        %v963 = vld [vmem:[%s6 + $0x4] sm:$0xf]
        %v964 = vld [vmem:[%s6 + $0x8] sm:$0xf]
        %v965 = vld [vmem:[%s6 + $0xc] sm:$0xf]
        %v966 = vld [vmem:[%s6 + $0x10] sm:$0xf]
        %v967 = vld [vmem:[%s6 + $0x14] sm:$0xf]
        %v968 = vld [vmem:[%s6 + $0x18] sm:$0xf]
        %v969 = vld [vmem:[%s6 + $0x1c] sm:$0xf]
        %v970 = vld [vmem:[%s6 + $0x20] sm:$0xf]
        %v971 = vld [vmem:[%s6 + $0x24] sm:$0xf]
        %v972 = vld [vmem:[%s6 + $0x28] sm:$0xf]
        %v973 = vld [vmem:[%s6 + $0x2c] sm:$0xf]
        %v974 = vld [vmem:[%s6 + $0x30] sm:$0xf]
        %v975 = vld [vmem:[%s6 + $0x34] sm:$0xf]
        %v976 = vld [vmem:[%s6 + $0x38] sm:$0xf]
        %v977 = vld [vmem:[%s6 + $0x3c] sm:$0xf]
        %s978 = scalar_lea.vmem %s5, 4
        %v979 = vld [vmem:[%s978] sm:$0xf]
        %v981 = vsel %vm917, %v979, 0
        %983 = vmatprep.subr.bf16.mxu0 0
        %984 = vmatpush1.bf16.msra.mxu0 %v915
        %985 = vmatprep.subr.bf16.mxu0 0
        %986 = vmatpush1.bf16.msra.mxu0 0
        %987 = vmatprep.subr.bf16.mxu0 0
        %988 = vmatpush1.bf16.msra.mxu0 0
        %989 = vmatprep.subr.bf16.mxu0 0
        %990 = vmatpush1.bf16.msra.mxu0 0
        %991 = vmatprep.subr.bf16.mxu0 0
        %992 = vmatpush1.bf16.msra.mxu0 0
        %993 = vmatprep.subr.bf16.mxu0 0
        %994 = vmatpush1.bf16.msra.mxu0 0
        %995 = vmatprep.subr.bf16.mxu0 0
        %996 = vmatpush1.bf16.msra.mxu0 0
        %997 = vmatprep.subr.bf16.mxu0 0
        %998 = vmatpush1.bf16.msra.mxu0 0
        %999 = vmatprep.subr.bf16.mxu0 0
        %1000 = vmatpush1.bf16.msra.mxu0 0
        %1001 = vmatprep.subr.bf16.mxu0 0
        %1002 = vmatpush1.bf16.msra.mxu0 0
        %1003 = vmatprep.subr.bf16.mxu0 0
        %1004 = vmatpush1.bf16.msra.mxu0 0
        %1005 = vmatprep.subr.bf16.mxu0 0
        %1006 = vmatpush1.bf16.msra.mxu0 0
        %1007 = vmatprep.subr.bf16.mxu0 0
        %1008 = vmatpush1.bf16.msra.mxu0 0
        %1009 = vmatprep.subr.bf16.mxu0 0
        %1010 = vmatpush1.bf16.msra.mxu0 0
        %1011 = vmatprep.subr.bf16.mxu0 0
        %1012 = vmatpush1.bf16.msra.mxu0 0
        %1013 = vmatprep.subr.bf16.mxu0 0
        %1014 = vmatpush1.bf16.msra.mxu0 0
        %1015 = vmatprep.mubr.bf16.mxu0 0
        %1016 = vmatmul.mubr.bf16.gmra.mrb[0].mxu0 %v981
        %v1017 = vpop.f32.mrb[0].mxu0
        %v1018 = vadd.f32 0.0, %v1017
        %v1019 = vpop.f32.mrb[0].mxu0
        %v1020 = vpop.f32.mrb[0].mxu0
        %v1021 = vpop.f32.mrb[0].mxu0
        %1022 = vdwg.mxu0
        %v1023 = vpack.c.bf16 %v1018, %v1018
        %s1024 = scalar_lea.vmem %s6, 64
        %v1025 = vld [vmem:[%s1024] sm:$0xf]
        %v1026 = vld [vmem:[%s1024 + $0x4] sm:$0xf]
        %v1027 = vld [vmem:[%s1024 + $0x8] sm:$0xf]
        %v1028 = vld [vmem:[%s1024 + $0xc] sm:$0xf]
        %v1029 = vld [vmem:[%s1024 + $0x10] sm:$0xf]
        %v1030 = vld [vmem:[%s1024 + $0x14] sm:$0xf]
        %v1031 = vld [vmem:[%s1024 + $0x18] sm:$0xf]
        %v1032 = vld [vmem:[%s1024 + $0x1c] sm:$0xf]
        %v1033 = vld [vmem:[%s1024 + $0x20] sm:$0xf]
        %v1034 = vld [vmem:[%s1024 + $0x24] sm:$0xf]
        %v1035 = vld [vmem:[%s1024 + $0x28] sm:$0xf]
        %v1036 = vld [vmem:[%s1024 + $0x2c] sm:$0xf]
        %v1037 = vld [vmem:[%s1024 + $0x30] sm:$0xf]
        %v1038 = vld [vmem:[%s1024 + $0x34] sm:$0xf]
        %v1039 = vld [vmem:[%s1024 + $0x38] sm:$0xf]
        %v1040 = vld [vmem:[%s1024 + $0x3c] sm:$0xf]
        %v1057 = vunpack.c.l.b16 %v1025
        %v1058 = vunpack.c.l.b16 %v1026
        %v1059 = vunpack.c.l.b16 %v1027
        %v1060 = vunpack.c.l.b16 %v1028
        %v1061 = vunpack.c.l.b16 %v1029
        %v1062 = vunpack.c.l.b16 %v1030
        %v1063 = vunpack.c.l.b16 %v1031
        %v1064 = vunpack.c.l.b16 %v1032
        %v1065 = vunpack.c.l.b16 %v1033
        %v1066 = vunpack.c.l.b16 %v1034
        %v1067 = vunpack.c.l.b16 %v1035
        %v1068 = vunpack.c.l.b16 %v1036
        %v1069 = vunpack.c.l.b16 %v1037
        %v1070 = vunpack.c.l.b16 %v1038
        %v1071 = vunpack.c.l.b16 %v1039
        %v1072 = vunpack.c.l.b16 %v1040
        %v1073 = vpack.c.b16 %v1058, %v1057
        %v1074 = vpack.c.b16 %v1060, %v1059
        %v1075 = vpack.c.b16 %v1062, %v1061
        %v1076 = vpack.c.b16 %v1064, %v1063
        %v1077 = vpack.c.b16 %v1066, %v1065
        %v1078 = vpack.c.b16 %v1068, %v1067
        %v1079 = vpack.c.b16 %v1070, %v1069
        %v1080 = vpack.c.b16 %v1072, %v1071
        %1089 = vmatprep.subr.bf16.mxu0 0
        %1090 = vmatpush1.bf16.msra.mxu0 %v1073
        %1091 = vmatprep.subr.bf16.mxu0 0
        %1092 = vmatpush1.bf16.msra.mxu0 %v1074
        %1093 = vmatprep.subr.bf16.mxu0 0
        %1094 = vmatpush1.bf16.msra.mxu0 %v1075
        %1095 = vmatprep.subr.bf16.mxu0 0
        %1096 = vmatpush1.bf16.msra.mxu0 %v1076
        %1097 = vmatprep.subr.bf16.mxu0 0
        %1098 = vmatpush1.bf16.msra.mxu0 %v1077
        %1099 = vmatprep.subr.bf16.mxu0 0
        %1100 = vmatpush1.bf16.msra.mxu0 %v1078
        %1101 = vmatprep.subr.bf16.mxu0 0
        %1102 = vmatpush1.bf16.msra.mxu0 %v1079
        %1103 = vmatprep.subr.bf16.mxu0 0
        %1104 = vmatpush1.bf16.msra.mxu0 %v1080
        %1105 = vmatprep.subr.bf16.mxu0 0
        %1106 = vmatpush1.bf16.msra.mxu0 0
        %1107 = vmatprep.subr.bf16.mxu0 0
        %1108 = vmatpush1.bf16.msra.mxu0 0
        %1109 = vmatprep.subr.bf16.mxu0 0
        %1110 = vmatpush1.bf16.msra.mxu0 0
        %1111 = vmatprep.subr.bf16.mxu0 0
        %1112 = vmatpush1.bf16.msra.mxu0 0
        %1113 = vmatprep.subr.bf16.mxu0 0
        %1114 = vmatpush1.bf16.msra.mxu0 0
        %1115 = vmatprep.subr.bf16.mxu0 0
        %1116 = vmatpush1.bf16.msra.mxu0 0
        %1117 = vmatprep.subr.bf16.mxu0 0
        %1118 = vmatpush1.bf16.msra.mxu0 0
        %1119 = vmatprep.subr.bf16.mxu0 0
        %1120 = vmatpush1.bf16.msra.mxu0 0
        %1121 = vmatprep.mubr.bf16.mxu0 0
        %1122 = vmatmul.mubr.bf16.gmra.mrb[0].mxu0 %v1023
        %v1123 = vpop.f32.mrb[0].mxu0
        %v1124 = vadd.f32 0.0, %v1123
        %v1125 = vpop.f32.mrb[0].mxu0
        %v1126 = vpop.f32.mrb[0].mxu0
        %v1127 = vpop.f32.mrb[0].mxu0
        %1128 = vdwg.mxu0
        %v1145 = vunpack.c.l.b16 %v962
        %v1146 = vunpack.c.l.b16 %v963
        %v1147 = vunpack.c.l.b16 %v964
        %v1148 = vunpack.c.l.b16 %v965
        %v1149 = vunpack.c.l.b16 %v966
        %v1150 = vunpack.c.l.b16 %v967
        %v1151 = vunpack.c.l.b16 %v968
        %v1152 = vunpack.c.l.b16 %v969
        %v1153 = vunpack.c.l.b16 %v970
        %v1154 = vunpack.c.l.b16 %v971
        %v1155 = vunpack.c.l.b16 %v972
        %v1156 = vunpack.c.l.b16 %v973
        %v1157 = vunpack.c.l.b16 %v974
        %v1158 = vunpack.c.l.b16 %v975
        %v1159 = vunpack.c.l.b16 %v976
        %v1160 = vunpack.c.l.b16 %v977
        %v1161 = vpack.c.b16 %v1146, %v1145
        %v1162 = vpack.c.b16 %v1148, %v1147
        %v1163 = vpack.c.b16 %v1150, %v1149
        %v1164 = vpack.c.b16 %v1152, %v1151
        %v1165 = vpack.c.b16 %v1154, %v1153
        %v1166 = vpack.c.b16 %v1156, %v1155
        %v1167 = vpack.c.b16 %v1158, %v1157
        %v1168 = vpack.c.b16 %v1160, %v1159
        %1177 = vmatprep.subr.bf16.mxu0 0
        %1178 = vmatpush1.bf16.msra.mxu0 %v1161
        %1179 = vmatprep.subr.bf16.mxu0 0
        %1180 = vmatpush1.bf16.msra.mxu0 %v1162
        %1181 = vmatprep.subr.bf16.mxu0 0
        %1182 = vmatpush1.bf16.msra.mxu0 %v1163
        %1183 = vmatprep.subr.bf16.mxu0 0
        %1184 = vmatpush1.bf16.msra.mxu0 %v1164
        %1185 = vmatprep.subr.bf16.mxu0 0
        %1186 = vmatpush1.bf16.msra.mxu0 %v1165
        %1187 = vmatprep.subr.bf16.mxu0 0
        %1188 = vmatpush1.bf16.msra.mxu0 %v1166
        %1189 = vmatprep.subr.bf16.mxu0 0
        %1190 = vmatpush1.bf16.msra.mxu0 %v1167
        %1191 = vmatprep.subr.bf16.mxu0 0
        %1192 = vmatpush1.bf16.msra.mxu0 %v1168
        %1193 = vmatprep.subr.bf16.mxu0 0
        %1194 = vmatpush1.bf16.msra.mxu0 0
        %1195 = vmatprep.subr.bf16.mxu0 0
        %1196 = vmatpush1.bf16.msra.mxu0 0
        %1197 = vmatprep.subr.bf16.mxu0 0
        %1198 = vmatpush1.bf16.msra.mxu0 0
        %1199 = vmatprep.subr.bf16.mxu0 0
        %1200 = vmatpush1.bf16.msra.mxu0 0
        %1201 = vmatprep.subr.bf16.mxu0 0
        %1202 = vmatpush1.bf16.msra.mxu0 0
        %1203 = vmatprep.subr.bf16.mxu0 0
        %1204 = vmatpush1.bf16.msra.mxu0 0
        %1205 = vmatprep.subr.bf16.mxu0 0
        %1206 = vmatpush1.bf16.msra.mxu0 0
        %1207 = vmatprep.subr.bf16.mxu0 0
        %1208 = vmatpush1.bf16.msra.mxu0 0
        %1209 = vmatprep.mubr.bf16.mxu0 0
        %1210 = vmatmul.mubr.bf16.gmra.mrb[0].mxu0 %v961
        %v1211 = vpop.f32.mrb[0].mxu0
        %v1212 = vadd.f32 %v1124, %v1211
        %v1213 = vpop.f32.mrb[0].mxu0
        %v1214 = vpop.f32.mrb[0].mxu0
        %v1215 = vpop.f32.mrb[0].mxu0
        %1216 = vdwg.mxu0
        %s1217 = scalar_lea.vmem %s5, 8
        %v1218 = vld [vmem:[%s1217] sm:$0xf]
        %v1220 = vsel %vm917, %v1218, 0
        %1222 = vmatprep.subr.bf16.mxu0 0
        %1223 = vmatpush1.bf16.msra.mxu0 %v915
        %1224 = vmatprep.subr.bf16.mxu0 0
        %1225 = vmatpush1.bf16.msra.mxu0 0
        %1226 = vmatprep.subr.bf16.mxu0 0
        %1227 = vmatpush1.bf16.msra.mxu0 0
        %1228 = vmatprep.subr.bf16.mxu0 0
        %1229 = vmatpush1.bf16.msra.mxu0 0
        %1230 = vmatprep.subr.bf16.mxu0 0
        %1231 = vmatpush1.bf16.msra.mxu0 0
        %1232 = vmatprep.subr.bf16.mxu0 0
        %1233 = vmatpush1.bf16.msra.mxu0 0
        %1234 = vmatprep.subr.bf16.mxu0 0
        %1235 = vmatpush1.bf16.msra.mxu0 0
        %1236 = vmatprep.subr.bf16.mxu0 0
        %1237 = vmatpush1.bf16.msra.mxu0 0
        %1238 = vmatprep.subr.bf16.mxu0 0
        %1239 = vmatpush1.bf16.msra.mxu0 0
        %1240 = vmatprep.subr.bf16.mxu0 0
        %1241 = vmatpush1.bf16.msra.mxu0 0
        %1242 = vmatprep.subr.bf16.mxu0 0
        %1243 = vmatpush1.bf16.msra.mxu0 0
        %1244 = vmatprep.subr.bf16.mxu0 0
        %1245 = vmatpush1.bf16.msra.mxu0 0
        %1246 = vmatprep.subr.bf16.mxu0 0
        %1247 = vmatpush1.bf16.msra.mxu0 0
        %1248 = vmatprep.subr.bf16.mxu0 0
        %1249 = vmatpush1.bf16.msra.mxu0 0
        %1250 = vmatprep.subr.bf16.mxu0 0
        %1251 = vmatpush1.bf16.msra.mxu0 0
        %1252 = vmatprep.subr.bf16.mxu0 0
        %1253 = vmatpush1.bf16.msra.mxu0 0
        %1254 = vmatprep.mubr.bf16.mxu0 0
        %1255 = vmatmul.mubr.bf16.gmra.mrb[0].mxu0 %v1220
        %v1256 = vpop.f32.mrb[0].mxu0
        %v1257 = vadd.f32 0.0, %v1256
        %v1258 = vpop.f32.mrb[0].mxu0
        %v1259 = vpop.f32.mrb[0].mxu0
        %v1260 = vpop.f32.mrb[0].mxu0
        %1261 = vdwg.mxu0
        %v1262 = vpack.c.bf16 %v1257, %v1257
        %s1263 = scalar_lea.vmem %s6, 128
        %v1264 = vld [vmem:[%s1263] sm:$0xf]
        %v1265 = vld [vmem:[%s1263 + $0x4] sm:$0xf]
        %v1266 = vld [vmem:[%s1263 + $0x8] sm:$0xf]
        %v1267 = vld [vmem:[%s1263 + $0xc] sm:$0xf]
        %v1268 = vld [vmem:[%s1263 + $0x10] sm:$0xf]
        %v1269 = vld [vmem:[%s1263 + $0x14] sm:$0xf]
        %v1270 = vld [vmem:[%s1263 + $0x18] sm:$0xf]
        %v1271 = vld [vmem:[%s1263 + $0x1c] sm:$0xf]
        %v1272 = vld [vmem:[%s1263 + $0x20] sm:$0xf]
        %v1273 = vld [vmem:[%s1263 + $0x24] sm:$0xf]
        %v1274 = vld [vmem:[%s1263 + $0x28] sm:$0xf]
        %v1275 = vld [vmem:[%s1263 + $0x2c] sm:$0xf]
        %v1276 = vld [vmem:[%s1263 + $0x30] sm:$0xf]
        %v1277 = vld [vmem:[%s1263 + $0x34] sm:$0xf]
        %v1278 = vld [vmem:[%s1263 + $0x38] sm:$0xf]
        %v1279 = vld [vmem:[%s1263 + $0x3c] sm:$0xf]
        %v1296 = vunpack.c.l.b16 %v1264
        %v1297 = vunpack.c.l.b16 %v1265
        %v1298 = vunpack.c.l.b16 %v1266
        %v1299 = vunpack.c.l.b16 %v1267
        %v1300 = vunpack.c.l.b16 %v1268
        %v1301 = vunpack.c.l.b16 %v1269
        %v1302 = vunpack.c.l.b16 %v1270
        %v1303 = vunpack.c.l.b16 %v1271
        %v1304 = vunpack.c.l.b16 %v1272
        %v1305 = vunpack.c.l.b16 %v1273
        %v1306 = vunpack.c.l.b16 %v1274
        %v1307 = vunpack.c.l.b16 %v1275
        %v1308 = vunpack.c.l.b16 %v1276
        %v1309 = vunpack.c.l.b16 %v1277
        %v1310 = vunpack.c.l.b16 %v1278
        %v1311 = vunpack.c.l.b16 %v1279
        %v1312 = vpack.c.b16 %v1297, %v1296
        %v1313 = vpack.c.b16 %v1299, %v1298
        %v1314 = vpack.c.b16 %v1301, %v1300
        %v1315 = vpack.c.b16 %v1303, %v1302
        %v1316 = vpack.c.b16 %v1305, %v1304
        %v1317 = vpack.c.b16 %v1307, %v1306
        %v1318 = vpack.c.b16 %v1309, %v1308
        %v1319 = vpack.c.b16 %v1311, %v1310
        %1328 = vmatprep.subr.bf16.mxu0 0
        %1329 = vmatpush1.bf16.msra.mxu0 %v1312
        %1330 = vmatprep.subr.bf16.mxu0 0
        %1331 = vmatpush1.bf16.msra.mxu0 %v1313
        %1332 = vmatprep.subr.bf16.mxu0 0
        %1333 = vmatpush1.bf16.msra.mxu0 %v1314
        %1334 = vmatprep.subr.bf16.mxu0 0
        %1335 = vmatpush1.bf16.msra.mxu0 %v1315
        %1336 = vmatprep.subr.bf16.mxu0 0
        %1337 = vmatpush1.bf16.msra.mxu0 %v1316
        %1338 = vmatprep.subr.bf16.mxu0 0
        %1339 = vmatpush1.bf16.msra.mxu0 %v1317
        %1340 = vmatprep.subr.bf16.mxu0 0
        %1341 = vmatpush1.bf16.msra.mxu0 %v1318
        %1342 = vmatprep.subr.bf16.mxu0 0
        %1343 = vmatpush1.bf16.msra.mxu0 %v1319
        %1344 = vmatprep.subr.bf16.mxu0 0
        %1345 = vmatpush1.bf16.msra.mxu0 0
        %1346 = vmatprep.subr.bf16.mxu0 0
        %1347 = vmatpush1.bf16.msra.mxu0 0
        %1348 = vmatprep.subr.bf16.mxu0 0
        %1349 = vmatpush1.bf16.msra.mxu0 0
        %1350 = vmatprep.subr.bf16.mxu0 0
        %1351 = vmatpush1.bf16.msra.mxu0 0
        %1352 = vmatprep.subr.bf16.mxu0 0
        %1353 = vmatpush1.bf16.msra.mxu0 0
        %1354 = vmatprep.subr.bf16.mxu0 0
        %1355 = vmatpush1.bf16.msra.mxu0 0
        %1356 = vmatprep.subr.bf16.mxu0 0
        %1357 = vmatpush1.bf16.msra.mxu0 0
        %1358 = vmatprep.subr.bf16.mxu0 0
        %1359 = vmatpush1.bf16.msra.mxu0 0
        %1360 = vmatprep.mubr.bf16.mxu0 0
        %1361 = vmatmul.mubr.bf16.gmra.mrb[0].mxu0 %v1262
        %v1362 = vpop.f32.mrb[0].mxu0
        %v1363 = vadd.f32 0.0, %v1362
        %v1364 = vpop.f32.mrb[0].mxu0
        %v1365 = vpop.f32.mrb[0].mxu0
        %v1366 = vpop.f32.mrb[0].mxu0
        %1367 = vdwg.mxu0
        %v1368 = vadd.f32 %v1212, %v1363
        %v1369 = vld [vmem:[%s7] sm:$0x1]
        %v1371 = vlaneseq
        %v1372 = vshrl.u32 %v1371, 7
        %v1373 = vsub.s32 0, %v1372
        %v1374 = vrot.slane %v1369, %v1373
        %v1376 = vmul.f32 %v1368, %v1374
        %v1377 = vld [vmem:[%s8] sm:$0x1]
        %v1379 = vlaneseq
        %v1380 = vshrl.u32 %v1379, 7
        %v1381 = vsub.s32 0, %v1380
        %v1382 = vrot.slane %v1377, %v1381
        %v1384 = vadd.f32 %v1376, %v1382
        %vm1385 = vcmp.gt.f32.partialorder %v1384, 0.0
        %v1386 = vmul.f32 %v1384, 0.01
        %v1387 = vsel %vm1385, %v1384, %v1386
        %v1388 = vld [vmem:[%s10] sm:$0xf]
        %v1389 = vpack.c.bf16 %v1387, %v1387
        %v1390 = vld [vmem:[#allocation2] sm:$0xff]
        %v1391 = vld [vmem:[#allocation2 + $0x8] sm:$0xff]
        %v1392 = vld [vmem:[#allocation2 + $0x10] sm:$0xff]
        %v1393 = vld [vmem:[#allocation2 + $0x18] sm:$0xff]
        %v1394 = vld [vmem:[#allocation2 + $0x20] sm:$0xff]
        %v1395 = vld [vmem:[#allocation2 + $0x28] sm:$0xff]
        %v1396 = vld [vmem:[#allocation2 + $0x30] sm:$0xff]
        %v1397 = vld [vmem:[#allocation2 + $0x38] sm:$0xff]
        %v1398 = vld [vmem:[#allocation2 + $0x40] sm:$0xff]
        %v1399 = vld [vmem:[#allocation2 + $0x48] sm:$0xff]
        %v1400 = vld [vmem:[#allocation2 + $0x50] sm:$0xff]
        %v1401 = vld [vmem:[#allocation2 + $0x58] sm:$0xff]
        %v1402 = vld [vmem:[#allocation2 + $0x60] sm:$0xff]
        %v1403 = vld [vmem:[#allocation2 + $0x68] sm:$0xff]
        %v1404 = vld [vmem:[#allocation2 + $0x70] sm:$0xff]
        %v1405 = vld [vmem:[#allocation2 + $0x78] sm:$0xff]
        %v1406 = vld [vmem:[#allocation2 + $0x80] sm:$0xff]
        %v1407 = vld [vmem:[#allocation2 + $0x88] sm:$0xff]
        %v1408 = vld [vmem:[#allocation2 + $0x90] sm:$0xff]
        %v1409 = vld [vmem:[#allocation2 + $0x98] sm:$0xff]
        %v1410 = vld [vmem:[#allocation2 + $0xa0] sm:$0xff]
        %v1411 = vld [vmem:[#allocation2 + $0xa8] sm:$0xff]
        %v1412 = vld [vmem:[#allocation2 + $0xb0] sm:$0xff]
        %v1413 = vld [vmem:[#allocation2 + $0xb8] sm:$0xff]
        %v1414 = vld [vmem:[#allocation2 + $0xc0] sm:$0xff]
        %v1415 = vld [vmem:[#allocation2 + $0xc8] sm:$0xff]
        %v1416 = vld [vmem:[#allocation2 + $0xd0] sm:$0xff]
        %v1417 = vld [vmem:[#allocation2 + $0xd8] sm:$0xff]
        %v1418 = vld [vmem:[#allocation2 + $0xe0] sm:$0xff]
        %v1419 = vld [vmem:[#allocation2 + $0xe8] sm:$0xff]
        %v1420 = vld [vmem:[#allocation2 + $0xf0] sm:$0xff]
        %v1421 = vld [vmem:[#allocation2 + $0xf8] sm:$0xff]
        %v1454 = vunpack.c.l.b16 %v1390
        %v1455 = vunpack.c.h.b16 %v1390
        %v1456 = vunpack.c.l.b16 %v1391
        %v1457 = vunpack.c.h.b16 %v1391
        %v1458 = vunpack.c.l.b16 %v1392
        %v1459 = vunpack.c.h.b16 %v1392
        %v1460 = vunpack.c.l.b16 %v1393
        %v1461 = vunpack.c.h.b16 %v1393
        %v1462 = vunpack.c.l.b16 %v1394
        %v1463 = vunpack.c.h.b16 %v1394
        %v1464 = vunpack.c.l.b16 %v1395
        %v1465 = vunpack.c.h.b16 %v1395
        %v1466 = vunpack.c.l.b16 %v1396
        %v1467 = vunpack.c.h.b16 %v1396
        %v1468 = vunpack.c.l.b16 %v1397
        %v1469 = vunpack.c.h.b16 %v1397
        %v1470 = vunpack.c.l.b16 %v1398
        %v1471 = vunpack.c.h.b16 %v1398
        %v1472 = vunpack.c.l.b16 %v1399
        %v1473 = vunpack.c.h.b16 %v1399
        %v1474 = vunpack.c.l.b16 %v1400
        %v1475 = vunpack.c.h.b16 %v1400
        %v1476 = vunpack.c.l.b16 %v1401
        %v1477 = vunpack.c.h.b16 %v1401
        %v1478 = vunpack.c.l.b16 %v1402
        %v1479 = vunpack.c.h.b16 %v1402
        %v1480 = vunpack.c.l.b16 %v1403
        %v1481 = vunpack.c.h.b16 %v1403
        %v1482 = vunpack.c.l.b16 %v1404
        %v1483 = vunpack.c.h.b16 %v1404
        %v1484 = vunpack.c.l.b16 %v1405
        %v1485 = vunpack.c.h.b16 %v1405
        %v1486 = vunpack.c.l.b16 %v1406
        %v1487 = vunpack.c.h.b16 %v1406
        %v1488 = vunpack.c.l.b16 %v1407
        %v1489 = vunpack.c.h.b16 %v1407
        %v1490 = vunpack.c.l.b16 %v1408
        %v1491 = vunpack.c.h.b16 %v1408
        %v1492 = vunpack.c.l.b16 %v1409
        %v1493 = vunpack.c.h.b16 %v1409
        %v1494 = vunpack.c.l.b16 %v1410
        %v1495 = vunpack.c.h.b16 %v1410
        %v1496 = vunpack.c.l.b16 %v1411
        %v1497 = vunpack.c.h.b16 %v1411
        %v1498 = vunpack.c.l.b16 %v1412
        %v1499 = vunpack.c.h.b16 %v1412
        %v1500 = vunpack.c.l.b16 %v1413
        %v1501 = vunpack.c.h.b16 %v1413
        %v1502 = vunpack.c.l.b16 %v1414
        %v1503 = vunpack.c.h.b16 %v1414
        %v1504 = vunpack.c.l.b16 %v1415
        %v1505 = vunpack.c.h.b16 %v1415
        %v1506 = vunpack.c.l.b16 %v1416
        %v1507 = vunpack.c.h.b16 %v1416
        %v1508 = vunpack.c.l.b16 %v1417
        %v1509 = vunpack.c.h.b16 %v1417
        %v1510 = vunpack.c.l.b16 %v1418
        %v1511 = vunpack.c.h.b16 %v1418
        %v1512 = vunpack.c.l.b16 %v1419
        %v1513 = vunpack.c.h.b16 %v1419
        %v1514 = vunpack.c.l.b16 %v1420
        %v1515 = vunpack.c.h.b16 %v1420
        %v1516 = vunpack.c.l.b16 %v1421
        %v1517 = vunpack.c.h.b16 %v1421
        %v1518 = vpack.c.b16 %v1458, %v1454
        %v1519 = vpack.c.b16 %v1459, %v1455
        %v1520 = vpack.c.b16 %v1460, %v1456
        %v1521 = vpack.c.b16 %v1461, %v1457
        %v1522 = vpack.c.b16 %v1466, %v1462
        %v1523 = vpack.c.b16 %v1467, %v1463
        %v1524 = vpack.c.b16 %v1468, %v1464
        %v1525 = vpack.c.b16 %v1469, %v1465
        %v1526 = vpack.c.b16 %v1474, %v1470
        %v1527 = vpack.c.b16 %v1475, %v1471
        %v1528 = vpack.c.b16 %v1476, %v1472
        %v1529 = vpack.c.b16 %v1477, %v1473
        %v1530 = vpack.c.b16 %v1482, %v1478
        %v1531 = vpack.c.b16 %v1483, %v1479
        %v1532 = vpack.c.b16 %v1484, %v1480
        %v1533 = vpack.c.b16 %v1485, %v1481
        %v1534 = vpack.c.b16 %v1490, %v1486
        %v1535 = vpack.c.b16 %v1491, %v1487
        %v1536 = vpack.c.b16 %v1492, %v1488
        %v1537 = vpack.c.b16 %v1493, %v1489
        %v1538 = vpack.c.b16 %v1498, %v1494
        %v1539 = vpack.c.b16 %v1499, %v1495
        %v1540 = vpack.c.b16 %v1500, %v1496
        %v1541 = vpack.c.b16 %v1501, %v1497
        %v1542 = vpack.c.b16 %v1506, %v1502
        %v1543 = vpack.c.b16 %v1507, %v1503
        %v1544 = vpack.c.b16 %v1508, %v1504
        %v1545 = vpack.c.b16 %v1509, %v1505
        %v1546 = vpack.c.b16 %v1514, %v1510
        %v1547 = vpack.c.b16 %v1515, %v1511
        %v1548 = vpack.c.b16 %v1516, %v1512
        %v1549 = vpack.c.b16 %v1517, %v1513
        %1582 = vmatprep.subr.bf16.mxu0 %v1519
        %1583 = vmatpush1.bf16.msra.mxu0 %v1518
        %1584 = vmatprep.subr.bf16.mxu0 %v1523
        %1585 = vmatpush1.bf16.msra.mxu0 %v1522
        %1586 = vmatprep.subr.bf16.mxu0 %v1527
        %1587 = vmatpush1.bf16.msra.mxu0 %v1526
        %1588 = vmatprep.subr.bf16.mxu0 %v1531
        %1589 = vmatpush1.bf16.msra.mxu0 %v1530
        %1590 = vmatprep.subr.bf16.mxu0 %v1535
        %1591 = vmatpush1.bf16.msra.mxu0 %v1534
        %1592 = vmatprep.subr.bf16.mxu0 %v1539
        %1593 = vmatpush1.bf16.msra.mxu0 %v1538
        %1594 = vmatprep.subr.bf16.mxu0 %v1543
        %1595 = vmatpush1.bf16.msra.mxu0 %v1542
        %1596 = vmatprep.subr.bf16.mxu0 %v1547
        %1597 = vmatpush1.bf16.msra.mxu0 %v1546
        %1598 = vmatprep.subr.bf16.mxu0 0
        %1599 = vmatpush1.bf16.msra.mxu0 0
        %1600 = vmatprep.subr.bf16.mxu0 0
        %1601 = vmatpush1.bf16.msra.mxu0 0
        %1602 = vmatprep.subr.bf16.mxu0 0
        %1603 = vmatpush1.bf16.msra.mxu0 0
        %1604 = vmatprep.subr.bf16.mxu0 0
        %1605 = vmatpush1.bf16.msra.mxu0 0
        %1606 = vmatprep.subr.bf16.mxu0 0
        %1607 = vmatpush1.bf16.msra.mxu0 0
        %1608 = vmatprep.subr.bf16.mxu0 0
        %1609 = vmatpush1.bf16.msra.mxu0 0
        %1610 = vmatprep.subr.bf16.mxu0 0
        %1611 = vmatpush1.bf16.msra.mxu0 0
        %1612 = vmatprep.subr.bf16.mxu0 0
        %1613 = vmatpush1.bf16.msra.mxu0 0
        %1614 = vmatprep.mubr.bf16.mxu0 0
        %1615 = vmatmul.mubr.bf16.gmra.mrb[0].mxu0 %v1389
        %v1616 = vpop.f32.mrb[0].mxu0
        %v1617 = vadd.f32 0.0, %v1616
        %v1618 = vpop.f32.mrb[0].mxu0
        %v1619 = vadd.f32 0.0, %v1618
        %v1620 = vpop.f32.mrb[0].mxu0
        %v1621 = vpop.f32.mrb[0].mxu0
        %1622 = vdwg.mxu0
        %1623 = vmatprep.subr.bf16.mxu0 %v1521
        %1624 = vmatpush1.bf16.msra.mxu0 %v1520
        %1625 = vmatprep.subr.bf16.mxu0 %v1525
        %1626 = vmatpush1.bf16.msra.mxu0 %v1524
        %1627 = vmatprep.subr.bf16.mxu0 %v1529
        %1628 = vmatpush1.bf16.msra.mxu0 %v1528
        %1629 = vmatprep.subr.bf16.mxu0 %v1533
        %1630 = vmatpush1.bf16.msra.mxu0 %v1532
        %1631 = vmatprep.subr.bf16.mxu0 %v1537
        %1632 = vmatpush1.bf16.msra.mxu0 %v1536
        %1633 = vmatprep.subr.bf16.mxu0 %v1541
        %1634 = vmatpush1.bf16.msra.mxu0 %v1540
        %1635 = vmatprep.subr.bf16.mxu0 %v1545
        %1636 = vmatpush1.bf16.msra.mxu0 %v1544
        %1637 = vmatprep.subr.bf16.mxu0 %v1549
        %1638 = vmatpush1.bf16.msra.mxu0 %v1548
        %1639 = vmatprep.subr.bf16.mxu0 0
        %1640 = vmatpush1.bf16.msra.mxu0 0
        %1641 = vmatprep.subr.bf16.mxu0 0
        %1642 = vmatpush1.bf16.msra.mxu0 0
        %1643 = vmatprep.subr.bf16.mxu0 0
        %1644 = vmatpush1.bf16.msra.mxu0 0
        %1645 = vmatprep.subr.bf16.mxu0 0
        %1646 = vmatpush1.bf16.msra.mxu0 0
        %1647 = vmatprep.subr.bf16.mxu0 0
        %1648 = vmatpush1.bf16.msra.mxu0 0
        %1649 = vmatprep.subr.bf16.mxu0 0
        %1650 = vmatpush1.bf16.msra.mxu0 0
        %1651 = vmatprep.subr.bf16.mxu0 0
        %1652 = vmatpush1.bf16.msra.mxu0 0
        %1653 = vmatprep.subr.bf16.mxu0 0
        %1654 = vmatpush1.bf16.msra.mxu0 0
        %1655 = vmatprep.mubr.bf16.mxu0 0
        %1656 = vmatmul.mubr.bf16.gmra.mrb[0].mxu0 %v1389
        %v1657 = vpop.f32.mrb[0].mxu0
        %v1658 = vadd.f32 0.0, %v1657
        %v1659 = vpop.f32.mrb[0].mxu0
        %v1660 = vadd.f32 0.0, %v1659
        %v1661 = vpop.f32.mrb[0].mxu0
        %v1662 = vpop.f32.mrb[0].mxu0
        %1663 = vdwg.mxu0
        %v1668 = vcombine.low %v1617, %v1619
        %v1669 = vcombine.low %v1658, %v1660
        %v1671 = vunpack.c.l.s4 1966171168
        %v1672 = vunpack.c.0.s8 %v1671
        %v1673 = vlaneseq
        %v1674 = vshrl.u32 %v1673, 7
        %v1675 = vsub.s32 %v1672, %v1674
        %v1676 = vrot.slane %v1668, %v1675
        %v1678 = vunpack.c.l.s4 1966171168
        %v1679 = vunpack.c.0.s8 %v1678
        %v1680 = vlaneseq
        %v1681 = vshrl.u32 %v1680, 7
        %v1682 = vsub.s32 %v1679, %v1681
        %v1683 = vrot.slane %v1669, %v1682
        %v1684 = vcombine.low %v1676, %v1683
        %v1686 = vunpack.c.l.s4 1966171168
        %v1687 = vunpack.c.0.s8 %v1686
        %v1688 = vlaneseq
        %v1689 = vshrl.u32 %v1688, 7
        %v1690 = vsub.s32 %v1687, %v1689
        %v1691 = vrot.slane %v1684, %v1690
        %v1693 = vadd.f32 %v1388, %v1691
        %s1694 = scalar_lea.vmem [#allocation2], 256
        %v1695 = vld [vmem:[%s1694] sm:$0xff]
        %v1696 = vld [vmem:[%s1694 + $0x8] sm:$0xff]
        %v1697 = vld [vmem:[%s1694 + $0x10] sm:$0xff]
        %v1698 = vld [vmem:[%s1694 + $0x18] sm:$0xff]
        %v1699 = vld [vmem:[%s1694 + $0x20] sm:$0xff]
        %v1700 = vld [vmem:[%s1694 + $0x28] sm:$0xff]
        %v1701 = vld [vmem:[%s1694 + $0x30] sm:$0xff]
        %v1702 = vld [vmem:[%s1694 + $0x38] sm:$0xff]
        %v1703 = vld [vmem:[%s1694 + $0x40] sm:$0xff]
        %v1704 = vld [vmem:[%s1694 + $0x48] sm:$0xff]
        %v1705 = vld [vmem:[%s1694 + $0x50] sm:$0xff]
        %v1706 = vld [vmem:[%s1694 + $0x58] sm:$0xff]
        %v1707 = vld [vmem:[%s1694 + $0x60] sm:$0xff]
        %v1708 = vld [vmem:[%s1694 + $0x68] sm:$0xff]
        %v1709 = vld [vmem:[%s1694 + $0x70] sm:$0xff]
        %v1710 = vld [vmem:[%s1694 + $0x78] sm:$0xff]
        %v1711 = vld [vmem:[%s1694 + $0x80] sm:$0xff]
        %v1712 = vld [vmem:[%s1694 + $0x88] sm:$0xff]
        %v1713 = vld [vmem:[%s1694 + $0x90] sm:$0xff]
        %v1714 = vld [vmem:[%s1694 + $0x98] sm:$0xff]
        %v1715 = vld [vmem:[%s1694 + $0xa0] sm:$0xff]
        %v1716 = vld [vmem:[%s1694 + $0xa8] sm:$0xff]
        %v1717 = vld [vmem:[%s1694 + $0xb0] sm:$0xff]
        %v1718 = vld [vmem:[%s1694 + $0xb8] sm:$0xff]
        %v1719 = vld [vmem:[%s1694 + $0xc0] sm:$0xff]
        %v1720 = vld [vmem:[%s1694 + $0xc8] sm:$0xff]
        %v1721 = vld [vmem:[%s1694 + $0xd0] sm:$0xff]
        %v1722 = vld [vmem:[%s1694 + $0xd8] sm:$0xff]
        %v1723 = vld [vmem:[%s1694 + $0xe0] sm:$0xff]
        %v1724 = vld [vmem:[%s1694 + $0xe8] sm:$0xff]
        %v1725 = vld [vmem:[%s1694 + $0xf0] sm:$0xff]
        %v1726 = vld [vmem:[%s1694 + $0xf8] sm:$0xff]
        %v1728 = vshrl.u32 %v1389, 16
        %v1763 = vunpack.c.l.b16 %v1695
        %v1764 = vunpack.c.h.b16 %v1695
        %v1765 = vunpack.c.l.b16 %v1696
        %v1766 = vunpack.c.h.b16 %v1696
        %v1767 = vunpack.c.l.b16 %v1697
        %v1768 = vunpack.c.h.b16 %v1697
        %v1769 = vunpack.c.l.b16 %v1698
        %v1770 = vunpack.c.h.b16 %v1698
        %v1771 = vunpack.c.l.b16 %v1699
        %v1772 = vunpack.c.h.b16 %v1699
        %v1773 = vunpack.c.l.b16 %v1700
        %v1774 = vunpack.c.h.b16 %v1700
        %v1775 = vunpack.c.l.b16 %v1701
        %v1776 = vunpack.c.h.b16 %v1701
        %v1777 = vunpack.c.l.b16 %v1702
        %v1778 = vunpack.c.h.b16 %v1702
        %v1779 = vunpack.c.l.b16 %v1703
        %v1780 = vunpack.c.h.b16 %v1703
        %v1781 = vunpack.c.l.b16 %v1704
        %v1782 = vunpack.c.h.b16 %v1704
        %v1783 = vunpack.c.l.b16 %v1705
        %v1784 = vunpack.c.h.b16 %v1705
        %v1785 = vunpack.c.l.b16 %v1706
        %v1786 = vunpack.c.h.b16 %v1706
        %v1787 = vunpack.c.l.b16 %v1707
        %v1788 = vunpack.c.h.b16 %v1707
        %v1789 = vunpack.c.l.b16 %v1708
        %v1790 = vunpack.c.h.b16 %v1708
        %v1791 = vunpack.c.l.b16 %v1709
        %v1792 = vunpack.c.h.b16 %v1709
        %v1793 = vunpack.c.l.b16 %v1710
        %v1794 = vunpack.c.h.b16 %v1710
        %v1795 = vunpack.c.l.b16 %v1711
        %v1796 = vunpack.c.h.b16 %v1711
        %v1797 = vunpack.c.l.b16 %v1712
        %v1798 = vunpack.c.h.b16 %v1712
        %v1799 = vunpack.c.l.b16 %v1713
        %v1800 = vunpack.c.h.b16 %v1713
        %v1801 = vunpack.c.l.b16 %v1714
        %v1802 = vunpack.c.h.b16 %v1714
        %v1803 = vunpack.c.l.b16 %v1715
        %v1804 = vunpack.c.h.b16 %v1715
        %v1805 = vunpack.c.l.b16 %v1716
        %v1806 = vunpack.c.h.b16 %v1716
        %v1807 = vunpack.c.l.b16 %v1717
        %v1808 = vunpack.c.h.b16 %v1717
        %v1809 = vunpack.c.l.b16 %v1718
        %v1810 = vunpack.c.h.b16 %v1718
        %v1811 = vunpack.c.l.b16 %v1719
        %v1812 = vunpack.c.h.b16 %v1719
        %v1813 = vunpack.c.l.b16 %v1720
        %v1814 = vunpack.c.h.b16 %v1720
        %v1815 = vunpack.c.l.b16 %v1721
        %v1816 = vunpack.c.h.b16 %v1721
        %v1817 = vunpack.c.l.b16 %v1722
        %v1818 = vunpack.c.h.b16 %v1722
        %v1819 = vunpack.c.l.b16 %v1723
        %v1820 = vunpack.c.h.b16 %v1723
        %v1821 = vunpack.c.l.b16 %v1724
        %v1822 = vunpack.c.h.b16 %v1724
        %v1823 = vunpack.c.l.b16 %v1725
        %v1824 = vunpack.c.h.b16 %v1725
        %v1825 = vunpack.c.l.b16 %v1726
        %v1826 = vunpack.c.h.b16 %v1726
        %v1827 = vpack.c.b16 %v1767, %v1763
        %v1828 = vpack.c.b16 %v1768, %v1764
        %v1829 = vpack.c.b16 %v1769, %v1765
        %v1830 = vpack.c.b16 %v1770, %v1766
        %v1831 = vpack.c.b16 %v1775, %v1771
        %v1832 = vpack.c.b16 %v1776, %v1772
        %v1833 = vpack.c.b16 %v1777, %v1773
        %v1834 = vpack.c.b16 %v1778, %v1774
        %v1835 = vpack.c.b16 %v1783, %v1779
        %v1836 = vpack.c.b16 %v1784, %v1780
        %v1837 = vpack.c.b16 %v1785, %v1781
        %v1838 = vpack.c.b16 %v1786, %v1782
        %v1839 = vpack.c.b16 %v1791, %v1787
        %v1840 = vpack.c.b16 %v1792, %v1788
        %v1841 = vpack.c.b16 %v1793, %v1789
        %v1842 = vpack.c.b16 %v1794, %v1790
        %v1843 = vpack.c.b16 %v1799, %v1795
        %v1844 = vpack.c.b16 %v1800, %v1796
        %v1845 = vpack.c.b16 %v1801, %v1797
        %v1846 = vpack.c.b16 %v1802, %v1798
        %v1847 = vpack.c.b16 %v1807, %v1803
        %v1848 = vpack.c.b16 %v1808, %v1804
        %v1849 = vpack.c.b16 %v1809, %v1805
        %v1850 = vpack.c.b16 %v1810, %v1806
        %v1851 = vpack.c.b16 %v1815, %v1811
        %v1852 = vpack.c.b16 %v1816, %v1812
        %v1853 = vpack.c.b16 %v1817, %v1813
        %v1854 = vpack.c.b16 %v1818, %v1814
        %v1855 = vpack.c.b16 %v1823, %v1819
        %v1856 = vpack.c.b16 %v1824, %v1820
        %v1857 = vpack.c.b16 %v1825, %v1821
        %v1858 = vpack.c.b16 %v1826, %v1822
        %1891 = vmatprep.subr.bf16.mxu0 %v1828
        %1892 = vmatpush1.bf16.msra.mxu0 %v1827
        %1893 = vmatprep.subr.bf16.mxu0 %v1832
        %1894 = vmatpush1.bf16.msra.mxu0 %v1831
        %1895 = vmatprep.subr.bf16.mxu0 %v1836
        %1896 = vmatpush1.bf16.msra.mxu0 %v1835
        %1897 = vmatprep.subr.bf16.mxu0 %v1840
        %1898 = vmatpush1.bf16.msra.mxu0 %v1839
        %1899 = vmatprep.subr.bf16.mxu0 %v1844
        %1900 = vmatpush1.bf16.msra.mxu0 %v1843
        %1901 = vmatprep.subr.bf16.mxu0 %v1848
        %1902 = vmatpush1.bf16.msra.mxu0 %v1847
        %1903 = vmatprep.subr.bf16.mxu0 %v1852
        %1904 = vmatpush1.bf16.msra.mxu0 %v1851
        %1905 = vmatprep.subr.bf16.mxu0 %v1856
        %1906 = vmatpush1.bf16.msra.mxu0 %v1855
        %1907 = vmatprep.subr.bf16.mxu0 0
        %1908 = vmatpush1.bf16.msra.mxu0 0
        %1909 = vmatprep.subr.bf16.mxu0 0
        %1910 = vmatpush1.bf16.msra.mxu0 0
        %1911 = vmatprep.subr.bf16.mxu0 0
        %1912 = vmatpush1.bf16.msra.mxu0 0
        %1913 = vmatprep.subr.bf16.mxu0 0
        %1914 = vmatpush1.bf16.msra.mxu0 0
        %1915 = vmatprep.subr.bf16.mxu0 0
        %1916 = vmatpush1.bf16.msra.mxu0 0
        %1917 = vmatprep.subr.bf16.mxu0 0
        %1918 = vmatpush1.bf16.msra.mxu0 0
        %1919 = vmatprep.subr.bf16.mxu0 0
        %1920 = vmatpush1.bf16.msra.mxu0 0
        %1921 = vmatprep.subr.bf16.mxu0 0
        %1922 = vmatpush1.bf16.msra.mxu0 0
        %1923 = vmatprep.mubr.bf16.mxu0 0
        %1924 = vmatmul.mubr.bf16.gmra.mrb[0].mxu0 %v1728
        %v1925 = vpop.f32.mrb[0].mxu0
        %v1926 = vadd.f32 0.0, %v1925
        %v1927 = vpop.f32.mrb[0].mxu0
        %v1928 = vadd.f32 0.0, %v1927
        %v1929 = vpop.f32.mrb[0].mxu0
        %v1930 = vpop.f32.mrb[0].mxu0
        %1931 = vdwg.mxu0
        %1932 = vmatprep.subr.bf16.mxu0 %v1830
        %1933 = vmatpush1.bf16.msra.mxu0 %v1829
        %1934 = vmatprep.subr.bf16.mxu0 %v1834
        %1935 = vmatpush1.bf16.msra.mxu0 %v1833
        %1936 = vmatprep.subr.bf16.mxu0 %v1838
        %1937 = vmatpush1.bf16.msra.mxu0 %v1837
        %1938 = vmatprep.subr.bf16.mxu0 %v1842
        %1939 = vmatpush1.bf16.msra.mxu0 %v1841
        %1940 = vmatprep.subr.bf16.mxu0 %v1846
        %1941 = vmatpush1.bf16.msra.mxu0 %v1845
        %1942 = vmatprep.subr.bf16.mxu0 %v1850
        %1943 = vmatpush1.bf16.msra.mxu0 %v1849
        %1944 = vmatprep.subr.bf16.mxu0 %v1854
        %1945 = vmatpush1.bf16.msra.mxu0 %v1853
        %1946 = vmatprep.subr.bf16.mxu0 %v1858
        %1947 = vmatpush1.bf16.msra.mxu0 %v1857
        %1948 = vmatprep.subr.bf16.mxu0 0
        %1949 = vmatpush1.bf16.msra.mxu0 0
        %1950 = vmatprep.subr.bf16.mxu0 0
        %1951 = vmatpush1.bf16.msra.mxu0 0
        %1952 = vmatprep.subr.bf16.mxu0 0
        %1953 = vmatpush1.bf16.msra.mxu0 0
        %1954 = vmatprep.subr.bf16.mxu0 0
        %1955 = vmatpush1.bf16.msra.mxu0 0
        %1956 = vmatprep.subr.bf16.mxu0 0
        %1957 = vmatpush1.bf16.msra.mxu0 0
        %1958 = vmatprep.subr.bf16.mxu0 0
        %1959 = vmatpush1.bf16.msra.mxu0 0
        %1960 = vmatprep.subr.bf16.mxu0 0
        %1961 = vmatpush1.bf16.msra.mxu0 0
        %1962 = vmatprep.subr.bf16.mxu0 0
        %1963 = vmatpush1.bf16.msra.mxu0 0
        %1964 = vmatprep.mubr.bf16.mxu0 0
        %1965 = vmatmul.mubr.bf16.gmra.mrb[0].mxu0 %v1728
        %v1966 = vpop.f32.mrb[0].mxu0
        %v1967 = vadd.f32 0.0, %v1966
        %v1968 = vpop.f32.mrb[0].mxu0
        %v1969 = vadd.f32 0.0, %v1968
        %v1970 = vpop.f32.mrb[0].mxu0
        %v1971 = vpop.f32.mrb[0].mxu0
        %1972 = vdwg.mxu0
        %v1977 = vcombine.low %v1926, %v1928
        %v1978 = vcombine.low %v1967, %v1969
        %v1980 = vunpack.c.l.s4 1966171168
        %v1981 = vunpack.c.0.s8 %v1980
        %v1982 = vlaneseq
        %v1983 = vshrl.u32 %v1982, 7
        %v1984 = vsub.s32 %v1981, %v1983
        %v1985 = vrot.slane %v1977, %v1984
        %v1987 = vunpack.c.l.s4 1966171168
        %v1988 = vunpack.c.0.s8 %v1987
        %v1989 = vlaneseq
        %v1990 = vshrl.u32 %v1989, 7
        %v1991 = vsub.s32 %v1988, %v1990
        %v1992 = vrot.slane %v1978, %v1991
        %v1993 = vcombine.low %v1985, %v1992
        %v1995 = vunpack.c.l.s4 1966171168
        %v1996 = vunpack.c.0.s8 %v1995
        %v1997 = vlaneseq
        %v1998 = vshrl.u32 %v1997, 7
        %v1999 = vsub.s32 %v1996, %v1998
        %v2000 = vrot.slane %v1993, %v1999
        %v2002 = vadd.f32 %v1693, %v2000
        %s2003 = scalar_lea.vmem [#allocation2], 512
        %v2004 = vld [vmem:[%s2003] sm:$0xff]
        %v2005 = vld [vmem:[%s2003 + $0x8] sm:$0xff]
        %v2006 = vld [vmem:[%s2003 + $0x10] sm:$0xff]
        %v2007 = vld [vmem:[%s2003 + $0x18] sm:$0xff]
        %v2008 = vld [vmem:[%s2003 + $0x20] sm:$0xff]
        %v2009 = vld [vmem:[%s2003 + $0x28] sm:$0xff]
        %v2010 = vld [vmem:[%s2003 + $0x30] sm:$0xff]
        %v2011 = vld [vmem:[%s2003 + $0x38] sm:$0xff]
        %v2012 = vld [vmem:[%s2003 + $0x40] sm:$0xff]
        %v2013 = vld [vmem:[%s2003 + $0x48] sm:$0xff]
        %v2014 = vld [vmem:[%s2003 + $0x50] sm:$0xff]
        %v2015 = vld [vmem:[%s2003 + $0x58] sm:$0xff]
        %v2016 = vld [vmem:[%s2003 + $0x60] sm:$0xff]
        %v2017 = vld [vmem:[%s2003 + $0x68] sm:$0xff]
        %v2018 = vld [vmem:[%s2003 + $0x70] sm:$0xff]
        %v2019 = vld [vmem:[%s2003 + $0x78] sm:$0xff]
        %v2020 = vld [vmem:[%s2003 + $0x80] sm:$0xff]
        %v2021 = vld [vmem:[%s2003 + $0x88] sm:$0xff]
        %v2022 = vld [vmem:[%s2003 + $0x90] sm:$0xff]
        %v2023 = vld [vmem:[%s2003 + $0x98] sm:$0xff]
        %v2024 = vld [vmem:[%s2003 + $0xa0] sm:$0xff]
        %v2025 = vld [vmem:[%s2003 + $0xa8] sm:$0xff]
        %v2026 = vld [vmem:[%s2003 + $0xb0] sm:$0xff]
        %v2027 = vld [vmem:[%s2003 + $0xb8] sm:$0xff]
        %v2028 = vld [vmem:[%s2003 + $0xc0] sm:$0xff]
        %v2029 = vld [vmem:[%s2003 + $0xc8] sm:$0xff]
        %v2030 = vld [vmem:[%s2003 + $0xd0] sm:$0xff]
        %v2031 = vld [vmem:[%s2003 + $0xd8] sm:$0xff]
        %v2032 = vld [vmem:[%s2003 + $0xe0] sm:$0xff]
        %v2033 = vld [vmem:[%s2003 + $0xe8] sm:$0xff]
        %v2034 = vld [vmem:[%s2003 + $0xf0] sm:$0xff]
        %v2035 = vld [vmem:[%s2003 + $0xf8] sm:$0xff]
        %v2037 = vrot.slane %v1389, 1
        %v2071 = vunpack.c.l.b16 %v2004
        %v2072 = vunpack.c.h.b16 %v2004
        %v2073 = vunpack.c.l.b16 %v2005
        %v2074 = vunpack.c.h.b16 %v2005
        %v2075 = vunpack.c.l.b16 %v2006
        %v2076 = vunpack.c.h.b16 %v2006
        %v2077 = vunpack.c.l.b16 %v2007
        %v2078 = vunpack.c.h.b16 %v2007
        %v2079 = vunpack.c.l.b16 %v2008
        %v2080 = vunpack.c.h.b16 %v2008
        %v2081 = vunpack.c.l.b16 %v2009
        %v2082 = vunpack.c.h.b16 %v2009
        %v2083 = vunpack.c.l.b16 %v2010
        %v2084 = vunpack.c.h.b16 %v2010
        %v2085 = vunpack.c.l.b16 %v2011
        %v2086 = vunpack.c.h.b16 %v2011
        %v2087 = vunpack.c.l.b16 %v2012
        %v2088 = vunpack.c.h.b16 %v2012
        %v2089 = vunpack.c.l.b16 %v2013
        %v2090 = vunpack.c.h.b16 %v2013
        %v2091 = vunpack.c.l.b16 %v2014
        %v2092 = vunpack.c.h.b16 %v2014
        %v2093 = vunpack.c.l.b16 %v2015
        %v2094 = vunpack.c.h.b16 %v2015
        %v2095 = vunpack.c.l.b16 %v2016
        %v2096 = vunpack.c.h.b16 %v2016
        %v2097 = vunpack.c.l.b16 %v2017
        %v2098 = vunpack.c.h.b16 %v2017
        %v2099 = vunpack.c.l.b16 %v2018
        %v2100 = vunpack.c.h.b16 %v2018
        %v2101 = vunpack.c.l.b16 %v2019
        %v2102 = vunpack.c.h.b16 %v2019
        %v2103 = vunpack.c.l.b16 %v2020
        %v2104 = vunpack.c.h.b16 %v2020
        %v2105 = vunpack.c.l.b16 %v2021
        %v2106 = vunpack.c.h.b16 %v2021
        %v2107 = vunpack.c.l.b16 %v2022
        %v2108 = vunpack.c.h.b16 %v2022
        %v2109 = vunpack.c.l.b16 %v2023
        %v2110 = vunpack.c.h.b16 %v2023
        %v2111 = vunpack.c.l.b16 %v2024
        %v2112 = vunpack.c.h.b16 %v2024
        %v2113 = vunpack.c.l.b16 %v2025
        %v2114 = vunpack.c.h.b16 %v2025
        %v2115 = vunpack.c.l.b16 %v2026
        %v2116 = vunpack.c.h.b16 %v2026
        %v2117 = vunpack.c.l.b16 %v2027
        %v2118 = vunpack.c.h.b16 %v2027
        %v2119 = vunpack.c.l.b16 %v2028
        %v2120 = vunpack.c.h.b16 %v2028
        %v2121 = vunpack.c.l.b16 %v2029
        %v2122 = vunpack.c.h.b16 %v2029
        %v2123 = vunpack.c.l.b16 %v2030
        %v2124 = vunpack.c.h.b16 %v2030
        %v2125 = vunpack.c.l.b16 %v2031
        %v2126 = vunpack.c.h.b16 %v2031
        %v2127 = vunpack.c.l.b16 %v2032
        %v2128 = vunpack.c.h.b16 %v2032
        %v2129 = vunpack.c.l.b16 %v2033
        %v2130 = vunpack.c.h.b16 %v2033
        %v2131 = vunpack.c.l.b16 %v2034
        %v2132 = vunpack.c.h.b16 %v2034
        %v2133 = vunpack.c.l.b16 %v2035
        %v2134 = vunpack.c.h.b16 %v2035
        %v2135 = vpack.c.b16 %v2075, %v2071
        %v2136 = vpack.c.b16 %v2076, %v2072
        %v2137 = vpack.c.b16 %v2077, %v2073
        %v2138 = vpack.c.b16 %v2078, %v2074
        %v2139 = vpack.c.b16 %v2083, %v2079
        %v2140 = vpack.c.b16 %v2084, %v2080
        %v2141 = vpack.c.b16 %v2085, %v2081
        %v2142 = vpack.c.b16 %v2086, %v2082
        %v2143 = vpack.c.b16 %v2091, %v2087
        %v2144 = vpack.c.b16 %v2092, %v2088
        %v2145 = vpack.c.b16 %v2093, %v2089
        %v2146 = vpack.c.b16 %v2094, %v2090
        %v2147 = vpack.c.b16 %v2099, %v2095
        %v2148 = vpack.c.b16 %v2100, %v2096
        %v2149 = vpack.c.b16 %v2101, %v2097
        %v2150 = vpack.c.b16 %v2102, %v2098
        %v2151 = vpack.c.b16 %v2107, %v2103
        %v2152 = vpack.c.b16 %v2108, %v2104
        %v2153 = vpack.c.b16 %v2109, %v2105
        %v2154 = vpack.c.b16 %v2110, %v2106
        %v2155 = vpack.c.b16 %v2115, %v2111
        %v2156 = vpack.c.b16 %v2116, %v2112
        %v2157 = vpack.c.b16 %v2117, %v2113
        %v2158 = vpack.c.b16 %v2118, %v2114
        %v2159 = vpack.c.b16 %v2123, %v2119
        %v2160 = vpack.c.b16 %v2124, %v2120
        %v2161 = vpack.c.b16 %v2125, %v2121
        %v2162 = vpack.c.b16 %v2126, %v2122
        %v2163 = vpack.c.b16 %v2131, %v2127
        %v2164 = vpack.c.b16 %v2132, %v2128
        %v2165 = vpack.c.b16 %v2133, %v2129
        %v2166 = vpack.c.b16 %v2134, %v2130
        %2199 = vmatprep.subr.bf16.mxu0 %v2136
        %2200 = vmatpush1.bf16.msra.mxu0 %v2135
        %2201 = vmatprep.subr.bf16.mxu0 %v2140
        %2202 = vmatpush1.bf16.msra.mxu0 %v2139
        %2203 = vmatprep.subr.bf16.mxu0 %v2144
        %2204 = vmatpush1.bf16.msra.mxu0 %v2143
        %2205 = vmatprep.subr.bf16.mxu0 %v2148
        %2206 = vmatpush1.bf16.msra.mxu0 %v2147
        %2207 = vmatprep.subr.bf16.mxu0 %v2152
        %2208 = vmatpush1.bf16.msra.mxu0 %v2151
        %2209 = vmatprep.subr.bf16.mxu0 %v2156
        %2210 = vmatpush1.bf16.msra.mxu0 %v2155
        %2211 = vmatprep.subr.bf16.mxu0 %v2160
        %2212 = vmatpush1.bf16.msra.mxu0 %v2159
        %2213 = vmatprep.subr.bf16.mxu0 %v2164
        %2214 = vmatpush1.bf16.msra.mxu0 %v2163
        %2215 = vmatprep.subr.bf16.mxu0 0
        %2216 = vmatpush1.bf16.msra.mxu0 0
        %2217 = vmatprep.subr.bf16.mxu0 0
        %2218 = vmatpush1.bf16.msra.mxu0 0
        %2219 = vmatprep.subr.bf16.mxu0 0
        %2220 = vmatpush1.bf16.msra.mxu0 0
        %2221 = vmatprep.subr.bf16.mxu0 0
        %2222 = vmatpush1.bf16.msra.mxu0 0
        %2223 = vmatprep.subr.bf16.mxu0 0
        %2224 = vmatpush1.bf16.msra.mxu0 0
        %2225 = vmatprep.subr.bf16.mxu0 0
        %2226 = vmatpush1.bf16.msra.mxu0 0
        %2227 = vmatprep.subr.bf16.mxu0 0
        %2228 = vmatpush1.bf16.msra.mxu0 0
        %2229 = vmatprep.subr.bf16.mxu0 0
        %2230 = vmatpush1.bf16.msra.mxu0 0
        %2231 = vmatprep.mubr.bf16.mxu0 0
        %2232 = vmatmul.mubr.bf16.gmra.mrb[0].mxu0 %v2037
        %v2233 = vpop.f32.mrb[0].mxu0
        %v2234 = vadd.f32 0.0, %v2233
        %v2235 = vpop.f32.mrb[0].mxu0
        %v2236 = vadd.f32 0.0, %v2235
        %v2237 = vpop.f32.mrb[0].mxu0
        %v2238 = vpop.f32.mrb[0].mxu0
        %2239 = vdwg.mxu0
        %2240 = vmatprep.subr.bf16.mxu0 %v2138
        %2241 = vmatpush1.bf16.msra.mxu0 %v2137
        %2242 = vmatprep.subr.bf16.mxu0 %v2142
        %2243 = vmatpush1.bf16.msra.mxu0 %v2141
        %2244 = vmatprep.subr.bf16.mxu0 %v2146
        %2245 = vmatpush1.bf16.msra.mxu0 %v2145
        %2246 = vmatprep.subr.bf16.mxu0 %v2150
        %2247 = vmatpush1.bf16.msra.mxu0 %v2149
        %2248 = vmatprep.subr.bf16.mxu0 %v2154
        %2249 = vmatpush1.bf16.msra.mxu0 %v2153
        %2250 = vmatprep.subr.bf16.mxu0 %v2158
        %2251 = vmatpush1.bf16.msra.mxu0 %v2157
        %2252 = vmatprep.subr.bf16.mxu0 %v2162
        %2253 = vmatpush1.bf16.msra.mxu0 %v2161
        %2254 = vmatprep.subr.bf16.mxu0 %v2166
        %2255 = vmatpush1.bf16.msra.mxu0 %v2165
        %2256 = vmatprep.subr.bf16.mxu0 0
        %2257 = vmatpush1.bf16.msra.mxu0 0
        %2258 = vmatprep.subr.bf16.mxu0 0
        %2259 = vmatpush1.bf16.msra.mxu0 0
        %2260 = vmatprep.subr.bf16.mxu0 0
        %2261 = vmatpush1.bf16.msra.mxu0 0
        %2262 = vmatprep.subr.bf16.mxu0 0
        %2263 = vmatpush1.bf16.msra.mxu0 0
        %2264 = vmatprep.subr.bf16.mxu0 0
        %2265 = vmatpush1.bf16.msra.mxu0 0
        %2266 = vmatprep.subr.bf16.mxu0 0
        %2267 = vmatpush1.bf16.msra.mxu0 0
        %2268 = vmatprep.subr.bf16.mxu0 0
        %2269 = vmatpush1.bf16.msra.mxu0 0
        %2270 = vmatprep.subr.bf16.mxu0 0
        %2271 = vmatpush1.bf16.msra.mxu0 0
        %2272 = vmatprep.mubr.bf16.mxu0 0
        %2273 = vmatmul.mubr.bf16.gmra.mrb[0].mxu0 %v2037
        %v2274 = vpop.f32.mrb[0].mxu0
        %v2275 = vadd.f32 0.0, %v2274
        %v2276 = vpop.f32.mrb[0].mxu0
        %v2277 = vadd.f32 0.0, %v2276
        %v2278 = vpop.f32.mrb[0].mxu0
        %v2279 = vpop.f32.mrb[0].mxu0
        %2280 = vdwg.mxu0
        %v2285 = vcombine.low %v2234, %v2236
        %v2286 = vcombine.low %v2275, %v2277
        %v2288 = vunpack.c.l.s4 1966171168
        %v2289 = vunpack.c.0.s8 %v2288
        %v2290 = vlaneseq
        %v2291 = vshrl.u32 %v2290, 7
        %v2292 = vsub.s32 %v2289, %v2291
        %v2293 = vrot.slane %v2285, %v2292
        %v2295 = vunpack.c.l.s4 1966171168
        %v2296 = vunpack.c.0.s8 %v2295
        %v2297 = vlaneseq
        %v2298 = vshrl.u32 %v2297, 7
        %v2299 = vsub.s32 %v2296, %v2298
        %v2300 = vrot.slane %v2286, %v2299
        %v2301 = vcombine.low %v2293, %v2300
        %v2303 = vunpack.c.l.s4 1966171168
        %v2304 = vunpack.c.0.s8 %v2303
        %v2305 = vlaneseq
        %v2306 = vshrl.u32 %v2305, 7
        %v2307 = vsub.s32 %v2304, %v2306
        %v2308 = vrot.slane %v2301, %v2307
        %v2310 = vadd.f32 %v2002, %v2308
        %s2311 = scalar_lea.vmem [#allocation2], 768
        %v2312 = vld [vmem:[%s2311] sm:$0xff]
        %v2313 = vld [vmem:[%s2311 + $0x8] sm:$0xff]
        %v2314 = vld [vmem:[%s2311 + $0x10] sm:$0xff]
        %v2315 = vld [vmem:[%s2311 + $0x18] sm:$0xff]
        %v2316 = vld [vmem:[%s2311 + $0x20] sm:$0xff]
        %v2317 = vld [vmem:[%s2311 + $0x28] sm:$0xff]
        %v2318 = vld [vmem:[%s2311 + $0x30] sm:$0xff]
        %v2319 = vld [vmem:[%s2311 + $0x38] sm:$0xff]
        %v2320 = vld [vmem:[%s2311 + $0x40] sm:$0xff]
        %v2321 = vld [vmem:[%s2311 + $0x48] sm:$0xff]
        %v2322 = vld [vmem:[%s2311 + $0x50] sm:$0xff]
        %v2323 = vld [vmem:[%s2311 + $0x58] sm:$0xff]
        %v2324 = vld [vmem:[%s2311 + $0x60] sm:$0xff]
        %v2325 = vld [vmem:[%s2311 + $0x68] sm:$0xff]
        %v2326 = vld [vmem:[%s2311 + $0x70] sm:$0xff]
        %v2327 = vld [vmem:[%s2311 + $0x78] sm:$0xff]
        %v2328 = vld [vmem:[%s2311 + $0x80] sm:$0xff]
        %v2329 = vld [vmem:[%s2311 + $0x88] sm:$0xff]
        %v2330 = vld [vmem:[%s2311 + $0x90] sm:$0xff]
        %v2331 = vld [vmem:[%s2311 + $0x98] sm:$0xff]
        %v2332 = vld [vmem:[%s2311 + $0xa0] sm:$0xff]
        %v2333 = vld [vmem:[%s2311 + $0xa8] sm:$0xff]
        %v2334 = vld [vmem:[%s2311 + $0xb0] sm:$0xff]
        %v2335 = vld [vmem:[%s2311 + $0xb8] sm:$0xff]
        %v2336 = vld [vmem:[%s2311 + $0xc0] sm:$0xff]
        %v2337 = vld [vmem:[%s2311 + $0xc8] sm:$0xff]
        %v2338 = vld [vmem:[%s2311 + $0xd0] sm:$0xff]
        %v2339 = vld [vmem:[%s2311 + $0xd8] sm:$0xff]
        %v2340 = vld [vmem:[%s2311 + $0xe0] sm:$0xff]
        %v2341 = vld [vmem:[%s2311 + $0xe8] sm:$0xff]
        %v2342 = vld [vmem:[%s2311 + $0xf0] sm:$0xff]
        %v2343 = vld [vmem:[%s2311 + $0xf8] sm:$0xff]
        %v2344 = vrot.slane %v1728, 1
        %v2378 = vunpack.c.l.b16 %v2312
        %v2379 = vunpack.c.h.b16 %v2312
        %v2380 = vunpack.c.l.b16 %v2313
        %v2381 = vunpack.c.h.b16 %v2313
        %v2382 = vunpack.c.l.b16 %v2314
        %v2383 = vunpack.c.h.b16 %v2314
        %v2384 = vunpack.c.l.b16 %v2315
        %v2385 = vunpack.c.h.b16 %v2315
        %v2386 = vunpack.c.l.b16 %v2316
        %v2387 = vunpack.c.h.b16 %v2316
        %v2388 = vunpack.c.l.b16 %v2317
        %v2389 = vunpack.c.h.b16 %v2317
        %v2390 = vunpack.c.l.b16 %v2318
        %v2391 = vunpack.c.h.b16 %v2318
        %v2392 = vunpack.c.l.b16 %v2319
        %v2393 = vunpack.c.h.b16 %v2319
        %v2394 = vunpack.c.l.b16 %v2320
        %v2395 = vunpack.c.h.b16 %v2320
        %v2396 = vunpack.c.l.b16 %v2321
        %v2397 = vunpack.c.h.b16 %v2321
        %v2398 = vunpack.c.l.b16 %v2322
        %v2399 = vunpack.c.h.b16 %v2322
        %v2400 = vunpack.c.l.b16 %v2323
        %v2401 = vunpack.c.h.b16 %v2323
        %v2402 = vunpack.c.l.b16 %v2324
        %v2403 = vunpack.c.h.b16 %v2324
        %v2404 = vunpack.c.l.b16 %v2325
        %v2405 = vunpack.c.h.b16 %v2325
        %v2406 = vunpack.c.l.b16 %v2326
        %v2407 = vunpack.c.h.b16 %v2326
        %v2408 = vunpack.c.l.b16 %v2327
        %v2409 = vunpack.c.h.b16 %v2327
        %v2410 = vunpack.c.l.b16 %v2328
        %v2411 = vunpack.c.h.b16 %v2328
        %v2412 = vunpack.c.l.b16 %v2329
        %v2413 = vunpack.c.h.b16 %v2329
        %v2414 = vunpack.c.l.b16 %v2330
        %v2415 = vunpack.c.h.b16 %v2330
        %v2416 = vunpack.c.l.b16 %v2331
        %v2417 = vunpack.c.h.b16 %v2331
        %v2418 = vunpack.c.l.b16 %v2332
        %v2419 = vunpack.c.h.b16 %v2332
        %v2420 = vunpack.c.l.b16 %v2333
        %v2421 = vunpack.c.h.b16 %v2333
        %v2422 = vunpack.c.l.b16 %v2334
        %v2423 = vunpack.c.h.b16 %v2334
        %v2424 = vunpack.c.l.b16 %v2335
        %v2425 = vunpack.c.h.b16 %v2335
        %v2426 = vunpack.c.l.b16 %v2336
        %v2427 = vunpack.c.h.b16 %v2336
        %v2428 = vunpack.c.l.b16 %v2337
        %v2429 = vunpack.c.h.b16 %v2337
        %v2430 = vunpack.c.l.b16 %v2338
        %v2431 = vunpack.c.h.b16 %v2338
        %v2432 = vunpack.c.l.b16 %v2339
        %v2433 = vunpack.c.h.b16 %v2339
        %v2434 = vunpack.c.l.b16 %v2340
        %v2435 = vunpack.c.h.b16 %v2340
        %v2436 = vunpack.c.l.b16 %v2341
        %v2437 = vunpack.c.h.b16 %v2341
        %v2438 = vunpack.c.l.b16 %v2342
        %v2439 = vunpack.c.h.b16 %v2342
        %v2440 = vunpack.c.l.b16 %v2343
        %v2441 = vunpack.c.h.b16 %v2343
        %v2442 = vpack.c.b16 %v2382, %v2378
        %v2443 = vpack.c.b16 %v2383, %v2379
        %v2444 = vpack.c.b16 %v2384, %v2380
        %v2445 = vpack.c.b16 %v2385, %v2381
        %v2446 = vpack.c.b16 %v2390, %v2386
        %v2447 = vpack.c.b16 %v2391, %v2387
        %v2448 = vpack.c.b16 %v2392, %v2388
        %v2449 = vpack.c.b16 %v2393, %v2389
        %v2450 = vpack.c.b16 %v2398, %v2394
        %v2451 = vpack.c.b16 %v2399, %v2395
        %v2452 = vpack.c.b16 %v2400, %v2396
        %v2453 = vpack.c.b16 %v2401, %v2397
        %v2454 = vpack.c.b16 %v2406, %v2402
        %v2455 = vpack.c.b16 %v2407, %v2403
        %v2456 = vpack.c.b16 %v2408, %v2404
        %v2457 = vpack.c.b16 %v2409, %v2405
        %v2458 = vpack.c.b16 %v2414, %v2410
        %v2459 = vpack.c.b16 %v2415, %v2411
        %v2460 = vpack.c.b16 %v2416, %v2412
        %v2461 = vpack.c.b16 %v2417, %v2413
        %v2462 = vpack.c.b16 %v2422, %v2418
        %v2463 = vpack.c.b16 %v2423, %v2419
        %v2464 = vpack.c.b16 %v2424, %v2420
        %v2465 = vpack.c.b16 %v2425, %v2421
        %v2466 = vpack.c.b16 %v2430, %v2426
        %v2467 = vpack.c.b16 %v2431, %v2427
        %v2468 = vpack.c.b16 %v2432, %v2428
        %v2469 = vpack.c.b16 %v2433, %v2429
        %v2470 = vpack.c.b16 %v2438, %v2434
        %v2471 = vpack.c.b16 %v2439, %v2435
        %v2472 = vpack.c.b16 %v2440, %v2436
        %v2473 = vpack.c.b16 %v2441, %v2437
        %2506 = vmatprep.subr.bf16.mxu0 %v2443
        %2507 = vmatpush1.bf16.msra.mxu0 %v2442
        %2508 = vmatprep.subr.bf16.mxu0 %v2447
        %2509 = vmatpush1.bf16.msra.mxu0 %v2446
        %2510 = vmatprep.subr.bf16.mxu0 %v2451
        %2511 = vmatpush1.bf16.msra.mxu0 %v2450
        %2512 = vmatprep.subr.bf16.mxu0 %v2455
        %2513 = vmatpush1.bf16.msra.mxu0 %v2454
        %2514 = vmatprep.subr.bf16.mxu0 %v2459
        %2515 = vmatpush1.bf16.msra.mxu0 %v2458
        %2516 = vmatprep.subr.bf16.mxu0 %v2463
        %2517 = vmatpush1.bf16.msra.mxu0 %v2462
        %2518 = vmatprep.subr.bf16.mxu0 %v2467
        %2519 = vmatpush1.bf16.msra.mxu0 %v2466
        %2520 = vmatprep.subr.bf16.mxu0 %v2471
        %2521 = vmatpush1.bf16.msra.mxu0 %v2470
        %2522 = vmatprep.subr.bf16.mxu0 0
        %2523 = vmatpush1.bf16.msra.mxu0 0
        %2524 = vmatprep.subr.bf16.mxu0 0
        %2525 = vmatpush1.bf16.msra.mxu0 0
        %2526 = vmatprep.subr.bf16.mxu0 0
        %2527 = vmatpush1.bf16.msra.mxu0 0
        %2528 = vmatprep.subr.bf16.mxu0 0
        %2529 = vmatpush1.bf16.msra.mxu0 0
        %2530 = vmatprep.subr.bf16.mxu0 0
        %2531 = vmatpush1.bf16.msra.mxu0 0
        %2532 = vmatprep.subr.bf16.mxu0 0
        %2533 = vmatpush1.bf16.msra.mxu0 0
        %2534 = vmatprep.subr.bf16.mxu0 0
        %2535 = vmatpush1.bf16.msra.mxu0 0
        %2536 = vmatprep.subr.bf16.mxu0 0
        %2537 = vmatpush1.bf16.msra.mxu0 0
        %2538 = vmatprep.mubr.bf16.mxu0 0
        %2539 = vmatmul.mubr.bf16.gmra.mrb[0].mxu0 %v2344
        %v2540 = vpop.f32.mrb[0].mxu0
        %v2541 = vadd.f32 0.0, %v2540
        %v2542 = vpop.f32.mrb[0].mxu0
        %v2543 = vadd.f32 0.0, %v2542
        %v2544 = vpop.f32.mrb[0].mxu0
        %v2545 = vpop.f32.mrb[0].mxu0
        %2546 = vdwg.mxu0
        %2547 = vmatprep.subr.bf16.mxu0 %v2445
        %2548 = vmatpush1.bf16.msra.mxu0 %v2444
        %2549 = vmatprep.subr.bf16.mxu0 %v2449
        %2550 = vmatpush1.bf16.msra.mxu0 %v2448
        %2551 = vmatprep.subr.bf16.mxu0 %v2453
        %2552 = vmatpush1.bf16.msra.mxu0 %v2452
        %2553 = vmatprep.subr.bf16.mxu0 %v2457
        %2554 = vmatpush1.bf16.msra.mxu0 %v2456
        %2555 = vmatprep.subr.bf16.mxu0 %v2461
        %2556 = vmatpush1.bf16.msra.mxu0 %v2460
        %2557 = vmatprep.subr.bf16.mxu0 %v2465
        %2558 = vmatpush1.bf16.msra.mxu0 %v2464
        %2559 = vmatprep.subr.bf16.mxu0 %v2469
        %2560 = vmatpush1.bf16.msra.mxu0 %v2468
        %2561 = vmatprep.subr.bf16.mxu0 %v2473
        %2562 = vmatpush1.bf16.msra.mxu0 %v2472
        %2563 = vmatprep.subr.bf16.mxu0 0
        %2564 = vmatpush1.bf16.msra.mxu0 0
        %2565 = vmatprep.subr.bf16.mxu0 0
        %2566 = vmatpush1.bf16.msra.mxu0 0
        %2567 = vmatprep.subr.bf16.mxu0 0
        %2568 = vmatpush1.bf16.msra.mxu0 0
        %2569 = vmatprep.subr.bf16.mxu0 0
        %2570 = vmatpush1.bf16.msra.mxu0 0
        %2571 = vmatprep.subr.bf16.mxu0 0
        %2572 = vmatpush1.bf16.msra.mxu0 0
        %2573 = vmatprep.subr.bf16.mxu0 0
        %2574 = vmatpush1.bf16.msra.mxu0 0
        %2575 = vmatprep.subr.bf16.mxu0 0
        %2576 = vmatpush1.bf16.msra.mxu0 0
        %2577 = vmatprep.subr.bf16.mxu0 0
        %2578 = vmatpush1.bf16.msra.mxu0 0
        %2579 = vmatprep.mubr.bf16.mxu0 0
        %2580 = vmatmul.mubr.bf16.gmra.mrb[0].mxu0 %v2344
        %v2581 = vpop.f32.mrb[0].mxu0
        %v2582 = vadd.f32 0.0, %v2581
        %v2583 = vpop.f32.mrb[0].mxu0
        %v2584 = vadd.f32 0.0, %v2583
        %v2585 = vpop.f32.mrb[0].mxu0
        %v2586 = vpop.f32.mrb[0].mxu0
        %2587 = vdwg.mxu0
        %v2592 = vcombine.low %v2541, %v2543
        %v2593 = vcombine.low %v2582, %v2584
        %v2595 = vunpack.c.l.s4 1966171168
        %v2596 = vunpack.c.0.s8 %v2595
        %v2597 = vlaneseq
        %v2598 = vshrl.u32 %v2597, 7
        %v2599 = vsub.s32 %v2596, %v2598
        %v2600 = vrot.slane %v2592, %v2599
        %v2602 = vunpack.c.l.s4 1966171168
        %v2603 = vunpack.c.0.s8 %v2602
        %v2604 = vlaneseq
        %v2605 = vshrl.u32 %v2604, 7
        %v2606 = vsub.s32 %v2603, %v2605
        %v2607 = vrot.slane %v2593, %v2606
        %v2608 = vcombine.low %v2600, %v2607
        %v2610 = vunpack.c.l.s4 1966171168
        %v2611 = vunpack.c.0.s8 %v2610
        %v2612 = vlaneseq
        %v2613 = vshrl.u32 %v2612, 7
        %v2614 = vsub.s32 %v2611, %v2613
        %v2615 = vrot.slane %v2608, %v2614
        %v2617 = vadd.f32 %v2310, %v2615
        %s2618 = scalar_lea.vmem [#allocation2], 1024
        %v2619 = vld [vmem:[%s2618] sm:$0xff]
        %v2620 = vld [vmem:[%s2618 + $0x8] sm:$0xff]
        %v2621 = vld [vmem:[%s2618 + $0x10] sm:$0xff]
        %v2622 = vld [vmem:[%s2618 + $0x18] sm:$0xff]
        %v2623 = vld [vmem:[%s2618 + $0x20] sm:$0xff]
        %v2624 = vld [vmem:[%s2618 + $0x28] sm:$0xff]
        %v2625 = vld [vmem:[%s2618 + $0x30] sm:$0xff]
        %v2626 = vld [vmem:[%s2618 + $0x38] sm:$0xff]
        %v2627 = vld [vmem:[%s2618 + $0x40] sm:$0xff]
        %v2628 = vld [vmem:[%s2618 + $0x48] sm:$0xff]
        %v2629 = vld [vmem:[%s2618 + $0x50] sm:$0xff]
        %v2630 = vld [vmem:[%s2618 + $0x58] sm:$0xff]
        %v2631 = vld [vmem:[%s2618 + $0x60] sm:$0xff]
        %v2632 = vld [vmem:[%s2618 + $0x68] sm:$0xff]
        %v2633 = vld [vmem:[%s2618 + $0x70] sm:$0xff]
        %v2634 = vld [vmem:[%s2618 + $0x78] sm:$0xff]
        %v2635 = vld [vmem:[%s2618 + $0x80] sm:$0xff]
        %v2636 = vld [vmem:[%s2618 + $0x88] sm:$0xff]
        %v2637 = vld [vmem:[%s2618 + $0x90] sm:$0xff]
        %v2638 = vld [vmem:[%s2618 + $0x98] sm:$0xff]
        %v2639 = vld [vmem:[%s2618 + $0xa0] sm:$0xff]
        %v2640 = vld [vmem:[%s2618 + $0xa8] sm:$0xff]
        %v2641 = vld [vmem:[%s2618 + $0xb0] sm:$0xff]
        %v2642 = vld [vmem:[%s2618 + $0xb8] sm:$0xff]
        %v2643 = vld [vmem:[%s2618 + $0xc0] sm:$0xff]
        %v2644 = vld [vmem:[%s2618 + $0xc8] sm:$0xff]
        %v2645 = vld [vmem:[%s2618 + $0xd0] sm:$0xff]
        %v2646 = vld [vmem:[%s2618 + $0xd8] sm:$0xff]
        %v2647 = vld [vmem:[%s2618 + $0xe0] sm:$0xff]
        %v2648 = vld [vmem:[%s2618 + $0xe8] sm:$0xff]
        %v2649 = vld [vmem:[%s2618 + $0xf0] sm:$0xff]
        %v2650 = vld [vmem:[%s2618 + $0xf8] sm:$0xff]
        %v2651 = vrot.slane %v1389, 2
        %v2685 = vunpack.c.l.b16 %v2619
        %v2686 = vunpack.c.h.b16 %v2619
        %v2687 = vunpack.c.l.b16 %v2620
        %v2688 = vunpack.c.h.b16 %v2620
        %v2689 = vunpack.c.l.b16 %v2621
        %v2690 = vunpack.c.h.b16 %v2621
        %v2691 = vunpack.c.l.b16 %v2622
        %v2692 = vunpack.c.h.b16 %v2622
        %v2693 = vunpack.c.l.b16 %v2623
        %v2694 = vunpack.c.h.b16 %v2623
        %v2695 = vunpack.c.l.b16 %v2624
        %v2696 = vunpack.c.h.b16 %v2624
        %v2697 = vunpack.c.l.b16 %v2625
        %v2698 = vunpack.c.h.b16 %v2625
        %v2699 = vunpack.c.l.b16 %v2626
        %v2700 = vunpack.c.h.b16 %v2626
        %v2701 = vunpack.c.l.b16 %v2627
        %v2702 = vunpack.c.h.b16 %v2627
        %v2703 = vunpack.c.l.b16 %v2628
        %v2704 = vunpack.c.h.b16 %v2628
        %v2705 = vunpack.c.l.b16 %v2629
        %v2706 = vunpack.c.h.b16 %v2629
        %v2707 = vunpack.c.l.b16 %v2630
        %v2708 = vunpack.c.h.b16 %v2630
        %v2709 = vunpack.c.l.b16 %v2631
        %v2710 = vunpack.c.h.b16 %v2631
        %v2711 = vunpack.c.l.b16 %v2632
        %v2712 = vunpack.c.h.b16 %v2632
        %v2713 = vunpack.c.l.b16 %v2633
        %v2714 = vunpack.c.h.b16 %v2633
        %v2715 = vunpack.c.l.b16 %v2634
        %v2716 = vunpack.c.h.b16 %v2634
        %v2717 = vunpack.c.l.b16 %v2635
        %v2718 = vunpack.c.h.b16 %v2635
        %v2719 = vunpack.c.l.b16 %v2636
        %v2720 = vunpack.c.h.b16 %v2636
        %v2721 = vunpack.c.l.b16 %v2637
        %v2722 = vunpack.c.h.b16 %v2637
        %v2723 = vunpack.c.l.b16 %v2638
        %v2724 = vunpack.c.h.b16 %v2638
        %v2725 = vunpack.c.l.b16 %v2639
        %v2726 = vunpack.c.h.b16 %v2639
        %v2727 = vunpack.c.l.b16 %v2640
        %v2728 = vunpack.c.h.b16 %v2640
        %v2729 = vunpack.c.l.b16 %v2641
        %v2730 = vunpack.c.h.b16 %v2641
        %v2731 = vunpack.c.l.b16 %v2642
        %v2732 = vunpack.c.h.b16 %v2642
        %v2733 = vunpack.c.l.b16 %v2643
        %v2734 = vunpack.c.h.b16 %v2643
        %v2735 = vunpack.c.l.b16 %v2644
        %v2736 = vunpack.c.h.b16 %v2644
        %v2737 = vunpack.c.l.b16 %v2645
        %v2738 = vunpack.c.h.b16 %v2645
        %v2739 = vunpack.c.l.b16 %v2646
        %v2740 = vunpack.c.h.b16 %v2646
        %v2741 = vunpack.c.l.b16 %v2647
        %v2742 = vunpack.c.h.b16 %v2647
        %v2743 = vunpack.c.l.b16 %v2648
        %v2744 = vunpack.c.h.b16 %v2648
        %v2745 = vunpack.c.l.b16 %v2649
        %v2746 = vunpack.c.h.b16 %v2649
        %v2747 = vunpack.c.l.b16 %v2650
        %v2748 = vunpack.c.h.b16 %v2650
        %v2749 = vpack.c.b16 %v2689, %v2685
        %v2750 = vpack.c.b16 %v2690, %v2686
        %v2751 = vpack.c.b16 %v2691, %v2687
        %v2752 = vpack.c.b16 %v2692, %v2688
        %v2753 = vpack.c.b16 %v2697, %v2693
        %v2754 = vpack.c.b16 %v2698, %v2694
        %v2755 = vpack.c.b16 %v2699, %v2695
        %v2756 = vpack.c.b16 %v2700, %v2696
        %v2757 = vpack.c.b16 %v2705, %v2701
        %v2758 = vpack.c.b16 %v2706, %v2702
        %v2759 = vpack.c.b16 %v2707, %v2703
        %v2760 = vpack.c.b16 %v2708, %v2704
        %v2761 = vpack.c.b16 %v2713, %v2709
        %v2762 = vpack.c.b16 %v2714, %v2710
        %v2763 = vpack.c.b16 %v2715, %v2711
        %v2764 = vpack.c.b16 %v2716, %v2712
        %v2765 = vpack.c.b16 %v2721, %v2717
        %v2766 = vpack.c.b16 %v2722, %v2718
        %v2767 = vpack.c.b16 %v2723, %v2719
        %v2768 = vpack.c.b16 %v2724, %v2720
        %v2769 = vpack.c.b16 %v2729, %v2725
        %v2770 = vpack.c.b16 %v2730, %v2726
        %v2771 = vpack.c.b16 %v2731, %v2727
        %v2772 = vpack.c.b16 %v2732, %v2728
        %v2773 = vpack.c.b16 %v2737, %v2733
        %v2774 = vpack.c.b16 %v2738, %v2734
        %v2775 = vpack.c.b16 %v2739, %v2735
        %v2776 = vpack.c.b16 %v2740, %v2736
        %v2777 = vpack.c.b16 %v2745, %v2741
        %v2778 = vpack.c.b16 %v2746, %v2742
        %v2779 = vpack.c.b16 %v2747, %v2743
        %v2780 = vpack.c.b16 %v2748, %v2744
        %2813 = vmatprep.subr.bf16.mxu0 %v2750
        %2814 = vmatpush1.bf16.msra.mxu0 %v2749
        %2815 = vmatprep.subr.bf16.mxu0 %v2754
        %2816 = vmatpush1.bf16.msra.mxu0 %v2753
        %2817 = vmatprep.subr.bf16.mxu0 %v2758
        %2818 = vmatpush1.bf16.msra.mxu0 %v2757
        %2819 = vmatprep.subr.bf16.mxu0 %v2762
        %2820 = vmatpush1.bf16.msra.mxu0 %v2761
        %2821 = vmatprep.subr.bf16.mxu0 %v2766
        %2822 = vmatpush1.bf16.msra.mxu0 %v2765
        %2823 = vmatprep.subr.bf16.mxu0 %v2770
        %2824 = vmatpush1.bf16.msra.mxu0 %v2769
        %2825 = vmatprep.subr.bf16.mxu0 %v2774
        %2826 = vmatpush1.bf16.msra.mxu0 %v2773
        %2827 = vmatprep.subr.bf16.mxu0 %v2778
        %2828 = vmatpush1.bf16.msra.mxu0 %v2777
        %2829 = vmatprep.subr.bf16.mxu0 0
        %2830 = vmatpush1.bf16.msra.mxu0 0
        %2831 = vmatprep.subr.bf16.mxu0 0
        %2832 = vmatpush1.bf16.msra.mxu0 0
        %2833 = vmatprep.subr.bf16.mxu0 0
        %2834 = vmatpush1.bf16.msra.mxu0 0
        %2835 = vmatprep.subr.bf16.mxu0 0
        %2836 = vmatpush1.bf16.msra.mxu0 0
        %2837 = vmatprep.subr.bf16.mxu0 0
        %2838 = vmatpush1.bf16.msra.mxu0 0
        %2839 = vmatprep.subr.bf16.mxu0 0
        %2840 = vmatpush1.bf16.msra.mxu0 0
        %2841 = vmatprep.subr.bf16.mxu0 0
        %2842 = vmatpush1.bf16.msra.mxu0 0
        %2843 = vmatprep.subr.bf16.mxu0 0
        %2844 = vmatpush1.bf16.msra.mxu0 0
        %2845 = vmatprep.mubr.bf16.mxu0 0
        %2846 = vmatmul.mubr.bf16.gmra.mrb[0].mxu0 %v2651
        %v2847 = vpop.f32.mrb[0].mxu0
        %v2848 = vadd.f32 0.0, %v2847
        %v2849 = vpop.f32.mrb[0].mxu0
        %v2850 = vadd.f32 0.0, %v2849
        %v2851 = vpop.f32.mrb[0].mxu0
        %v2852 = vpop.f32.mrb[0].mxu0
        %2853 = vdwg.mxu0
        %2854 = vmatprep.subr.bf16.mxu0 %v2752
        %2855 = vmatpush1.bf16.msra.mxu0 %v2751
        %2856 = vmatprep.subr.bf16.mxu0 %v2756
        %2857 = vmatpush1.bf16.msra.mxu0 %v2755
        %2858 = vmatprep.subr.bf16.mxu0 %v2760
        %2859 = vmatpush1.bf16.msra.mxu0 %v2759
        %2860 = vmatprep.subr.bf16.mxu0 %v2764
        %2861 = vmatpush1.bf16.msra.mxu0 %v2763
        %2862 = vmatprep.subr.bf16.mxu0 %v2768
        %2863 = vmatpush1.bf16.msra.mxu0 %v2767
        %2864 = vmatprep.subr.bf16.mxu0 %v2772
        %2865 = vmatpush1.bf16.msra.mxu0 %v2771
        %2866 = vmatprep.subr.bf16.mxu0 %v2776
        %2867 = vmatpush1.bf16.msra.mxu0 %v2775
        %2868 = vmatprep.subr.bf16.mxu0 %v2780
        %2869 = vmatpush1.bf16.msra.mxu0 %v2779
        %2870 = vmatprep.subr.bf16.mxu0 0
        %2871 = vmatpush1.bf16.msra.mxu0 0
        %2872 = vmatprep.subr.bf16.mxu0 0
        %2873 = vmatpush1.bf16.msra.mxu0 0
        %2874 = vmatprep.subr.bf16.mxu0 0
        %2875 = vmatpush1.bf16.msra.mxu0 0
        %2876 = vmatprep.subr.bf16.mxu0 0
        %2877 = vmatpush1.bf16.msra.mxu0 0
        %2878 = vmatprep.subr.bf16.mxu0 0
        %2879 = vmatpush1.bf16.msra.mxu0 0
        %2880 = vmatprep.subr.bf16.mxu0 0
        %2881 = vmatpush1.bf16.msra.mxu0 0
        %2882 = vmatprep.subr.bf16.mxu0 0
        %2883 = vmatpush1.bf16.msra.mxu0 0
        %2884 = vmatprep.subr.bf16.mxu0 0
        %2885 = vmatpush1.bf16.msra.mxu0 0
        %2886 = vmatprep.mubr.bf16.mxu0 0
        %2887 = vmatmul.mubr.bf16.gmra.mrb[0].mxu0 %v2651
        %v2888 = vpop.f32.mrb[0].mxu0
        %v2889 = vadd.f32 0.0, %v2888
        %v2890 = vpop.f32.mrb[0].mxu0
        %v2891 = vadd.f32 0.0, %v2890
        %v2892 = vpop.f32.mrb[0].mxu0
        %v2893 = vpop.f32.mrb[0].mxu0
        %2894 = vdwg.mxu0
        %v2899 = vcombine.low %v2848, %v2850
        %v2900 = vcombine.low %v2889, %v2891
        %v2902 = vunpack.c.l.s4 1966171168
        %v2903 = vunpack.c.0.s8 %v2902
        %v2904 = vlaneseq
        %v2905 = vshrl.u32 %v2904, 7
        %v2906 = vsub.s32 %v2903, %v2905
        %v2907 = vrot.slane %v2899, %v2906
        %v2909 = vunpack.c.l.s4 1966171168
        %v2910 = vunpack.c.0.s8 %v2909
        %v2911 = vlaneseq
        %v2912 = vshrl.u32 %v2911, 7
        %v2913 = vsub.s32 %v2910, %v2912
        %v2914 = vrot.slane %v2900, %v2913
        %v2915 = vcombine.low %v2907, %v2914
        %v2917 = vunpack.c.l.s4 1966171168
        %v2918 = vunpack.c.0.s8 %v2917
        %v2919 = vlaneseq
        %v2920 = vshrl.u32 %v2919, 7
        %v2921 = vsub.s32 %v2918, %v2920
        %v2922 = vrot.slane %v2915, %v2921
        %v2924 = vadd.f32 %v2617, %v2922
        %s2925 = scalar_lea.vmem [#allocation2], 1280
        %v2926 = vld [vmem:[%s2925] sm:$0xff]
        %v2927 = vld [vmem:[%s2925 + $0x8] sm:$0xff]
        %v2928 = vld [vmem:[%s2925 + $0x10] sm:$0xff]
        %v2929 = vld [vmem:[%s2925 + $0x18] sm:$0xff]
        %v2930 = vld [vmem:[%s2925 + $0x20] sm:$0xff]
        %v2931 = vld [vmem:[%s2925 + $0x28] sm:$0xff]
        %v2932 = vld [vmem:[%s2925 + $0x30] sm:$0xff]
        %v2933 = vld [vmem:[%s2925 + $0x38] sm:$0xff]
        %v2934 = vld [vmem:[%s2925 + $0x40] sm:$0xff]
        %v2935 = vld [vmem:[%s2925 + $0x48] sm:$0xff]
        %v2936 = vld [vmem:[%s2925 + $0x50] sm:$0xff]
        %v2937 = vld [vmem:[%s2925 + $0x58] sm:$0xff]
        %v2938 = vld [vmem:[%s2925 + $0x60] sm:$0xff]
        %v2939 = vld [vmem:[%s2925 + $0x68] sm:$0xff]
        %v2940 = vld [vmem:[%s2925 + $0x70] sm:$0xff]
        %v2941 = vld [vmem:[%s2925 + $0x78] sm:$0xff]
        %v2942 = vld [vmem:[%s2925 + $0x80] sm:$0xff]
        %v2943 = vld [vmem:[%s2925 + $0x88] sm:$0xff]
        %v2944 = vld [vmem:[%s2925 + $0x90] sm:$0xff]
        %v2945 = vld [vmem:[%s2925 + $0x98] sm:$0xff]
        %v2946 = vld [vmem:[%s2925 + $0xa0] sm:$0xff]
        %v2947 = vld [vmem:[%s2925 + $0xa8] sm:$0xff]
        %v2948 = vld [vmem:[%s2925 + $0xb0] sm:$0xff]
        %v2949 = vld [vmem:[%s2925 + $0xb8] sm:$0xff]
        %v2950 = vld [vmem:[%s2925 + $0xc0] sm:$0xff]
        %v2951 = vld [vmem:[%s2925 + $0xc8] sm:$0xff]
        %v2952 = vld [vmem:[%s2925 + $0xd0] sm:$0xff]
        %v2953 = vld [vmem:[%s2925 + $0xd8] sm:$0xff]
        %v2954 = vld [vmem:[%s2925 + $0xe0] sm:$0xff]
        %v2955 = vld [vmem:[%s2925 + $0xe8] sm:$0xff]
        %v2956 = vld [vmem:[%s2925 + $0xf0] sm:$0xff]
        %v2957 = vld [vmem:[%s2925 + $0xf8] sm:$0xff]
        %v2958 = vrot.slane %v1728, 2
        %v2992 = vunpack.c.l.b16 %v2926
        %v2993 = vunpack.c.h.b16 %v2926
        %v2994 = vunpack.c.l.b16 %v2927
        %v2995 = vunpack.c.h.b16 %v2927
        %v2996 = vunpack.c.l.b16 %v2928
        %v2997 = vunpack.c.h.b16 %v2928
        %v2998 = vunpack.c.l.b16 %v2929
        %v2999 = vunpack.c.h.b16 %v2929
        %v3000 = vunpack.c.l.b16 %v2930
        %v3001 = vunpack.c.h.b16 %v2930
        %v3002 = vunpack.c.l.b16 %v2931
        %v3003 = vunpack.c.h.b16 %v2931
        %v3004 = vunpack.c.l.b16 %v2932
        %v3005 = vunpack.c.h.b16 %v2932
        %v3006 = vunpack.c.l.b16 %v2933
        %v3007 = vunpack.c.h.b16 %v2933
        %v3008 = vunpack.c.l.b16 %v2934
        %v3009 = vunpack.c.h.b16 %v2934
        %v3010 = vunpack.c.l.b16 %v2935
        %v3011 = vunpack.c.h.b16 %v2935
        %v3012 = vunpack.c.l.b16 %v2936
        %v3013 = vunpack.c.h.b16 %v2936
        %v3014 = vunpack.c.l.b16 %v2937
        %v3015 = vunpack.c.h.b16 %v2937
        %v3016 = vunpack.c.l.b16 %v2938
        %v3017 = vunpack.c.h.b16 %v2938
        %v3018 = vunpack.c.l.b16 %v2939
        %v3019 = vunpack.c.h.b16 %v2939
        %v3020 = vunpack.c.l.b16 %v2940
        %v3021 = vunpack.c.h.b16 %v2940
        %v3022 = vunpack.c.l.b16 %v2941
        %v3023 = vunpack.c.h.b16 %v2941
        %v3024 = vunpack.c.l.b16 %v2942
        %v3025 = vunpack.c.h.b16 %v2942
        %v3026 = vunpack.c.l.b16 %v2943
        %v3027 = vunpack.c.h.b16 %v2943
        %v3028 = vunpack.c.l.b16 %v2944
        %v3029 = vunpack.c.h.b16 %v2944
        %v3030 = vunpack.c.l.b16 %v2945
        %v3031 = vunpack.c.h.b16 %v2945
        %v3032 = vunpack.c.l.b16 %v2946
        %v3033 = vunpack.c.h.b16 %v2946
        %v3034 = vunpack.c.l.b16 %v2947
        %v3035 = vunpack.c.h.b16 %v2947
        %v3036 = vunpack.c.l.b16 %v2948
        %v3037 = vunpack.c.h.b16 %v2948
        %v3038 = vunpack.c.l.b16 %v2949
        %v3039 = vunpack.c.h.b16 %v2949
        %v3040 = vunpack.c.l.b16 %v2950
        %v3041 = vunpack.c.h.b16 %v2950
        %v3042 = vunpack.c.l.b16 %v2951
        %v3043 = vunpack.c.h.b16 %v2951
        %v3044 = vunpack.c.l.b16 %v2952
        %v3045 = vunpack.c.h.b16 %v2952
        %v3046 = vunpack.c.l.b16 %v2953
        %v3047 = vunpack.c.h.b16 %v2953
        %v3048 = vunpack.c.l.b16 %v2954
        %v3049 = vunpack.c.h.b16 %v2954
        %v3050 = vunpack.c.l.b16 %v2955
        %v3051 = vunpack.c.h.b16 %v2955
        %v3052 = vunpack.c.l.b16 %v2956
        %v3053 = vunpack.c.h.b16 %v2956
        %v3054 = vunpack.c.l.b16 %v2957
        %v3055 = vunpack.c.h.b16 %v2957
        %v3056 = vpack.c.b16 %v2996, %v2992
        %v3057 = vpack.c.b16 %v2997, %v2993
        %v3058 = vpack.c.b16 %v2998, %v2994
        %v3059 = vpack.c.b16 %v2999, %v2995
        %v3060 = vpack.c.b16 %v3004, %v3000
        %v3061 = vpack.c.b16 %v3005, %v3001
        %v3062 = vpack.c.b16 %v3006, %v3002
        %v3063 = vpack.c.b16 %v3007, %v3003
        %v3064 = vpack.c.b16 %v3012, %v3008
        %v3065 = vpack.c.b16 %v3013, %v3009
        %v3066 = vpack.c.b16 %v3014, %v3010
        %v3067 = vpack.c.b16 %v3015, %v3011
        %v3068 = vpack.c.b16 %v3020, %v3016
        %v3069 = vpack.c.b16 %v3021, %v3017
        %v3070 = vpack.c.b16 %v3022, %v3018
        %v3071 = vpack.c.b16 %v3023, %v3019
        %v3072 = vpack.c.b16 %v3028, %v3024
        %v3073 = vpack.c.b16 %v3029, %v3025
        %v3074 = vpack.c.b16 %v3030, %v3026
        %v3075 = vpack.c.b16 %v3031, %v3027
        %v3076 = vpack.c.b16 %v3036, %v3032
        %v3077 = vpack.c.b16 %v3037, %v3033
        %v3078 = vpack.c.b16 %v3038, %v3034
        %v3079 = vpack.c.b16 %v3039, %v3035
        %v3080 = vpack.c.b16 %v3044, %v3040
        %v3081 = vpack.c.b16 %v3045, %v3041
        %v3082 = vpack.c.b16 %v3046, %v3042
        %v3083 = vpack.c.b16 %v3047, %v3043
        %v3084 = vpack.c.b16 %v3052, %v3048
        %v3085 = vpack.c.b16 %v3053, %v3049
        %v3086 = vpack.c.b16 %v3054, %v3050
        %v3087 = vpack.c.b16 %v3055, %v3051
        %3120 = vmatprep.subr.bf16.mxu0 %v3057
        %3121 = vmatpush1.bf16.msra.mxu0 %v3056
        %3122 = vmatprep.subr.bf16.mxu0 %v3061
        %3123 = vmatpush1.bf16.msra.mxu0 %v3060
        %3124 = vmatprep.subr.bf16.mxu0 %v3065
        %3125 = vmatpush1.bf16.msra.mxu0 %v3064
        %3126 = vmatprep.subr.bf16.mxu0 %v3069
        %3127 = vmatpush1.bf16.msra.mxu0 %v3068
        %3128 = vmatprep.subr.bf16.mxu0 %v3073
        %3129 = vmatpush1.bf16.msra.mxu0 %v3072
        %3130 = vmatprep.subr.bf16.mxu0 %v3077
        %3131 = vmatpush1.bf16.msra.mxu0 %v3076
        %3132 = vmatprep.subr.bf16.mxu0 %v3081
        %3133 = vmatpush1.bf16.msra.mxu0 %v3080
        %3134 = vmatprep.subr.bf16.mxu0 %v3085
        %3135 = vmatpush1.bf16.msra.mxu0 %v3084
        %3136 = vmatprep.subr.bf16.mxu0 0
        %3137 = vmatpush1.bf16.msra.mxu0 0
        %3138 = vmatprep.subr.bf16.mxu0 0
        %3139 = vmatpush1.bf16.msra.mxu0 0
        %3140 = vmatprep.subr.bf16.mxu0 0
        %3141 = vmatpush1.bf16.msra.mxu0 0
        %3142 = vmatprep.subr.bf16.mxu0 0
        %3143 = vmatpush1.bf16.msra.mxu0 0
        %3144 = vmatprep.subr.bf16.mxu0 0
        %3145 = vmatpush1.bf16.msra.mxu0 0
        %3146 = vmatprep.subr.bf16.mxu0 0
        %3147 = vmatpush1.bf16.msra.mxu0 0
        %3148 = vmatprep.subr.bf16.mxu0 0
        %3149 = vmatpush1.bf16.msra.mxu0 0
        %3150 = vmatprep.subr.bf16.mxu0 0
        %3151 = vmatpush1.bf16.msra.mxu0 0
        %3152 = vmatprep.mubr.bf16.mxu0 0
        %3153 = vmatmul.mubr.bf16.gmra.mrb[0].mxu0 %v2958
        %v3154 = vpop.f32.mrb[0].mxu0
        %v3155 = vadd.f32 0.0, %v3154
        %v3156 = vpop.f32.mrb[0].mxu0
        %v3157 = vadd.f32 0.0, %v3156
        %v3158 = vpop.f32.mrb[0].mxu0
        %v3159 = vpop.f32.mrb[0].mxu0
        %3160 = vdwg.mxu0
        %3161 = vmatprep.subr.bf16.mxu0 %v3059
        %3162 = vmatpush1.bf16.msra.mxu0 %v3058
        %3163 = vmatprep.subr.bf16.mxu0 %v3063
        %3164 = vmatpush1.bf16.msra.mxu0 %v3062
        %3165 = vmatprep.subr.bf16.mxu0 %v3067
        %3166 = vmatpush1.bf16.msra.mxu0 %v3066
        %3167 = vmatprep.subr.bf16.mxu0 %v3071
        %3168 = vmatpush1.bf16.msra.mxu0 %v3070
        %3169 = vmatprep.subr.bf16.mxu0 %v3075
        %3170 = vmatpush1.bf16.msra.mxu0 %v3074
        %3171 = vmatprep.subr.bf16.mxu0 %v3079
        %3172 = vmatpush1.bf16.msra.mxu0 %v3078
        %3173 = vmatprep.subr.bf16.mxu0 %v3083
        %3174 = vmatpush1.bf16.msra.mxu0 %v3082
        %3175 = vmatprep.subr.bf16.mxu0 %v3087
        %3176 = vmatpush1.bf16.msra.mxu0 %v3086
        %3177 = vmatprep.subr.bf16.mxu0 0
        %3178 = vmatpush1.bf16.msra.mxu0 0
        %3179 = vmatprep.subr.bf16.mxu0 0
        %3180 = vmatpush1.bf16.msra.mxu0 0
        %3181 = vmatprep.subr.bf16.mxu0 0
        %3182 = vmatpush1.bf16.msra.mxu0 0
        %3183 = vmatprep.subr.bf16.mxu0 0
        %3184 = vmatpush1.bf16.msra.mxu0 0
        %3185 = vmatprep.subr.bf16.mxu0 0
        %3186 = vmatpush1.bf16.msra.mxu0 0
        %3187 = vmatprep.subr.bf16.mxu0 0
        %3188 = vmatpush1.bf16.msra.mxu0 0
        %3189 = vmatprep.subr.bf16.mxu0 0
        %3190 = vmatpush1.bf16.msra.mxu0 0
        %3191 = vmatprep.subr.bf16.mxu0 0
        %3192 = vmatpush1.bf16.msra.mxu0 0
        %3193 = vmatprep.mubr.bf16.mxu0 0
        %3194 = vmatmul.mubr.bf16.gmra.mrb[0].mxu0 %v2958
        %v3195 = vpop.f32.mrb[0].mxu0
        %v3196 = vadd.f32 0.0, %v3195
        %v3197 = vpop.f32.mrb[0].mxu0
        %v3198 = vadd.f32 0.0, %v3197
        %v3199 = vpop.f32.mrb[0].mxu0
        %v3200 = vpop.f32.mrb[0].mxu0
        %3201 = vdwg.mxu0
        %v3206 = vcombine.low %v3155, %v3157
        %v3207 = vcombine.low %v3196, %v3198
        %v3209 = vunpack.c.l.s4 1966171168
        %v3210 = vunpack.c.0.s8 %v3209
        %v3211 = vlaneseq
        %v3212 = vshrl.u32 %v3211, 7
        %v3213 = vsub.s32 %v3210, %v3212
        %v3214 = vrot.slane %v3206, %v3213
        %v3216 = vunpack.c.l.s4 1966171168
        %v3217 = vunpack.c.0.s8 %v3216
        %v3218 = vlaneseq
        %v3219 = vshrl.u32 %v3218, 7
        %v3220 = vsub.s32 %v3217, %v3219
        %v3221 = vrot.slane %v3207, %v3220
        %v3222 = vcombine.low %v3214, %v3221
        %v3224 = vunpack.c.l.s4 1966171168
        %v3225 = vunpack.c.0.s8 %v3224
        %v3226 = vlaneseq
        %v3227 = vshrl.u32 %v3226, 7
        %v3228 = vsub.s32 %v3225, %v3227
        %v3229 = vrot.slane %v3222, %v3228
        %v3231 = vadd.f32 %v2924, %v3229
        %s3232 = scalar_lea.vmem [#allocation2], 1536
        %v3233 = vld [vmem:[%s3232] sm:$0xff]
        %v3234 = vld [vmem:[%s3232 + $0x8] sm:$0xff]
        %v3235 = vld [vmem:[%s3232 + $0x10] sm:$0xff]
        %v3236 = vld [vmem:[%s3232 + $0x18] sm:$0xff]
        %v3237 = vld [vmem:[%s3232 + $0x20] sm:$0xff]
        %v3238 = vld [vmem:[%s3232 + $0x28] sm:$0xff]
        %v3239 = vld [vmem:[%s3232 + $0x30] sm:$0xff]
        %v3240 = vld [vmem:[%s3232 + $0x38] sm:$0xff]
        %v3241 = vld [vmem:[%s3232 + $0x40] sm:$0xff]
        %v3242 = vld [vmem:[%s3232 + $0x48] sm:$0xff]
        %v3243 = vld [vmem:[%s3232 + $0x50] sm:$0xff]
        %v3244 = vld [vmem:[%s3232 + $0x58] sm:$0xff]
        %v3245 = vld [vmem:[%s3232 + $0x60] sm:$0xff]
        %v3246 = vld [vmem:[%s3232 + $0x68] sm:$0xff]
        %v3247 = vld [vmem:[%s3232 + $0x70] sm:$0xff]
        %v3248 = vld [vmem:[%s3232 + $0x78] sm:$0xff]
        %v3249 = vld [vmem:[%s3232 + $0x80] sm:$0xff]
        %v3250 = vld [vmem:[%s3232 + $0x88] sm:$0xff]
        %v3251 = vld [vmem:[%s3232 + $0x90] sm:$0xff]
        %v3252 = vld [vmem:[%s3232 + $0x98] sm:$0xff]
        %v3253 = vld [vmem:[%s3232 + $0xa0] sm:$0xff]
        %v3254 = vld [vmem:[%s3232 + $0xa8] sm:$0xff]
        %v3255 = vld [vmem:[%s3232 + $0xb0] sm:$0xff]
        %v3256 = vld [vmem:[%s3232 + $0xb8] sm:$0xff]
        %v3257 = vld [vmem:[%s3232 + $0xc0] sm:$0xff]
        %v3258 = vld [vmem:[%s3232 + $0xc8] sm:$0xff]
        %v3259 = vld [vmem:[%s3232 + $0xd0] sm:$0xff]
        %v3260 = vld [vmem:[%s3232 + $0xd8] sm:$0xff]
        %v3261 = vld [vmem:[%s3232 + $0xe0] sm:$0xff]
        %v3262 = vld [vmem:[%s3232 + $0xe8] sm:$0xff]
        %v3263 = vld [vmem:[%s3232 + $0xf0] sm:$0xff]
        %v3264 = vld [vmem:[%s3232 + $0xf8] sm:$0xff]
        %v3265 = vrot.slane %v1389, 3
        %v3299 = vunpack.c.l.b16 %v3233
        %v3300 = vunpack.c.h.b16 %v3233
        %v3301 = vunpack.c.l.b16 %v3234
        %v3302 = vunpack.c.h.b16 %v3234
        %v3303 = vunpack.c.l.b16 %v3235
        %v3304 = vunpack.c.h.b16 %v3235
        %v3305 = vunpack.c.l.b16 %v3236
        %v3306 = vunpack.c.h.b16 %v3236
        %v3307 = vunpack.c.l.b16 %v3237
        %v3308 = vunpack.c.h.b16 %v3237
        %v3309 = vunpack.c.l.b16 %v3238
        %v3310 = vunpack.c.h.b16 %v3238
        %v3311 = vunpack.c.l.b16 %v3239
        %v3312 = vunpack.c.h.b16 %v3239
        %v3313 = vunpack.c.l.b16 %v3240
        %v3314 = vunpack.c.h.b16 %v3240
        %v3315 = vunpack.c.l.b16 %v3241
        %v3316 = vunpack.c.h.b16 %v3241
        %v3317 = vunpack.c.l.b16 %v3242
        %v3318 = vunpack.c.h.b16 %v3242
        %v3319 = vunpack.c.l.b16 %v3243
        %v3320 = vunpack.c.h.b16 %v3243
        %v3321 = vunpack.c.l.b16 %v3244
        %v3322 = vunpack.c.h.b16 %v3244
        %v3323 = vunpack.c.l.b16 %v3245
        %v3324 = vunpack.c.h.b16 %v3245
        %v3325 = vunpack.c.l.b16 %v3246
        %v3326 = vunpack.c.h.b16 %v3246
        %v3327 = vunpack.c.l.b16 %v3247
        %v3328 = vunpack.c.h.b16 %v3247
        %v3329 = vunpack.c.l.b16 %v3248
        %v3330 = vunpack.c.h.b16 %v3248
        %v3331 = vunpack.c.l.b16 %v3249
        %v3332 = vunpack.c.h.b16 %v3249
        %v3333 = vunpack.c.l.b16 %v3250
        %v3334 = vunpack.c.h.b16 %v3250
        %v3335 = vunpack.c.l.b16 %v3251
        %v3336 = vunpack.c.h.b16 %v3251
        %v3337 = vunpack.c.l.b16 %v3252
        %v3338 = vunpack.c.h.b16 %v3252
        %v3339 = vunpack.c.l.b16 %v3253
        %v3340 = vunpack.c.h.b16 %v3253
        %v3341 = vunpack.c.l.b16 %v3254
        %v3342 = vunpack.c.h.b16 %v3254
        %v3343 = vunpack.c.l.b16 %v3255
        %v3344 = vunpack.c.h.b16 %v3255
        %v3345 = vunpack.c.l.b16 %v3256
        %v3346 = vunpack.c.h.b16 %v3256
        %v3347 = vunpack.c.l.b16 %v3257
        %v3348 = vunpack.c.h.b16 %v3257
        %v3349 = vunpack.c.l.b16 %v3258
        %v3350 = vunpack.c.h.b16 %v3258
        %v3351 = vunpack.c.l.b16 %v3259
        %v3352 = vunpack.c.h.b16 %v3259
        %v3353 = vunpack.c.l.b16 %v3260
        %v3354 = vunpack.c.h.b16 %v3260
        %v3355 = vunpack.c.l.b16 %v3261
        %v3356 = vunpack.c.h.b16 %v3261
        %v3357 = vunpack.c.l.b16 %v3262
        %v3358 = vunpack.c.h.b16 %v3262
        %v3359 = vunpack.c.l.b16 %v3263
        %v3360 = vunpack.c.h.b16 %v3263
        %v3361 = vunpack.c.l.b16 %v3264
        %v3362 = vunpack.c.h.b16 %v3264
        %v3363 = vpack.c.b16 %v3303, %v3299
        %v3364 = vpack.c.b16 %v3304, %v3300
        %v3365 = vpack.c.b16 %v3305, %v3301
        %v3366 = vpack.c.b16 %v3306, %v3302
        %v3367 = vpack.c.b16 %v3311, %v3307
        %v3368 = vpack.c.b16 %v3312, %v3308
        %v3369 = vpack.c.b16 %v3313, %v3309
        %v3370 = vpack.c.b16 %v3314, %v3310
        %v3371 = vpack.c.b16 %v3319, %v3315
        %v3372 = vpack.c.b16 %v3320, %v3316
        %v3373 = vpack.c.b16 %v3321, %v3317
        %v3374 = vpack.c.b16 %v3322, %v3318
        %v3375 = vpack.c.b16 %v3327, %v3323
        %v3376 = vpack.c.b16 %v3328, %v3324
        %v3377 = vpack.c.b16 %v3329, %v3325
        %v3378 = vpack.c.b16 %v3330, %v3326
        %v3379 = vpack.c.b16 %v3335, %v3331
        %v3380 = vpack.c.b16 %v3336, %v3332
        %v3381 = vpack.c.b16 %v3337, %v3333
        %v3382 = vpack.c.b16 %v3338, %v3334
        %v3383 = vpack.c.b16 %v3343, %v3339
        %v3384 = vpack.c.b16 %v3344, %v3340
        %v3385 = vpack.c.b16 %v3345, %v3341
        %v3386 = vpack.c.b16 %v3346, %v3342
        %v3387 = vpack.c.b16 %v3351, %v3347
        %v3388 = vpack.c.b16 %v3352, %v3348
        %v3389 = vpack.c.b16 %v3353, %v3349
        %v3390 = vpack.c.b16 %v3354, %v3350
        %v3391 = vpack.c.b16 %v3359, %v3355
        %v3392 = vpack.c.b16 %v3360, %v3356
        %v3393 = vpack.c.b16 %v3361, %v3357
        %v3394 = vpack.c.b16 %v3362, %v3358
        %3427 = vmatprep.subr.bf16.mxu0 %v3364
        %3428 = vmatpush1.bf16.msra.mxu0 %v3363
        %3429 = vmatprep.subr.bf16.mxu0 %v3368
        %3430 = vmatpush1.bf16.msra.mxu0 %v3367
        %3431 = vmatprep.subr.bf16.mxu0 %v3372
        %3432 = vmatpush1.bf16.msra.mxu0 %v3371
        %3433 = vmatprep.subr.bf16.mxu0 %v3376
        %3434 = vmatpush1.bf16.msra.mxu0 %v3375
        %3435 = vmatprep.subr.bf16.mxu0 %v3380
        %3436 = vmatpush1.bf16.msra.mxu0 %v3379
        %3437 = vmatprep.subr.bf16.mxu0 %v3384
        %3438 = vmatpush1.bf16.msra.mxu0 %v3383
        %3439 = vmatprep.subr.bf16.mxu0 %v3388
        %3440 = vmatpush1.bf16.msra.mxu0 %v3387
        %3441 = vmatprep.subr.bf16.mxu0 %v3392
        %3442 = vmatpush1.bf16.msra.mxu0 %v3391
        %3443 = vmatprep.subr.bf16.mxu0 0
        %3444 = vmatpush1.bf16.msra.mxu0 0
        %3445 = vmatprep.subr.bf16.mxu0 0
        %3446 = vmatpush1.bf16.msra.mxu0 0
        %3447 = vmatprep.subr.bf16.mxu0 0
        %3448 = vmatpush1.bf16.msra.mxu0 0
        %3449 = vmatprep.subr.bf16.mxu0 0
        %3450 = vmatpush1.bf16.msra.mxu0 0
        %3451 = vmatprep.subr.bf16.mxu0 0
        %3452 = vmatpush1.bf16.msra.mxu0 0
        %3453 = vmatprep.subr.bf16.mxu0 0
        %3454 = vmatpush1.bf16.msra.mxu0 0
        %3455 = vmatprep.subr.bf16.mxu0 0
        %3456 = vmatpush1.bf16.msra.mxu0 0
        %3457 = vmatprep.subr.bf16.mxu0 0
        %3458 = vmatpush1.bf16.msra.mxu0 0
        %3459 = vmatprep.mubr.bf16.mxu0 0
        %3460 = vmatmul.mubr.bf16.gmra.mrb[0].mxu0 %v3265
        %v3461 = vpop.f32.mrb[0].mxu0
        %v3462 = vadd.f32 0.0, %v3461
        %v3463 = vpop.f32.mrb[0].mxu0
        %v3464 = vadd.f32 0.0, %v3463
        %v3465 = vpop.f32.mrb[0].mxu0
        %v3466 = vpop.f32.mrb[0].mxu0
        %3467 = vdwg.mxu0
        %3468 = vmatprep.subr.bf16.mxu0 %v3366
        %3469 = vmatpush1.bf16.msra.mxu0 %v3365
        %3470 = vmatprep.subr.bf16.mxu0 %v3370
        %3471 = vmatpush1.bf16.msra.mxu0 %v3369
        %3472 = vmatprep.subr.bf16.mxu0 %v3374
        %3473 = vmatpush1.bf16.msra.mxu0 %v3373
        %3474 = vmatprep.subr.bf16.mxu0 %v3378
        %3475 = vmatpush1.bf16.msra.mxu0 %v3377
        %3476 = vmatprep.subr.bf16.mxu0 %v3382
        %3477 = vmatpush1.bf16.msra.mxu0 %v3381
        %3478 = vmatprep.subr.bf16.mxu0 %v3386
        %3479 = vmatpush1.bf16.msra.mxu0 %v3385
        %3480 = vmatprep.subr.bf16.mxu0 %v3390
        %3481 = vmatpush1.bf16.msra.mxu0 %v3389
        %3482 = vmatprep.subr.bf16.mxu0 %v3394
        %3483 = vmatpush1.bf16.msra.mxu0 %v3393
        %3484 = vmatprep.subr.bf16.mxu0 0
        %3485 = vmatpush1.bf16.msra.mxu0 0
        %3486 = vmatprep.subr.bf16.mxu0 0
        %3487 = vmatpush1.bf16.msra.mxu0 0
        %3488 = vmatprep.subr.bf16.mxu0 0
        %3489 = vmatpush1.bf16.msra.mxu0 0
        %3490 = vmatprep.subr.bf16.mxu0 0
        %3491 = vmatpush1.bf16.msra.mxu0 0
        %3492 = vmatprep.subr.bf16.mxu0 0
        %3493 = vmatpush1.bf16.msra.mxu0 0
        %3494 = vmatprep.subr.bf16.mxu0 0
        %3495 = vmatpush1.bf16.msra.mxu0 0
        %3496 = vmatprep.subr.bf16.mxu0 0
        %3497 = vmatpush1.bf16.msra.mxu0 0
        %3498 = vmatprep.subr.bf16.mxu0 0
        %3499 = vmatpush1.bf16.msra.mxu0 0
        %3500 = vmatprep.mubr.bf16.mxu0 0
        %3501 = vmatmul.mubr.bf16.gmra.mrb[0].mxu0 %v3265
        %v3502 = vpop.f32.mrb[0].mxu0
        %v3503 = vadd.f32 0.0, %v3502
        %v3504 = vpop.f32.mrb[0].mxu0
        %v3505 = vadd.f32 0.0, %v3504
        %v3506 = vpop.f32.mrb[0].mxu0
        %v3507 = vpop.f32.mrb[0].mxu0
        %3508 = vdwg.mxu0
        %v3513 = vcombine.low %v3462, %v3464
        %v3514 = vcombine.low %v3503, %v3505
        %v3516 = vunpack.c.l.s4 1966171168
        %v3517 = vunpack.c.0.s8 %v3516
        %v3518 = vlaneseq
        %v3519 = vshrl.u32 %v3518, 7
        %v3520 = vsub.s32 %v3517, %v3519
        %v3521 = vrot.slane %v3513, %v3520
        %v3523 = vunpack.c.l.s4 1966171168
        %v3524 = vunpack.c.0.s8 %v3523
        %v3525 = vlaneseq
        %v3526 = vshrl.u32 %v3525, 7
        %v3527 = vsub.s32 %v3524, %v3526
        %v3528 = vrot.slane %v3514, %v3527
        %v3529 = vcombine.low %v3521, %v3528
        %v3531 = vunpack.c.l.s4 1966171168
        %v3532 = vunpack.c.0.s8 %v3531
        %v3533 = vlaneseq
        %v3534 = vshrl.u32 %v3533, 7
        %v3535 = vsub.s32 %v3532, %v3534
        %v3536 = vrot.slane %v3529, %v3535
        %v3538 = vadd.f32 %v3231, %v3536
        %s3539 = scalar_lea.vmem [#allocation2], 1792
        %v3540 = vld [vmem:[%s3539] sm:$0xff]
        %v3541 = vld [vmem:[%s3539 + $0x8] sm:$0xff]
        %v3542 = vld [vmem:[%s3539 + $0x10] sm:$0xff]
        %v3543 = vld [vmem:[%s3539 + $0x18] sm:$0xff]
        %v3544 = vld [vmem:[%s3539 + $0x20] sm:$0xff]
        %v3545 = vld [vmem:[%s3539 + $0x28] sm:$0xff]
        %v3546 = vld [vmem:[%s3539 + $0x30] sm:$0xff]
        %v3547 = vld [vmem:[%s3539 + $0x38] sm:$0xff]
        %v3548 = vld [vmem:[%s3539 + $0x40] sm:$0xff]
        %v3549 = vld [vmem:[%s3539 + $0x48] sm:$0xff]
        %v3550 = vld [vmem:[%s3539 + $0x50] sm:$0xff]
        %v3551 = vld [vmem:[%s3539 + $0x58] sm:$0xff]
        %v3552 = vld [vmem:[%s3539 + $0x60] sm:$0xff]
        %v3553 = vld [vmem:[%s3539 + $0x68] sm:$0xff]
        %v3554 = vld [vmem:[%s3539 + $0x70] sm:$0xff]
        %v3555 = vld [vmem:[%s3539 + $0x78] sm:$0xff]
        %v3556 = vld [vmem:[%s3539 + $0x80] sm:$0xff]
        %v3557 = vld [vmem:[%s3539 + $0x88] sm:$0xff]
        %v3558 = vld [vmem:[%s3539 + $0x90] sm:$0xff]
        %v3559 = vld [vmem:[%s3539 + $0x98] sm:$0xff]
        %v3560 = vld [vmem:[%s3539 + $0xa0] sm:$0xff]
        %v3561 = vld [vmem:[%s3539 + $0xa8] sm:$0xff]
        %v3562 = vld [vmem:[%s3539 + $0xb0] sm:$0xff]
        %v3563 = vld [vmem:[%s3539 + $0xb8] sm:$0xff]
        %v3564 = vld [vmem:[%s3539 + $0xc0] sm:$0xff]
        %v3565 = vld [vmem:[%s3539 + $0xc8] sm:$0xff]
        %v3566 = vld [vmem:[%s3539 + $0xd0] sm:$0xff]
        %v3567 = vld [vmem:[%s3539 + $0xd8] sm:$0xff]
        %v3568 = vld [vmem:[%s3539 + $0xe0] sm:$0xff]
        %v3569 = vld [vmem:[%s3539 + $0xe8] sm:$0xff]
        %v3570 = vld [vmem:[%s3539 + $0xf0] sm:$0xff]
        %v3571 = vld [vmem:[%s3539 + $0xf8] sm:$0xff]
        %v3572 = vrot.slane %v1728, 3
        %v3606 = vunpack.c.l.b16 %v3540
        %v3607 = vunpack.c.h.b16 %v3540
        %v3608 = vunpack.c.l.b16 %v3541
        %v3609 = vunpack.c.h.b16 %v3541
        %v3610 = vunpack.c.l.b16 %v3542
        %v3611 = vunpack.c.h.b16 %v3542
        %v3612 = vunpack.c.l.b16 %v3543
        %v3613 = vunpack.c.h.b16 %v3543
        %v3614 = vunpack.c.l.b16 %v3544
        %v3615 = vunpack.c.h.b16 %v3544
        %v3616 = vunpack.c.l.b16 %v3545
        %v3617 = vunpack.c.h.b16 %v3545
        %v3618 = vunpack.c.l.b16 %v3546
        %v3619 = vunpack.c.h.b16 %v3546
        %v3620 = vunpack.c.l.b16 %v3547
        %v3621 = vunpack.c.h.b16 %v3547
        %v3622 = vunpack.c.l.b16 %v3548
        %v3623 = vunpack.c.h.b16 %v3548
        %v3624 = vunpack.c.l.b16 %v3549
        %v3625 = vunpack.c.h.b16 %v3549
        %v3626 = vunpack.c.l.b16 %v3550
        %v3627 = vunpack.c.h.b16 %v3550
        %v3628 = vunpack.c.l.b16 %v3551
        %v3629 = vunpack.c.h.b16 %v3551
        %v3630 = vunpack.c.l.b16 %v3552
        %v3631 = vunpack.c.h.b16 %v3552
        %v3632 = vunpack.c.l.b16 %v3553
        %v3633 = vunpack.c.h.b16 %v3553
        %v3634 = vunpack.c.l.b16 %v3554
        %v3635 = vunpack.c.h.b16 %v3554
        %v3636 = vunpack.c.l.b16 %v3555
        %v3637 = vunpack.c.h.b16 %v3555
        %v3638 = vunpack.c.l.b16 %v3556
        %v3639 = vunpack.c.h.b16 %v3556
        %v3640 = vunpack.c.l.b16 %v3557
        %v3641 = vunpack.c.h.b16 %v3557
        %v3642 = vunpack.c.l.b16 %v3558
        %v3643 = vunpack.c.h.b16 %v3558
        %v3644 = vunpack.c.l.b16 %v3559
        %v3645 = vunpack.c.h.b16 %v3559
        %v3646 = vunpack.c.l.b16 %v3560
        %v3647 = vunpack.c.h.b16 %v3560
        %v3648 = vunpack.c.l.b16 %v3561
        %v3649 = vunpack.c.h.b16 %v3561
        %v3650 = vunpack.c.l.b16 %v3562
        %v3651 = vunpack.c.h.b16 %v3562
        %v3652 = vunpack.c.l.b16 %v3563
        %v3653 = vunpack.c.h.b16 %v3563
        %v3654 = vunpack.c.l.b16 %v3564
        %v3655 = vunpack.c.h.b16 %v3564
        %v3656 = vunpack.c.l.b16 %v3565
        %v3657 = vunpack.c.h.b16 %v3565
        %v3658 = vunpack.c.l.b16 %v3566
        %v3659 = vunpack.c.h.b16 %v3566
        %v3660 = vunpack.c.l.b16 %v3567
        %v3661 = vunpack.c.h.b16 %v3567
        %v3662 = vunpack.c.l.b16 %v3568
        %v3663 = vunpack.c.h.b16 %v3568
        %v3664 = vunpack.c.l.b16 %v3569
        %v3665 = vunpack.c.h.b16 %v3569
        %v3666 = vunpack.c.l.b16 %v3570
        %v3667 = vunpack.c.h.b16 %v3570
        %v3668 = vunpack.c.l.b16 %v3571
        %v3669 = vunpack.c.h.b16 %v3571
        %v3670 = vpack.c.b16 %v3610, %v3606
        %v3671 = vpack.c.b16 %v3611, %v3607
        %v3672 = vpack.c.b16 %v3612, %v3608
        %v3673 = vpack.c.b16 %v3613, %v3609
        %v3674 = vpack.c.b16 %v3618, %v3614
        %v3675 = vpack.c.b16 %v3619, %v3615
        %v3676 = vpack.c.b16 %v3620, %v3616
        %v3677 = vpack.c.b16 %v3621, %v3617
        %v3678 = vpack.c.b16 %v3626, %v3622
        %v3679 = vpack.c.b16 %v3627, %v3623
        %v3680 = vpack.c.b16 %v3628, %v3624
        %v3681 = vpack.c.b16 %v3629, %v3625
        %v3682 = vpack.c.b16 %v3634, %v3630
        %v3683 = vpack.c.b16 %v3635, %v3631
        %v3684 = vpack.c.b16 %v3636, %v3632
        %v3685 = vpack.c.b16 %v3637, %v3633
        %v3686 = vpack.c.b16 %v3642, %v3638
        %v3687 = vpack.c.b16 %v3643, %v3639
        %v3688 = vpack.c.b16 %v3644, %v3640
        %v3689 = vpack.c.b16 %v3645, %v3641
        %v3690 = vpack.c.b16 %v3650, %v3646
        %v3691 = vpack.c.b16 %v3651, %v3647
        %v3692 = vpack.c.b16 %v3652, %v3648
        %v3693 = vpack.c.b16 %v3653, %v3649
        %v3694 = vpack.c.b16 %v3658, %v3654
        %v3695 = vpack.c.b16 %v3659, %v3655
        %v3696 = vpack.c.b16 %v3660, %v3656
        %v3697 = vpack.c.b16 %v3661, %v3657
        %v3698 = vpack.c.b16 %v3666, %v3662
        %v3699 = vpack.c.b16 %v3667, %v3663
        %v3700 = vpack.c.b16 %v3668, %v3664
        %v3701 = vpack.c.b16 %v3669, %v3665
        %3734 = vmatprep.subr.bf16.mxu0 %v3671
        %3735 = vmatpush1.bf16.msra.mxu0 %v3670
        %3736 = vmatprep.subr.bf16.mxu0 %v3675
        %3737 = vmatpush1.bf16.msra.mxu0 %v3674
        %3738 = vmatprep.subr.bf16.mxu0 %v3679
        %3739 = vmatpush1.bf16.msra.mxu0 %v3678
        %3740 = vmatprep.subr.bf16.mxu0 %v3683
        %3741 = vmatpush1.bf16.msra.mxu0 %v3682
        %3742 = vmatprep.subr.bf16.mxu0 %v3687
        %3743 = vmatpush1.bf16.msra.mxu0 %v3686
        %3744 = vmatprep.subr.bf16.mxu0 %v3691
        %3745 = vmatpush1.bf16.msra.mxu0 %v3690
        %3746 = vmatprep.subr.bf16.mxu0 %v3695
        %3747 = vmatpush1.bf16.msra.mxu0 %v3694
        %3748 = vmatprep.subr.bf16.mxu0 %v3699
        %3749 = vmatpush1.bf16.msra.mxu0 %v3698
        %3750 = vmatprep.subr.bf16.mxu0 0
        %3751 = vmatpush1.bf16.msra.mxu0 0
        %3752 = vmatprep.subr.bf16.mxu0 0
        %3753 = vmatpush1.bf16.msra.mxu0 0
        %3754 = vmatprep.subr.bf16.mxu0 0
        %3755 = vmatpush1.bf16.msra.mxu0 0
        %3756 = vmatprep.subr.bf16.mxu0 0
        %3757 = vmatpush1.bf16.msra.mxu0 0
        %3758 = vmatprep.subr.bf16.mxu0 0
        %3759 = vmatpush1.bf16.msra.mxu0 0
        %3760 = vmatprep.subr.bf16.mxu0 0
        %3761 = vmatpush1.bf16.msra.mxu0 0
        %3762 = vmatprep.subr.bf16.mxu0 0
        %3763 = vmatpush1.bf16.msra.mxu0 0
        %3764 = vmatprep.subr.bf16.mxu0 0
        %3765 = vmatpush1.bf16.msra.mxu0 0
        %3766 = vmatprep.mubr.bf16.mxu0 0
        %3767 = vmatmul.mubr.bf16.gmra.mrb[0].mxu0 %v3572
        %v3768 = vpop.f32.mrb[0].mxu0
        %v3769 = vadd.f32 0.0, %v3768
        %v3770 = vpop.f32.mrb[0].mxu0
        %v3771 = vadd.f32 0.0, %v3770
        %v3772 = vpop.f32.mrb[0].mxu0
        %v3773 = vpop.f32.mrb[0].mxu0
        %3774 = vdwg.mxu0
        %3775 = vmatprep.subr.bf16.mxu0 %v3673
        %3776 = vmatpush1.bf16.msra.mxu0 %v3672
        %3777 = vmatprep.subr.bf16.mxu0 %v3677
        %3778 = vmatpush1.bf16.msra.mxu0 %v3676
        %3779 = vmatprep.subr.bf16.mxu0 %v3681
        %3780 = vmatpush1.bf16.msra.mxu0 %v3680
        %3781 = vmatprep.subr.bf16.mxu0 %v3685
        %3782 = vmatpush1.bf16.msra.mxu0 %v3684
        %3783 = vmatprep.subr.bf16.mxu0 %v3689
        %3784 = vmatpush1.bf16.msra.mxu0 %v3688
        %3785 = vmatprep.subr.bf16.mxu0 %v3693
        %3786 = vmatpush1.bf16.msra.mxu0 %v3692
        %3787 = vmatprep.subr.bf16.mxu0 %v3697
        %3788 = vmatpush1.bf16.msra.mxu0 %v3696
        %3789 = vmatprep.subr.bf16.mxu0 %v3701
        %3790 = vmatpush1.bf16.msra.mxu0 %v3700
        %3791 = vmatprep.subr.bf16.mxu0 0
        %3792 = vmatpush1.bf16.msra.mxu0 0
        %3793 = vmatprep.subr.bf16.mxu0 0
        %3794 = vmatpush1.bf16.msra.mxu0 0
        %3795 = vmatprep.subr.bf16.mxu0 0
        %3796 = vmatpush1.bf16.msra.mxu0 0
        %3797 = vmatprep.subr.bf16.mxu0 0
        %3798 = vmatpush1.bf16.msra.mxu0 0
        %3799 = vmatprep.subr.bf16.mxu0 0
        %3800 = vmatpush1.bf16.msra.mxu0 0
        %3801 = vmatprep.subr.bf16.mxu0 0
        %3802 = vmatpush1.bf16.msra.mxu0 0
        %3803 = vmatprep.subr.bf16.mxu0 0
        %3804 = vmatpush1.bf16.msra.mxu0 0
        %3805 = vmatprep.subr.bf16.mxu0 0
        %3806 = vmatpush1.bf16.msra.mxu0 0
        %3807 = vmatprep.mubr.bf16.mxu0 0
        %3808 = vmatmul.mubr.bf16.gmra.mrb[0].mxu0 %v3572
        %v3809 = vpop.f32.mrb[0].mxu0
        %v3810 = vadd.f32 0.0, %v3809
        %v3811 = vpop.f32.mrb[0].mxu0
        %v3812 = vadd.f32 0.0, %v3811
        %v3813 = vpop.f32.mrb[0].mxu0
        %v3814 = vpop.f32.mrb[0].mxu0
        %3815 = vdwg.mxu0
        %v3820 = vcombine.low %v3769, %v3771
        %v3821 = vcombine.low %v3810, %v3812
        %v3823 = vunpack.c.l.s4 1966171168
        %v3824 = vunpack.c.0.s8 %v3823
        %v3825 = vlaneseq
        %v3826 = vshrl.u32 %v3825, 7
        %v3827 = vsub.s32 %v3824, %v3826
        %v3828 = vrot.slane %v3820, %v3827
        %v3830 = vunpack.c.l.s4 1966171168
        %v3831 = vunpack.c.0.s8 %v3830
        %v3832 = vlaneseq
        %v3833 = vshrl.u32 %v3832, 7
        %v3834 = vsub.s32 %v3831, %v3833
        %v3835 = vrot.slane %v3821, %v3834
        %v3836 = vcombine.low %v3828, %v3835
        %v3838 = vunpack.c.l.s4 1966171168
        %v3839 = vunpack.c.0.s8 %v3838
        %v3840 = vlaneseq
        %v3841 = vshrl.u32 %v3840, 7
        %v3842 = vsub.s32 %v3839, %v3841
        %v3843 = vrot.slane %v3836, %v3842
        %v3845 = vadd.f32 %v3538, %v3843
        %v3847 = vrot.slane %v3845, 2
        %v3849 = vmul.f32 %v3847, 0.5
        %v3850 = vmul.f32 %v3849, 1.442695
        %v3851 = vpow.pop %v3850
        %v3852 = vld [vmem:[%s439] sm:$0x3]
        %v3853 = vmul.f32 %v3851, %v3852
        %v3854 = vadd.f32 %v3845, %v3853
        %v3855 = vlaneseq
        %vm3856 = vcmp.ge.s32.totalorder %v3855, 0
        %vm3857 = vcmp.lt.s32.totalorder %v3855, 200
        %vm3858 = vmand %vm3856, %vm3857
        %3859 = vst.msk [vmem:[%s443] sm:$0x3] %vm3858, %v3854
        %p3860 = scmp.lt.s32.totalorder %s24, 1
        %s3861 = scalar_select %p3860, %s24, 1
        %s3862 = smul.addr %s3861, 2
        %s3863 = scalar_lea.vmem %s12, %s3862
        // Predicated region
        $region73: #{encoder_forward.1} parent=67 // pred_check
          %p3864 = pneg %p304
        $region74: #{encoder_forward.1} parent=67 // pred_check_branch
          %3866 = sbr.rel (%p3864) target = $region76
        $region75: #{encoder_forward.1} parent=67 // pred_region
          _
        $region76: #{encoder_forward.1} parent=67 // pred_fallthru
          _
      $region68: #{encoder_forward.1} parent=5 // pred_fallthru
        _
      %p3867 = scmp.le.s32.totalorder 2, %s19
      // Predicated region
      $region77: #{encoder_forward.1} parent=5 // pred_check
        %p3868 = pneg %p3867
      $region78: #{encoder_forward.1} parent=5 // pred_check_branch
        %3870 = sbr.rel (%p3868) target = $region80
      $region79: #{encoder_forward.1} parent=5 // pred_region
        %s3871 = ssub.s32 %s19, 2
        // Predicated region
        $region81: #{encoder_forward.1} parent=79 // pred_check
          %p3872 = pneg %p310
        $region82: #{encoder_forward.1} parent=79 // pred_check_branch
          %3874 = sbr.rel (%p3872) target = $region84
        $region83: #{encoder_forward.1} parent=79 // pred_region
          %p3875 = scmp.lt.s32.totalorder %s25, 1
          %s3876 = scalar_select %p3875, %s25, 1
          %s3877 = smul.addr %s3876, 2
          %s3878 = scalar_lea.vmem %s12, %s3877
        $region84: #{encoder_forward.1} parent=79 // pred_fallthru
          _
      $region80: #{encoder_forward.1} parent=5 // pred_fallthru
        _
    $region6: #{encoder_forward.1} parent=1 // loop_footer
      %s23 = sadd.s32 1, %s19
    $region7: #{encoder_forward.1} parent=1 // loop_footer_branch
      %18 = sbr.rel target = $region3
    $region8: #{encoder_forward.1} parent=1 // loop_exit
      _
    %3879 = vsyncpa [#allocation3], 1
    %s3880 = scalar_lea.sflag [#allocation3], 1
    %3881 = vsyncpa %s3880, 1

</llo_original>
